<compile_context>
chip_gen: v7x
topology: tpu7x:2x2x1
jax: 0.10.0
libtpu: 0.0.40
codegen_flags: <defaults>
</compile_context>

<pallas_src>
import functools

import jax
import jax.numpy as jnp
from jax import lax
from jax.experimental import pallas as pl
from jax.experimental.pallas import tpu as pltpu

INPUT_SIZE = 28
HIDDEN = 128
OUT = 10
OUT_PAD = 128               # lane-dense output head; sliced back to OUT in the wrapper
MAX_TIME_CHUNK = 32         # upper bound on timesteps per grid step
PROJ_VMEM_BUDGET = 8 << 20  # proj double-buffer budget (safe even on v7x 64 MiB VMEM)


def _rnn_kernel(proj_ref, w_hh_ref, w_out_ref, b_out_ref, out_ref, h_ref,
                *, tc, rem, unroll):
    c = pl.program_id(1)
    n_chunks = pl.num_programs(1)

    @pl.when(c == 0)
    def _():
        h_ref[...] = jnp.zeros_like(h_ref)

    # Hoisted out of the time loop (loop is unrolled -> RHS push can be hoisted).
    w_hh = w_hh_ref[...]

    def run_steps(n_steps, h0):
        u = unroll if unroll is True else max(1, min(unroll, n_steps))

        def step(i, h):
            # h_t = tanh(h_{t-1} @ W_hh^T + proj[t]); proj precomputed in wrapper.
            pre = jnp.dot(h, w_hh,
                          preferred_element_type=jnp.float32,
                          precision=jax.lax.Precision.HIGHEST) + proj_ref[i]
            return jnp.tanh(pre)

        return lax.fori_loop(0, n_steps, step, h0, unroll=u)

    if rem == 0:
        # Every chunk is full: one unmasked loop body, no tail handling anywhere.
        h_ref[...] = run_steps(tc, h_ref[...])
    else:
        # Only the last chunk is partial; both trip counts are static.
        @pl.when(c < n_chunks - 1)
        def _():
            h_ref[...] = run_steps(tc, h_ref[...])

        @pl.when(c == n_chunks - 1)
        def _():
            h_ref[...] = run_steps(rem, h_ref[...])

    @pl.when(c == n_chunks - 1)
    def _():
        # Lane-dense final Linear (OUT padded to 128 lanes; sliced in the wrapper).
        out_ref[...] = (jnp.dot(h_ref[...], w_out_ref[...],
                                preferred_element_type=jnp.float32,
                                precision=jax.lax.Precision.HIGHEST)
                        + b_out_ref[...]).astype(out_ref.dtype)


def rnn_forward(x, params, *, batch_block=None):
    """x: (B, T, 28) float32.  Returns (B, 10) float32.

    batch_block: optional batch rows per grid block.  Leave None on v5e/v6e
    (one block = maximal M per recurrent matmul).  On v7x set ~ceil(B/2) so the
    'parallel' batch axis shards across the two TensorCores.
    """
    w_ih, w_hh, b_ih, b_hh, w_out, b_out = params
    B, T, I = x.shape
    assert I == INPUT_SIZE

    # Sublane-aligned batch / batch blocking.
    Bp = max(8, ((B + 7) // 8) * 8)
    if batch_block is None:
        bb = Bp
    else:
        bb = max(8, ((batch_block + 7) // 8) * 8)
        Bp = ((Bp + bb - 1) // bb) * bb
    n_bblocks = Bp // bb

    # Time chunking: clamp tc so the double-buffered proj block fits the budget.
    max_tc_budget = max(1, PROJ_VMEM_BUDGET // (2 * bb * HIDDEN * 4))
    tc = max(1, min(MAX_TIME_CHUNK, T, max_tc_budget))
    n_chunks = (T + tc - 1) // tc
    Tp = n_chunks * tc
    rem = T % tc  # 0 means the last chunk is full

    # Input projection for ALL timesteps in one big matmul, off the serial path.
    b_sum = (b_ih + b_hh).astype(jnp.float32)
    proj = (jnp.dot(x.reshape(B * T, I).astype(jnp.float32),
                    w_ih.T.astype(jnp.float32),
                    precision=jax.lax.Precision.HIGHEST)
            + b_sum)                                                   # (B*T, 128)
    proj = proj.reshape(B, T, HIDDEN).transpose(1, 0, 2)               # (T, B, 128)
    proj_pad = jnp.zeros((Tp, Bp, HIDDEN), jnp.float32).at[:T, :B, :].set(proj)

    # Pre-transpose weights (PyTorch stores (out_features, in_features)),
    # pad the output head to 128 lanes.
    w_hh_t = w_hh.T.astype(jnp.float32)                                # (128, 128)
    w_out_p = jnp.zeros((HIDDEN, OUT_PAD), jnp.float32).at[:, :OUT].set(
        w_out.T.astype(jnp.float32))                                   # (128, 128)
    b_out_p = jnp.zeros((1, OUT_PAD), jnp.float32).at[0, :OUT].set(
        b_out.astype(jnp.float32))                                     # (1, 128)

    # Full unroll only for small batch blocks (vreg pressure), else unroll=8.
    unroll = True if bb <= 64 else 8

    kernel = functools.partial(_rnn_kernel, tc=tc, rem=rem, unroll=unroll)

    grid_spec = pltpu.PrefetchScalarGridSpec(
        num_scalar_prefetch=0,
        grid=(n_bblocks, n_chunks),
        in_specs=[
            pl.BlockSpec((tc, bb, HIDDEN), lambda b, c: (c, b, 0)),    # proj chunk
            pl.BlockSpec((HIDDEN, HIDDEN), lambda b, c: (0, 0)),       # W_hh^T
            pl.BlockSpec((HIDDEN, OUT_PAD), lambda b, c: (0, 0)),      # W_out^T (padded)
            pl.BlockSpec((1, OUT_PAD), lambda b, c: (0, 0)),           # b_out (padded)
        ],
        out_specs=pl.BlockSpec((bb, OUT_PAD), lambda b, c: (b, 0)),
        scratch_shapes=[
            pltpu.VMEM((bb, HIDDEN), jnp.float32),                     # hidden-state carry
        ],
    )

    out_pad = pl.pallas_call(
        kernel,
        out_shape=jax.ShapeDtypeStruct((Bp, OUT_PAD), jnp.float32),
        grid_spec=grid_spec,
        compiler_params=pltpu.CompilerParams(
            # batch axis embarrassingly parallel (v7x megacore); time axis
            # carries h in scratch -> sequential.
            dimension_semantics=("parallel", "arbitrary")),
    )(proj_pad, w_hh_t, w_out_p, b_out_p)

    return out_pad[:B, :OUT]


def init_params(key):
    """Deterministic init matching PyTorch shapes (uniform +-1/sqrt(fan))."""
    k = jax.random.split(key, 6)
    s_rnn = 1.0 / jnp.sqrt(jnp.float32(HIDDEN))
    s_lin = 1.0 / jnp.sqrt(jnp.float32(HIDDEN))
    w_ih = jax.random.uniform(k[0], (HIDDEN, INPUT_SIZE), jnp.float32, -s_rnn, s_rnn)
    w_hh = jax.random.uniform(k[1], (HIDDEN, HIDDEN), jnp.float32, -s_rnn, s_rnn)
    b_ih = jax.random.uniform(k[2], (HIDDEN,), jnp.float32, -s_rnn, s_rnn)
    b_hh = jax.random.uniform(k[3], (HIDDEN,), jnp.float32, -s_rnn, s_rnn)
    w_out = jax.random.uniform(k[4], (OUT, HIDDEN), jnp.float32, -s_lin, s_lin)
    b_out = jax.random.uniform(k[5], (OUT,), jnp.float32, -s_lin, s_lin)
    return (w_ih, w_hh, b_ih, b_hh, w_out, b_out)


def rnn_forward_ref(x, params):
    """Pure-JAX reference (matches PyTorch RNN + Linear semantics)."""
    w_ih, w_hh, b_ih, b_hh, w_out, b_out = params
    B, T, _ = x.shape
    h = jnp.zeros((B, HIDDEN), jnp.float32)

    def step(h, x_t):
        h_new = jnp.tanh(x_t @ w_ih.T + b_ih + h @ w_hh.T + b_hh)
        return h_new, None

    h_last, _ = jax.lax.scan(step, h, jnp.transpose(x, (1, 0, 2)))
    return h_last @ w_out.T + b_out


if __name__ == "__main__":
    key = jax.random.PRNGKey(0)
    kx, kp = jax.random.split(key)

    B, T = 2, 8  # small example: batch=2, seq=8, input=28 (fixed by the module)
    x = jax.random.normal(kx, (B, T, INPUT_SIZE), jnp.float32)
    params = init_params(kp)

    out = jax.block_until_ready(rnn_forward(x, params))
    ref = jax.block_until_ready(rnn_forward_ref(x, params))

    assert out.shape == (B, OUT)
    assert jnp.allclose(out, ref, atol=1e-5, rtol=1e-5), (
        f"max abs err {jnp.max(jnp.abs(out - ref))}")

    print("KERNEL_OK")
</pallas_src>

<mosaic_0001>
module attributes {stable_mosaic.version = 11 : i64} {
  func.func @_rnn_kernel(%arg0: i32, %arg1: i32, %arg2: memref<8x8x128xf32, #tpu.memory_space<vmem>>, %arg3: memref<128x128xf32, #tpu.memory_space<vmem>>, %arg4: memref<128x128xf32, #tpu.memory_space<vmem>>, %arg5: memref<1x128xf32, #tpu.memory_space<vmem>>, %arg6: memref<8x128xf32, #tpu.memory_space<vmem>>, %arg7: memref<8x128xf32, #tpu.memory_space<vmem>>) attributes {dimension_semantics = [#tpu.dimension_semantics<parallel>, #tpu.dimension_semantics<arbitrary>], iteration_bounds = array<i64: 1, 1>, scalar_prefetch = 0 : i64, scratch_operands = 1 : i64, tpu.core_type = #tpu.core_type<tc>, window_params = [{transform_indices = @transform_0, window_bounds = array<i64: 8, 8, 128>}, {pipeline_mode = #tpu.pipeline_mode<synchronous>, transform_indices = @transform_1, window_bounds = array<i64: 128, 128>}, {pipeline_mode = #tpu.pipeline_mode<synchronous>, transform_indices = @transform_2, window_bounds = array<i64: 128, 128>}, {pipeline_mode = #tpu.pipeline_mode<synchronous>, transform_indices = @transform_3, window_bounds = array<i64: 1, 128>}, {transform_indices = @transform_4, window_bounds = array<i64: 8, 128>}]} {
    %c0_i32 = arith.constant 0 : i32
    %0 = arith.cmpi eq, %arg1, %c0_i32 : i32
    %1 = arith.extui %0 : i1 to i32
    %c0_i32_0 = arith.constant 0 : i32
    %2 = arith.cmpi ne, %1, %c0_i32_0 : i32
    scf.if %2 {
      %cst_32 = arith.constant 0.000000e+00 : f32
      %57 = vector.broadcast %cst_32 : f32 to vector<8x128xf32>
      %c0_33 = arith.constant 0 : index
      %c0_34 = arith.constant 0 : index
      %58 = vector.load %arg7[%c0_33, %c0_34] : memref<8x128xf32, #tpu.memory_space<vmem>>, vector<8x128xf32>
      tpu.vector_store %arg7[%c0_33, %c0_34], %57 {strides = array<i32>} : memref<8x128xf32, #tpu.memory_space<vmem>>, vector<8x128xf32>,
    } else {
    }
    %c0 = arith.constant 0 : index
    %c0_1 = arith.constant 0 : index
    %3 = vector.load %arg3[%c0, %c0_1] : memref<128x128xf32, #tpu.memory_space<vmem>>, vector<128x128xf32>
    %c0_2 = arith.constant 0 : index
    %c0_3 = arith.constant 0 : index
    %4 = vector.load %arg7[%c0_2, %c0_3] : memref<8x128xf32, #tpu.memory_space<vmem>>, vector<8x128xf32>
    %c0_i32_4 = arith.constant 0 : i32
    %cst = arith.constant dense<0.000000e+00> : vector<8x128xf32>
    %5 = tpu.matmul %4, %3, %cst {dimension_numbers = #tpu.dot_dimension_numbers<[1], [0], [0], [1], [0, 0, 1, 1], [], []>, precision = #tpu.contract_precision<fp32>} : vector<8x128xf32>, vector<128x128xf32>, vector<8x128xf32> -> vector<8x128xf32>
    %6 = arith.index_cast %c0_i32_4 : i32 to index
    %c0_5 = arith.constant 0 : index
    %c0_6 = arith.constant 0 : index
    %7 = vector.load %arg2[%6, %c0_5, %c0_6] : memref<8x8x128xf32, #tpu.memory_space<vmem>>, vector<1x8x128xf32>
    %8 = vector.shape_cast %7 : vector<1x8x128xf32> to vector<8x128xf32>
    %9 = arith.addf %5, %8 : vector<8x128xf32>
    %10 = math.tanh %9 : vector<8x128xf32>
    %c1_i32 = arith.constant 1 : i32
    %cst_7 = arith.constant dense<0.000000e+00> : vector<8x128xf32>
    %11 = tpu.matmul %10, %3, %cst_7 {dimension_numbers = #tpu.dot_dimension_numbers<[1], [0], [0], [1], [0, 0, 1, 1], [], []>, precision = #tpu.contract_precision<fp32>} : vector<8x128xf32>, vector<128x128xf32>, vector<8x128xf32> -> vector<8x128xf32>
    %12 = arith.index_cast %c1_i32 : i32 to index
    %c0_8 = arith.constant 0 : index
    %c0_9 = arith.constant 0 : index
    %13 = vector.load %arg2[%12, %c0_8, %c0_9] : memref<8x8x128xf32, #tpu.memory_space<vmem>>, vector<1x8x128xf32>
    %14 = vector.shape_cast %13 : vector<1x8x128xf32> to vector<8x128xf32>
    %15 = arith.addf %11, %14 : vector<8x128xf32>
    %16 = math.tanh %15 : vector<8x128xf32>
    %c2_i32 = arith.constant 2 : i32
    %cst_10 = arith.constant dense<0.000000e+00> : vector<8x128xf32>
    %17 = tpu.matmul %16, %3, %cst_10 {dimension_numbers = #tpu.dot_dimension_numbers<[1], [0], [0], [1], [0, 0, 1, 1], [], []>, precision = #tpu.contract_precision<fp32>} : vector<8x128xf32>, vector<128x128xf32>, vector<8x128xf32> -> vector<8x128xf32>
    %18 = arith.index_cast %c2_i32 : i32 to index
    %c0_11 = arith.constant 0 : index
    %c0_12 = arith.constant 0 : index
    %19 = vector.load %arg2[%18, %c0_11, %c0_12] : memref<8x8x128xf32, #tpu.memory_space<vmem>>, vector<1x8x128xf32>
    %20 = vector.shape_cast %19 : vector<1x8x128xf32> to vector<8x128xf32>
    %21 = arith.addf %17, %20 : vector<8x128xf32>
    %22 = math.tanh %21 : vector<8x128xf32>
    %c3_i32 = arith.constant 3 : i32
    %cst_13 = arith.constant dense<0.000000e+00> : vector<8x128xf32>
    %23 = tpu.matmul %22, %3, %cst_13 {dimension_numbers = #tpu.dot_dimension_numbers<[1], [0], [0], [1], [0, 0, 1, 1], [], []>, precision = #tpu.contract_precision<fp32>} : vector<8x128xf32>, vector<128x128xf32>, vector<8x128xf32> -> vector<8x128xf32>
    %24 = arith.index_cast %c3_i32 : i32 to index
    %c0_14 = arith.constant 0 : index
    %c0_15 = arith.constant 0 : index
    %25 = vector.load %arg2[%24, %c0_14, %c0_15] : memref<8x8x128xf32, #tpu.memory_space<vmem>>, vector<1x8x128xf32>
    %26 = vector.shape_cast %25 : vector<1x8x128xf32> to vector<8x128xf32>
    %27 = arith.addf %23, %26 : vector<8x128xf32>
    %28 = math.tanh %27 : vector<8x128xf32>
    %c4_i32 = arith.constant 4 : i32
    %cst_16 = arith.constant dense<0.000000e+00> : vector<8x128xf32>
    %29 = tpu.matmul %28, %3, %cst_16 {dimension_numbers = #tpu.dot_dimension_numbers<[1], [0], [0], [1], [0, 0, 1, 1], [], []>, precision = #tpu.contract_precision<fp32>} : vector<8x128xf32>, vector<128x128xf32>, vector<8x128xf32> -> vector<8x128xf32>
    %30 = arith.index_cast %c4_i32 : i32 to index
    %c0_17 = arith.constant 0 : index
    %c0_18 = arith.constant 0 : index
    %31 = vector.load %arg2[%30, %c0_17, %c0_18] : memref<8x8x128xf32, #tpu.memory_space<vmem>>, vector<1x8x128xf32>
    %32 = vector.shape_cast %31 : vector<1x8x128xf32> to vector<8x128xf32>
    %33 = arith.addf %29, %32 : vector<8x128xf32>
    %34 = math.tanh %33 : vector<8x128xf32>
    %c5_i32 = arith.constant 5 : i32
    %cst_19 = arith.constant dense<0.000000e+00> : vector<8x128xf32>
    %35 = tpu.matmul %34, %3, %cst_19 {dimension_numbers = #tpu.dot_dimension_numbers<[1], [0], [0], [1], [0, 0, 1, 1], [], []>, precision = #tpu.contract_precision<fp32>} : vector<8x128xf32>, vector<128x128xf32>, vector<8x128xf32> -> vector<8x128xf32>
    %36 = arith.index_cast %c5_i32 : i32 to index
    %c0_20 = arith.constant 0 : index
    %c0_21 = arith.constant 0 : index
    %37 = vector.load %arg2[%36, %c0_20, %c0_21] : memref<8x8x128xf32, #tpu.memory_space<vmem>>, vector<1x8x128xf32>
    %38 = vector.shape_cast %37 : vector<1x8x128xf32> to vector<8x128xf32>
    %39 = arith.addf %35, %38 : vector<8x128xf32>
    %40 = math.tanh %39 : vector<8x128xf32>
    %c6_i32 = arith.constant 6 : i32
    %cst_22 = arith.constant dense<0.000000e+00> : vector<8x128xf32>
    %41 = tpu.matmul %40, %3, %cst_22 {dimension_numbers = #tpu.dot_dimension_numbers<[1], [0], [0], [1], [0, 0, 1, 1], [], []>, precision = #tpu.contract_precision<fp32>} : vector<8x128xf32>, vector<128x128xf32>, vector<8x128xf32> -> vector<8x128xf32>
    %42 = arith.index_cast %c6_i32 : i32 to index
    %c0_23 = arith.constant 0 : index
    %c0_24 = arith.constant 0 : index
    %43 = vector.load %arg2[%42, %c0_23, %c0_24] : memref<8x8x128xf32, #tpu.memory_space<vmem>>, vector<1x8x128xf32>
    %44 = vector.shape_cast %43 : vector<1x8x128xf32> to vector<8x128xf32>
    %45 = arith.addf %41, %44 : vector<8x128xf32>
    %46 = math.tanh %45 : vector<8x128xf32>
    %c7_i32 = arith.constant 7 : i32
    %cst_25 = arith.constant dense<0.000000e+00> : vector<8x128xf32>
    %47 = tpu.matmul %46, %3, %cst_25 {dimension_numbers = #tpu.dot_dimension_numbers<[1], [0], [0], [1], [0, 0, 1, 1], [], []>, precision = #tpu.contract_precision<fp32>} : vector<8x128xf32>, vector<128x128xf32>, vector<8x128xf32> -> vector<8x128xf32>
    %48 = arith.index_cast %c7_i32 : i32 to index
    %c0_26 = arith.constant 0 : index
    %c0_27 = arith.constant 0 : index
    %49 = vector.load %arg2[%48, %c0_26, %c0_27] : memref<8x8x128xf32, #tpu.memory_space<vmem>>, vector<1x8x128xf32>
    %50 = vector.shape_cast %49 : vector<1x8x128xf32> to vector<8x128xf32>
    %51 = arith.addf %47, %50 : vector<8x128xf32>
    %52 = math.tanh %51 : vector<8x128xf32>
    %c8_i32 = arith.constant 8 : i32
    %c0_28 = arith.constant 0 : index
    %c0_29 = arith.constant 0 : index
    %53 = vector.load %arg7[%c0_28, %c0_29] : memref<8x128xf32, #tpu.memory_space<vmem>>, vector<8x128xf32>
    tpu.vector_store %arg7[%c0_28, %c0_29], %52 {strides = array<i32>} : memref<8x128xf32, #tpu.memory_space<vmem>>, vector<8x128xf32>,
    %c0_i32_30 = arith.constant 0 : i32
    %54 = arith.cmpi eq, %arg1, %c0_i32_30 : i32
    %55 = arith.extui %54 : i1 to i32
    %c0_i32_31 = arith.constant 0 : i32
    %56 = arith.cmpi ne, %55, %c0_i32_31 : i32
    scf.if %56 {
      %c0_32 = arith.constant 0 : index
      %c0_33 = arith.constant 0 : index
      %57 = vector.load %arg7[%c0_32, %c0_33] : memref<8x128xf32, #tpu.memory_space<vmem>>, vector<8x128xf32>
      %c0_34 = arith.constant 0 : index
      %c0_35 = arith.constant 0 : index
      %58 = vector.load %arg4[%c0_34, %c0_35] : memref<128x128xf32, #tpu.memory_space<vmem>>, vector<128x128xf32>
      %cst_36 = arith.constant dense<0.000000e+00> : vector<8x128xf32>
      %59 = tpu.matmul %57, %58, %cst_36 {dimension_numbers = #tpu.dot_dimension_numbers<[1], [0], [0], [1], [0, 0, 1, 1], [], []>, precision = #tpu.contract_precision<fp32>} : vector<8x128xf32>, vector<128x128xf32>, vector<8x128xf32> -> vector<8x128xf32>
      %c0_37 = arith.constant 0 : index
      %c0_38 = arith.constant 0 : index
      %60 = vector.load %arg5[%c0_37, %c0_38] : memref<1x128xf32, #tpu.memory_space<vmem>>, vector<1x128xf32>
      %61 = vector.broadcast %60 : vector<1x128xf32> to vector<8x128xf32>
      %62 = arith.addf %59, %61 : vector<8x128xf32>
      %c0_39 = arith.constant 0 : index
      %c0_40 = arith.constant 0 : index
      %63 = vector.load %arg6[%c0_39, %c0_40] : memref<8x128xf32, #tpu.memory_space<vmem>>, vector<8x128xf32>
      tpu.vector_store %arg6[%c0_39, %c0_40], %62 {strides = array<i32>} : memref<8x128xf32, #tpu.memory_space<vmem>>, vector<8x128xf32>,
    } else {
    }
    return
  }
  func.func @transform_0(%arg0: i32, %arg1: i32) -> (i32, i32, i32) {
    %c0_i32 = arith.constant 0 : i32
    %c0_i32_0 = arith.constant 0 : i32
    return %arg1, %arg0, %c0_i32 : i32, i32, i32
  }
  func.func @transform_1(%arg0: i32, %arg1: i32) -> (i32, i32) {
    %c0_i32 = arith.constant 0 : i32
    %c0_i32_0 = arith.constant 0 : i32
    %c0_i32_1 = arith.constant 0 : i32
    return %c0_i32, %c0_i32_0 : i32, i32
  }
  func.func @transform_2(%arg0: i32, %arg1: i32) -> (i32, i32) {
    %c0_i32 = arith.constant 0 : i32
    %c0_i32_0 = arith.constant 0 : i32
    %c0_i32_1 = arith.constant 0 : i32
    return %c0_i32, %c0_i32_0 : i32, i32
  }
  func.func @transform_3(%arg0: i32, %arg1: i32) -> (i32, i32) {
    %c0_i32 = arith.constant 0 : i32
    %c0_i32_0 = arith.constant 0 : i32
    %c0_i32_1 = arith.constant 0 : i32
    return %c0_i32, %c0_i32_0 : i32, i32
  }
  func.func @transform_4(%arg0: i32, %arg1: i32) -> (i32, i32) {
    %c0_i32 = arith.constant 0 : i32
    %c0_i32_0 = arith.constant 0 : i32
    return %arg0, %c0_i32 : i32, i32
  }
}

</mosaic_0001>

<llo_original>
// kernel: tpu_custom_call.1
$region0: #{tpu_custom_call.1}
  #allocation0 [shape = 'u32[]', space=smem, size = 0x4, offset = 0x4, fixed_abs, tag = 'smem constant byte address 0x4 - core index']
  #allocation1 [shape = 'u32[144,128]{1,0:T(1,128)}', space=vmem, size = 0x12000, scoped, tag = 'internal scratch']
  #allocation2 [shape = 'f32[8,128]{1,0:T(8,128)}', space=vmem, size = 0x1000, scoped, tag = 'scratch operand']
  %s0 = inlined_call_operand.hbm [shape: f32[8,8,128], index: 0, kind: input, shape index: {}]
  %s1 = inlined_call_operand.hbm [shape: f32[128,128], index: 1, kind: input, shape index: {}]
  %s2 = inlined_call_operand.hbm [shape: f32[128,128], index: 2, kind: input, shape index: {}]
  %s3 = inlined_call_operand.vmem [shape: f32[1,128], index: 3, kind: input, shape index: {}]
  %s4 = inlined_call_operand.hbm [shape: f32[8,128], index: 4, kind: output, shape index: {}]
  %s5 = sld [smem:[#allocation0]]
  $region46: #{tpu_custom_call.1} parent=0
    _
  %s7 = ssub.s32 1, %s5
  %s8 = scalar_select 0, %s7, %s5
  $region1: #{tpu_custom_call.1} parent=0
    #allocation3 [shape = 'u8[32768]{0}', space=vmem, size = 0x8000, scoped, tag = 'input window, operand 0, single buffered']
    #allocation4 [shape = 's32[1]{0}', space=sflag, size = 0x4, scoped, tag = 'scoped memory for tpu_custom_call.1']
    #allocation5 [shape = 's32[1]{0}', space=sflag, size = 0x4, scoped, tag = 'scoped memory for tpu_custom_call.1']
    #allocation6 [shape = 'u8[65536]{0}', space=vmem, size = 0x10000, scoped, tag = 'input window, operand 1, single buffered']
    #allocation7 [shape = 's32[1]{0}', space=sflag, size = 0x4, scoped, tag = 'scoped memory for tpu_custom_call.1']
    #allocation8 [shape = 'u8[65536]{0}', space=vmem, size = 0x10000, scoped, tag = 'input window, operand 2, single buffered']
    #allocation9 [shape = 'u8[4096]{0}', space=vmem, size = 0x1000, scoped, tag = 'output window, operand 0, single buffered']
    %9 = vsyncpa [#allocation4], 0
    %10 = vsyncpa [#allocation7], 0
    %11 = vsyncpa [#allocation5], 0
    // Predicated region
    $region2: #{tpu_custom_call.1} parent=1 // pred_check
      _
    $region3: #{tpu_custom_call.1} parent=1 // pred_check_branch
      %13 = sbr.rel (0) target = $region5
    $region4: #{tpu_custom_call.1} parent=1 // pred_region
      %s15 = ssub.s32 1024, 1024
      %16 = vsyncadd [#allocation4], %s15
      %s17 = sshll.u32 [#allocation3], 4
      %s18 = int_to_ptr.vmem [resolvable:$true] %s17
      %23 = dma.hbm_to_vmem [thread:$0]  %s0, 1024, %s18, [#allocation4], 128, 128, 8
    $region5: #{tpu_custom_call.1} parent=1 // pred_fallthru
      _
    // Predicated region
    $region6: #{tpu_custom_call.1} parent=1 // pred_check
      _
    $region7: #{tpu_custom_call.1} parent=1 // pred_check_branch
      %25 = sbr.rel (0) target = $region9
    $region8: #{tpu_custom_call.1} parent=1 // pred_region
      %s27 = ssub.s32 2048, 2048
      %28 = vsyncadd [#allocation7], %s27
      %s29 = sshll.u32 [#allocation6], 4
      %s30 = int_to_ptr.vmem [resolvable:$true] %s29
      %35 = dma.hbm_to_vmem [thread:$0]  %s1, 2048, %s30, [#allocation7], 128, 128, 8
    $region9: #{tpu_custom_call.1} parent=1 // pred_fallthru
      _
    // Predicated region
    $region10: #{tpu_custom_call.1} parent=1 // pred_check
      _
    $region11: #{tpu_custom_call.1} parent=1 // pred_check_branch
      %37 = sbr.rel (0) target = $region13
    $region12: #{tpu_custom_call.1} parent=1 // pred_region
      %s39 = ssub.s32 2048, 2048
      %40 = vsyncadd [#allocation7], %s39
      %s41 = sshll.u32 [#allocation8], 4
      %s42 = int_to_ptr.vmem [resolvable:$true] %s41
      %47 = dma.hbm_to_vmem [thread:$0]  %s2, 2048, %s42, [#allocation7], 128, 128, 8
    $region13: #{tpu_custom_call.1} parent=1 // pred_fallthru
      _
    // Predicated region
    $region14: #{tpu_custom_call.1} parent=1 // pred_check
      _
    $region15: #{tpu_custom_call.1} parent=1 // pred_check_branch
      %49 = sbr.rel (0) target = $region17
    $region16: #{tpu_custom_call.1} parent=1 // pred_region
      _
    $region17: #{tpu_custom_call.1} parent=1 // pred_fallthru
      _
    // Predicated region
    $region18: #{tpu_custom_call.1} parent=1 // pred_check
      _
    $region19: #{tpu_custom_call.1} parent=1 // pred_check_branch
      %51 = sbr.rel (0) target = $region21
    $region20: #{tpu_custom_call.1} parent=1 // pred_region
      %52 = dma.done [#allocation4], 1024
    $region21: #{tpu_custom_call.1} parent=1 // pred_fallthru
      _
    // Predicated region
    $region22: #{tpu_custom_call.1} parent=1 // pred_check
      _
    $region23: #{tpu_custom_call.1} parent=1 // pred_check_branch
      %54 = sbr.rel (0) target = $region25
    $region24: #{tpu_custom_call.1} parent=1 // pred_region
      %55 = dma.done [#allocation7], 2048
    $region25: #{tpu_custom_call.1} parent=1 // pred_fallthru
      _
    // Predicated region
    $region26: #{tpu_custom_call.1} parent=1 // pred_check
      _
    $region27: #{tpu_custom_call.1} parent=1 // pred_check_branch
      %57 = sbr.rel (0) target = $region29
    $region28: #{tpu_custom_call.1} parent=1 // pred_region
      %58 = dma.done [#allocation7], 2048
    $region29: #{tpu_custom_call.1} parent=1 // pred_fallthru
      _
    %p59 = scmp.eq.s32.totalorder 0, 0
    // Predicated region
    $region30: #{tpu_custom_call.1} parent=1 // pred_check
      %p60 = pneg %p59
    $region31: #{tpu_custom_call.1} parent=1 // pred_check_branch
      %62 = sbr.rel (%p60) target = $region33
    $region32: #{tpu_custom_call.1} parent=1 // pred_region
      %63 = vst [vmem:[#allocation2] sm:$0xff] 0.0
    $region33: #{tpu_custom_call.1} parent=1 // pred_fallthru
      _
    %v64 = vld [vmem:[#allocation6] sm:$0xff]
    %v65 = vld [vmem:[#allocation6 + $0x8] sm:$0xff]
    %v66 = vld [vmem:[#allocation6 + $0x10] sm:$0xff]
    %v67 = vld [vmem:[#allocation6 + $0x18] sm:$0xff]
    %v68 = vld [vmem:[#allocation6 + $0x20] sm:$0xff]
    %v69 = vld [vmem:[#allocation6 + $0x28] sm:$0xff]
    %v70 = vld [vmem:[#allocation6 + $0x30] sm:$0xff]
    %v71 = vld [vmem:[#allocation6 + $0x38] sm:$0xff]
    %v72 = vld [vmem:[#allocation6 + $0x40] sm:$0xff]
    %v73 = vld [vmem:[#allocation6 + $0x48] sm:$0xff]
    %v74 = vld [vmem:[#allocation6 + $0x50] sm:$0xff]
    %v75 = vld [vmem:[#allocation6 + $0x58] sm:$0xff]
    %v76 = vld [vmem:[#allocation6 + $0x60] sm:$0xff]
    %v77 = vld [vmem:[#allocation6 + $0x68] sm:$0xff]
    %v78 = vld [vmem:[#allocation6 + $0x70] sm:$0xff]
    %v79 = vld [vmem:[#allocation6 + $0x78] sm:$0xff]
    %v80 = vld [vmem:[#allocation2] sm:$0xff]
    %v81 = vld [vmem:[#allocation3] sm:$0xff]
    %82 = vmatprep.subr.mxu0 0.0
    %v83 = vand.u32 %v64, 4294901760
    %84 = vmatpush1.msra.mxu0 %v83
    %85 = vmatprep.subr.mxu0 0.0
    %v86 = vand.u32 %v65, 4294901760
    %87 = vmatpush1.msra.mxu0 %v86
    %88 = vmatprep.subr.mxu0 0.0
    %v89 = vand.u32 %v66, 4294901760
    %90 = vmatpush1.msra.mxu0 %v89
    %91 = vmatprep.subr.mxu0 0.0
    %v92 = vand.u32 %v67, 4294901760
    %93 = vmatpush1.msra.mxu0 %v92
    %94 = vmatprep.subr.mxu0 0.0
    %v95 = vand.u32 %v68, 4294901760
    %96 = vmatpush1.msra.mxu0 %v95
    %97 = vmatprep.subr.mxu0 0.0
    %v98 = vand.u32 %v69, 4294901760
    %99 = vmatpush1.msra.mxu0 %v98
    %100 = vmatprep.subr.mxu0 0.0
    %v101 = vand.u32 %v70, 4294901760
    %102 = vmatpush1.msra.mxu0 %v101
    %103 = vmatprep.subr.mxu0 0.0
    %v104 = vand.u32 %v71, 4294901760
    %105 = vmatpush1.msra.mxu0 %v104
    %106 = vmatprep.subr.mxu0 0.0
    %v107 = vand.u32 %v72, 4294901760
    %108 = vmatpush1.msra.mxu0 %v107
    %109 = vmatprep.subr.mxu0 0.0
    %v110 = vand.u32 %v73, 4294901760
    %111 = vmatpush1.msra.mxu0 %v110
    %112 = vmatprep.subr.mxu0 0.0
    %v113 = vand.u32 %v74, 4294901760
    %114 = vmatpush1.msra.mxu0 %v113
    %115 = vmatprep.subr.mxu0 0.0
    %v116 = vand.u32 %v75, 4294901760
    %117 = vmatpush1.msra.mxu0 %v116
    %118 = vmatprep.subr.mxu0 0.0
    %v119 = vand.u32 %v76, 4294901760
    %120 = vmatpush1.msra.mxu0 %v119
    %121 = vmatprep.subr.mxu0 0.0
    %v122 = vand.u32 %v77, 4294901760
    %123 = vmatpush1.msra.mxu0 %v122
    %124 = vmatprep.subr.mxu0 0.0
    %v125 = vand.u32 %v78, 4294901760
    %126 = vmatpush1.msra.mxu0 %v125
    %127 = vmatprep.subr.mxu0 0.0
    %v128 = vand.u32 %v79, 4294901760
    %129 = vmatpush1.msra.mxu0 %v128
    %130 = vmatprep.subr.mxu0 0.0
    %131 = vmatpush1.msra.mxu0 0.0
    %132 = vmatprep.subr.mxu0 0.0
    %133 = vmatpush1.msra.mxu0 0.0
    %134 = vmatprep.subr.mxu0 0.0
    %135 = vmatpush1.msra.mxu0 0.0
    %136 = vmatprep.subr.mxu0 0.0
    %137 = vmatpush1.msra.mxu0 0.0
    %138 = vmatprep.subr.mxu0 0.0
    %139 = vmatpush1.msra.mxu0 0.0
    %140 = vmatprep.subr.mxu0 0.0
    %141 = vmatpush1.msra.mxu0 0.0
    %142 = vmatprep.subr.mxu0 0.0
    %143 = vmatpush1.msra.mxu0 0.0
    %144 = vmatprep.subr.mxu0 0.0
    %145 = vmatpush1.msra.mxu0 0.0
    %146 = vmatprep.subr.mxu0 0.0
    %147 = vmatpush1.msra.mxu0 0.0
    %148 = vmatprep.subr.mxu0 0.0
    %149 = vmatpush1.msra.mxu0 0.0
    %150 = vmatprep.subr.mxu0 0.0
    %151 = vmatpush1.msra.mxu0 0.0
    %152 = vmatprep.subr.mxu0 0.0
    %153 = vmatpush1.msra.mxu0 0.0
    %154 = vmatprep.subr.mxu0 0.0
    %155 = vmatpush1.msra.mxu0 0.0
    %156 = vmatprep.subr.mxu0 0.0
    %157 = vmatpush1.msra.mxu0 0.0
    %158 = vmatprep.subr.mxu0 0.0
    %159 = vmatpush1.msra.mxu0 0.0
    %160 = vmatprep.subr.mxu0 0.0
    %161 = vmatpush1.msra.mxu0 0.0
    %162 = vmatprep.mubr.f32.mxu0 0.0
    %v163 = vand.u32 %v80, 4294901760
    %v164 = vsub.f32 %v80, %v163
    %v165 = vand.u32 %v164, 4294901760
    %v166 = vsub.f32 %v164, %v165
    %v167 = vand.u32 %v166, 4294901760
    %168 = vmatmul.mubr.f32.gmra.mrb[0].mxu0 %v167
    %v169 = vpop.f32.mrb[0].mxu0
    %v170 = vadd.f32 %v81, %v169
    %v171 = vpop.f32.mrb[0].mxu0
    %172 = vdwg.mxu0
    %173 = vmatprep.subr.mxu0 0.0
    %v174 = vand.u32 %v64, 4294901760
    %v175 = vsub.f32 %v64, %v174
    %v176 = vand.u32 %v175, 4294901760
    %v177 = vsub.f32 %v175, %v176
    %v178 = vand.u32 %v177, 4294901760
    %179 = vmatpush1.msra.mxu0 %v178
    %180 = vmatprep.subr.mxu0 0.0
    %v181 = vand.u32 %v65, 4294901760
    %v182 = vsub.f32 %v65, %v181
    %v183 = vand.u32 %v182, 4294901760
    %v184 = vsub.f32 %v182, %v183
    %v185 = vand.u32 %v184, 4294901760
    %186 = vmatpush1.msra.mxu0 %v185
    %187 = vmatprep.subr.mxu0 0.0
    %v188 = vand.u32 %v66, 4294901760
    %v189 = vsub.f32 %v66, %v188
    %v190 = vand.u32 %v189, 4294901760
    %v191 = vsub.f32 %v189, %v190
    %v192 = vand.u32 %v191, 4294901760
    %193 = vmatpush1.msra.mxu0 %v192
    %194 = vmatprep.subr.mxu0 0.0
    %v195 = vand.u32 %v67, 4294901760
    %v196 = vsub.f32 %v67, %v195
    %v197 = vand.u32 %v196, 4294901760
    %v198 = vsub.f32 %v196, %v197
    %v199 = vand.u32 %v198, 4294901760
    %200 = vmatpush1.msra.mxu0 %v199
    %201 = vmatprep.subr.mxu0 0.0
    %v202 = vand.u32 %v68, 4294901760
    %v203 = vsub.f32 %v68, %v202
    %v204 = vand.u32 %v203, 4294901760
    %v205 = vsub.f32 %v203, %v204
    %v206 = vand.u32 %v205, 4294901760
    %207 = vmatpush1.msra.mxu0 %v206
    %208 = vmatprep.subr.mxu0 0.0
    %v209 = vand.u32 %v69, 4294901760
    %v210 = vsub.f32 %v69, %v209
    %v211 = vand.u32 %v210, 4294901760
    %v212 = vsub.f32 %v210, %v211
    %v213 = vand.u32 %v212, 4294901760
    %214 = vmatpush1.msra.mxu0 %v213
    %215 = vmatprep.subr.mxu0 0.0
    %v216 = vand.u32 %v70, 4294901760
    %v217 = vsub.f32 %v70, %v216
    %v218 = vand.u32 %v217, 4294901760
    %v219 = vsub.f32 %v217, %v218
    %v220 = vand.u32 %v219, 4294901760
    %221 = vmatpush1.msra.mxu0 %v220
    %222 = vmatprep.subr.mxu0 0.0
    %v223 = vand.u32 %v71, 4294901760
    %v224 = vsub.f32 %v71, %v223
    %v225 = vand.u32 %v224, 4294901760
    %v226 = vsub.f32 %v224, %v225
    %v227 = vand.u32 %v226, 4294901760
    %228 = vmatpush1.msra.mxu0 %v227
    %229 = vmatprep.subr.mxu0 0.0
    %v230 = vand.u32 %v72, 4294901760
    %v231 = vsub.f32 %v72, %v230
    %v232 = vand.u32 %v231, 4294901760
    %v233 = vsub.f32 %v231, %v232
    %v234 = vand.u32 %v233, 4294901760
    %235 = vmatpush1.msra.mxu0 %v234
    %236 = vmatprep.subr.mxu0 0.0
    %v237 = vand.u32 %v73, 4294901760
    %v238 = vsub.f32 %v73, %v237
    %v239 = vand.u32 %v238, 4294901760
    %v240 = vsub.f32 %v238, %v239
    %v241 = vand.u32 %v240, 4294901760
    %242 = vmatpush1.msra.mxu0 %v241
    %243 = vmatprep.subr.mxu0 0.0
    %v244 = vand.u32 %v74, 4294901760
    %v245 = vsub.f32 %v74, %v244
    %v246 = vand.u32 %v245, 4294901760
    %v247 = vsub.f32 %v245, %v246
    %v248 = vand.u32 %v247, 4294901760
    %249 = vmatpush1.msra.mxu0 %v248
    %250 = vmatprep.subr.mxu0 0.0
    %v251 = vand.u32 %v75, 4294901760
    %v252 = vsub.f32 %v75, %v251
    %v253 = vand.u32 %v252, 4294901760
    %v254 = vsub.f32 %v252, %v253
    %v255 = vand.u32 %v254, 4294901760
    %256 = vmatpush1.msra.mxu0 %v255
    %257 = vmatprep.subr.mxu0 0.0
    %v258 = vand.u32 %v76, 4294901760
    %v259 = vsub.f32 %v76, %v258
    %v260 = vand.u32 %v259, 4294901760
    %v261 = vsub.f32 %v259, %v260
    %v262 = vand.u32 %v261, 4294901760
    %263 = vmatpush1.msra.mxu0 %v262
    %264 = vmatprep.subr.mxu0 0.0
    %v265 = vand.u32 %v77, 4294901760
    %v266 = vsub.f32 %v77, %v265
    %v267 = vand.u32 %v266, 4294901760
    %v268 = vsub.f32 %v266, %v267
    %v269 = vand.u32 %v268, 4294901760
    %270 = vmatpush1.msra.mxu0 %v269
    %271 = vmatprep.subr.mxu0 0.0
    %v272 = vand.u32 %v78, 4294901760
    %v273 = vsub.f32 %v78, %v272
    %v274 = vand.u32 %v273, 4294901760
    %v275 = vsub.f32 %v273, %v274
    %v276 = vand.u32 %v275, 4294901760
    %277 = vmatpush1.msra.mxu0 %v276
    %278 = vmatprep.subr.mxu0 0.0
    %v279 = vand.u32 %v79, 4294901760
    %v280 = vsub.f32 %v79, %v279
    %v281 = vand.u32 %v280, 4294901760
    %v282 = vsub.f32 %v280, %v281
    %v283 = vand.u32 %v282, 4294901760
    %284 = vmatpush1.msra.mxu0 %v283
    %285 = vmatprep.subr.mxu0 0.0
    %286 = vmatpush1.msra.mxu0 0.0
    %287 = vmatprep.subr.mxu0 0.0
    %288 = vmatpush1.msra.mxu0 0.0
    %289 = vmatprep.subr.mxu0 0.0
    %290 = vmatpush1.msra.mxu0 0.0
    %291 = vmatprep.subr.mxu0 0.0
    %292 = vmatpush1.msra.mxu0 0.0
    %293 = vmatprep.subr.mxu0 0.0
    %294 = vmatpush1.msra.mxu0 0.0
    %295 = vmatprep.subr.mxu0 0.0
    %296 = vmatpush1.msra.mxu0 0.0
    %297 = vmatprep.subr.mxu0 0.0
    %298 = vmatpush1.msra.mxu0 0.0
    %299 = vmatprep.subr.mxu0 0.0
    %300 = vmatpush1.msra.mxu0 0.0
    %301 = vmatprep.subr.mxu0 0.0
    %302 = vmatpush1.msra.mxu0 0.0
    %303 = vmatprep.subr.mxu0 0.0
    %304 = vmatpush1.msra.mxu0 0.0
    %305 = vmatprep.subr.mxu0 0.0
    %306 = vmatpush1.msra.mxu0 0.0
    %307 = vmatprep.subr.mxu0 0.0
    %308 = vmatpush1.msra.mxu0 0.0
    %309 = vmatprep.subr.mxu0 0.0
    %310 = vmatpush1.msra.mxu0 0.0
    %311 = vmatprep.subr.mxu0 0.0
    %312 = vmatpush1.msra.mxu0 0.0
    %313 = vmatprep.subr.mxu0 0.0
    %314 = vmatpush1.msra.mxu0 0.0
    %315 = vmatprep.subr.mxu0 0.0
    %316 = vmatpush1.msra.mxu0 0.0
    %317 = vmatprep.mubr.f32.mxu0 0.0
    %v318 = vand.u32 %v80, 4294901760
    %319 = vmatmul.mubr.f32.gmra.mrb[0].mxu0 %v318
    %v320 = vpop.f32.mrb[0].mxu0
    %v321 = vadd.f32 %v170, %v320
    %v322 = vpop.f32.mrb[0].mxu0
    %323 = vdwg.mxu0
    %324 = vmatprep.subr.mxu0 0.0
    %v325 = vand.u32 %v64, 4294901760
    %v326 = vsub.f32 %v64, %v325
    %327 = vmatpush1.msra.mxu0 %v326
    %328 = vmatprep.subr.mxu0 0.0
    %v329 = vand.u32 %v65, 4294901760
    %v330 = vsub.f32 %v65, %v329
    %331 = vmatpush1.msra.mxu0 %v330
    %332 = vmatprep.subr.mxu0 0.0
    %v333 = vand.u32 %v66, 4294901760
    %v334 = vsub.f32 %v66, %v333
    %335 = vmatpush1.msra.mxu0 %v334
    %336 = vmatprep.subr.mxu0 0.0
    %v337 = vand.u32 %v67, 4294901760
    %v338 = vsub.f32 %v67, %v337
    %339 = vmatpush1.msra.mxu0 %v338
    %340 = vmatprep.subr.mxu0 0.0
    %v341 = vand.u32 %v68, 4294901760
    %v342 = vsub.f32 %v68, %v341
    %343 = vmatpush1.msra.mxu0 %v342
    %344 = vmatprep.subr.mxu0 0.0
    %v345 = vand.u32 %v69, 4294901760
    %v346 = vsub.f32 %v69, %v345
    %347 = vmatpush1.msra.mxu0 %v346
    %348 = vmatprep.subr.mxu0 0.0
    %v349 = vand.u32 %v70, 4294901760
    %v350 = vsub.f32 %v70, %v349
    %351 = vmatpush1.msra.mxu0 %v350
    %352 = vmatprep.subr.mxu0 0.0
    %v353 = vand.u32 %v71, 4294901760
    %v354 = vsub.f32 %v71, %v353
    %355 = vmatpush1.msra.mxu0 %v354
    %356 = vmatprep.subr.mxu0 0.0
    %v357 = vand.u32 %v72, 4294901760
    %v358 = vsub.f32 %v72, %v357
    %359 = vmatpush1.msra.mxu0 %v358
    %360 = vmatprep.subr.mxu0 0.0
    %v361 = vand.u32 %v73, 4294901760
    %v362 = vsub.f32 %v73, %v361
    %363 = vmatpush1.msra.mxu0 %v362
    %364 = vmatprep.subr.mxu0 0.0
    %v365 = vand.u32 %v74, 4294901760
    %v366 = vsub.f32 %v74, %v365
    %367 = vmatpush1.msra.mxu0 %v366
    %368 = vmatprep.subr.mxu0 0.0
    %v369 = vand.u32 %v75, 4294901760
    %v370 = vsub.f32 %v75, %v369
    %371 = vmatpush1.msra.mxu0 %v370
    %372 = vmatprep.subr.mxu0 0.0
    %v373 = vand.u32 %v76, 4294901760
    %v374 = vsub.f32 %v76, %v373
    %375 = vmatpush1.msra.mxu0 %v374
    %376 = vmatprep.subr.mxu0 0.0
    %v377 = vand.u32 %v77, 4294901760
    %v378 = vsub.f32 %v77, %v377
    %379 = vmatpush1.msra.mxu0 %v378
    %380 = vmatprep.subr.mxu0 0.0
    %v381 = vand.u32 %v78, 4294901760
    %v382 = vsub.f32 %v78, %v381
    %383 = vmatpush1.msra.mxu0 %v382
    %384 = vmatprep.subr.mxu0 0.0
    %v385 = vand.u32 %v79, 4294901760
    %v386 = vsub.f32 %v79, %v385
    %387 = vmatpush1.msra.mxu0 %v386
    %388 = vmatprep.subr.mxu0 0.0
    %389 = vmatpush1.msra.mxu0 0.0
    %390 = vmatprep.subr.mxu0 0.0
    %391 = vmatpush1.msra.mxu0 0.0
    %392 = vmatprep.subr.mxu0 0.0
    %393 = vmatpush1.msra.mxu0 0.0
    %394 = vmatprep.subr.mxu0 0.0
    %395 = vmatpush1.msra.mxu0 0.0
    %396 = vmatprep.subr.mxu0 0.0
    %397 = vmatpush1.msra.mxu0 0.0
    %398 = vmatprep.subr.mxu0 0.0
    %399 = vmatpush1.msra.mxu0 0.0
    %400 = vmatprep.subr.mxu0 0.0
    %401 = vmatpush1.msra.mxu0 0.0
    %402 = vmatprep.subr.mxu0 0.0
    %403 = vmatpush1.msra.mxu0 0.0
    %404 = vmatprep.subr.mxu0 0.0
    %405 = vmatpush1.msra.mxu0 0.0
    %406 = vmatprep.subr.mxu0 0.0
    %407 = vmatpush1.msra.mxu0 0.0
    %408 = vmatprep.subr.mxu0 0.0
    %409 = vmatpush1.msra.mxu0 0.0
    %410 = vmatprep.subr.mxu0 0.0
    %411 = vmatpush1.msra.mxu0 0.0
    %412 = vmatprep.subr.mxu0 0.0
    %413 = vmatpush1.msra.mxu0 0.0
    %414 = vmatprep.subr.mxu0 0.0
    %415 = vmatpush1.msra.mxu0 0.0
    %416 = vmatprep.subr.mxu0 0.0
    %417 = vmatpush1.msra.mxu0 0.0
    %418 = vmatprep.subr.mxu0 0.0
    %419 = vmatpush1.msra.mxu0 0.0
    %420 = vmatprep.mubr.f32.mxu0 0.0
    %v421 = vand.u32 %v80, 4294901760
    %v422 = vsub.f32 %v80, %v421
    %423 = vmatmul.mubr.f32.gmra.mrb[0].mxu0 %v422
    %v424 = vpop.f32.mrb[0].mxu0
    %v425 = vadd.f32 %v321, %v424
    %v426 = vpop.f32.mrb[0].mxu0
    %427 = vdwg.mxu0
    %428 = vmatprep.subr.mxu0 0.0
    %v429 = vand.u32 %v64, 4294901760
    %430 = vmatpush1.msra.mxu0 %v429
    %431 = vmatprep.subr.mxu0 0.0
    %v432 = vand.u32 %v65, 4294901760
    %433 = vmatpush1.msra.mxu0 %v432
    %434 = vmatprep.subr.mxu0 0.0
    %v435 = vand.u32 %v66, 4294901760
    %436 = vmatpush1.msra.mxu0 %v435
    %437 = vmatprep.subr.mxu0 0.0
    %v438 = vand.u32 %v67, 4294901760
    %439 = vmatpush1.msra.mxu0 %v438
    %440 = vmatprep.subr.mxu0 0.0
    %v441 = vand.u32 %v68, 4294901760
    %442 = vmatpush1.msra.mxu0 %v441
    %443 = vmatprep.subr.mxu0 0.0
    %v444 = vand.u32 %v69, 4294901760
    %445 = vmatpush1.msra.mxu0 %v444
    %446 = vmatprep.subr.mxu0 0.0
    %v447 = vand.u32 %v70, 4294901760
    %448 = vmatpush1.msra.mxu0 %v447
    %449 = vmatprep.subr.mxu0 0.0
    %v450 = vand.u32 %v71, 4294901760
    %451 = vmatpush1.msra.mxu0 %v450
    %452 = vmatprep.subr.mxu0 0.0
    %v453 = vand.u32 %v72, 4294901760
    %454 = vmatpush1.msra.mxu0 %v453
    %455 = vmatprep.subr.mxu0 0.0
    %v456 = vand.u32 %v73, 4294901760
    %457 = vmatpush1.msra.mxu0 %v456
    %458 = vmatprep.subr.mxu0 0.0
    %v459 = vand.u32 %v74, 4294901760
    %460 = vmatpush1.msra.mxu0 %v459
    %461 = vmatprep.subr.mxu0 0.0
    %v462 = vand.u32 %v75, 4294901760
    %463 = vmatpush1.msra.mxu0 %v462
    %464 = vmatprep.subr.mxu0 0.0
    %v465 = vand.u32 %v76, 4294901760
    %466 = vmatpush1.msra.mxu0 %v465
    %467 = vmatprep.subr.mxu0 0.0
    %v468 = vand.u32 %v77, 4294901760
    %469 = vmatpush1.msra.mxu0 %v468
    %470 = vmatprep.subr.mxu0 0.0
    %v471 = vand.u32 %v78, 4294901760
    %472 = vmatpush1.msra.mxu0 %v471
    %473 = vmatprep.subr.mxu0 0.0
    %v474 = vand.u32 %v79, 4294901760
    %475 = vmatpush1.msra.mxu0 %v474
    %476 = vmatprep.subr.mxu0 0.0
    %477 = vmatpush1.msra.mxu0 0.0
    %478 = vmatprep.subr.mxu0 0.0
    %479 = vmatpush1.msra.mxu0 0.0
    %480 = vmatprep.subr.mxu0 0.0
    %481 = vmatpush1.msra.mxu0 0.0
    %482 = vmatprep.subr.mxu0 0.0
    %483 = vmatpush1.msra.mxu0 0.0
    %484 = vmatprep.subr.mxu0 0.0
    %485 = vmatpush1.msra.mxu0 0.0
    %486 = vmatprep.subr.mxu0 0.0
    %487 = vmatpush1.msra.mxu0 0.0
    %488 = vmatprep.subr.mxu0 0.0
    %489 = vmatpush1.msra.mxu0 0.0
    %490 = vmatprep.subr.mxu0 0.0
    %491 = vmatpush1.msra.mxu0 0.0
    %492 = vmatprep.subr.mxu0 0.0
    %493 = vmatpush1.msra.mxu0 0.0
    %494 = vmatprep.subr.mxu0 0.0
    %495 = vmatpush1.msra.mxu0 0.0
    %496 = vmatprep.subr.mxu0 0.0
    %497 = vmatpush1.msra.mxu0 0.0
    %498 = vmatprep.subr.mxu0 0.0
    %499 = vmatpush1.msra.mxu0 0.0
    %500 = vmatprep.subr.mxu0 0.0
    %501 = vmatpush1.msra.mxu0 0.0
    %502 = vmatprep.subr.mxu0 0.0
    %503 = vmatpush1.msra.mxu0 0.0
    %504 = vmatprep.subr.mxu0 0.0
    %505 = vmatpush1.msra.mxu0 0.0
    %506 = vmatprep.subr.mxu0 0.0
    %507 = vmatpush1.msra.mxu0 0.0
    %508 = vmatprep.mubr.f32.mxu0 0.0
    %v509 = vand.u32 %v80, 4294901760
    %v510 = vsub.f32 %v80, %v509
    %v511 = vand.u32 %v510, 4294901760
    %512 = vmatmul.mubr.f32.gmra.mrb[0].mxu0 %v511
    %v513 = vpop.f32.mrb[0].mxu0
    %v514 = vadd.f32 %v425, %v513
    %v515 = vpop.f32.mrb[0].mxu0
    %516 = vdwg.mxu0
    %517 = vmatprep.subr.mxu0 0.0
    %v518 = vand.u32 %v64, 4294901760
    %v519 = vsub.f32 %v64, %v518
    %v520 = vand.u32 %v519, 4294901760
    %521 = vmatpush1.msra.mxu0 %v520
    %522 = vmatprep.subr.mxu0 0.0
    %v523 = vand.u32 %v65, 4294901760
    %v524 = vsub.f32 %v65, %v523
    %v525 = vand.u32 %v524, 4294901760
    %526 = vmatpush1.msra.mxu0 %v525
    %527 = vmatprep.subr.mxu0 0.0
    %v528 = vand.u32 %v66, 4294901760
    %v529 = vsub.f32 %v66, %v528
    %v530 = vand.u32 %v529, 4294901760
    %531 = vmatpush1.msra.mxu0 %v530
    %532 = vmatprep.subr.mxu0 0.0
    %v533 = vand.u32 %v67, 4294901760
    %v534 = vsub.f32 %v67, %v533
    %v535 = vand.u32 %v534, 4294901760
    %536 = vmatpush1.msra.mxu0 %v535
    %537 = vmatprep.subr.mxu0 0.0
    %v538 = vand.u32 %v68, 4294901760
    %v539 = vsub.f32 %v68, %v538
    %v540 = vand.u32 %v539, 4294901760
    %541 = vmatpush1.msra.mxu0 %v540
    %542 = vmatprep.subr.mxu0 0.0
    %v543 = vand.u32 %v69, 4294901760
    %v544 = vsub.f32 %v69, %v543
    %v545 = vand.u32 %v544, 4294901760
    %546 = vmatpush1.msra.mxu0 %v545
    %547 = vmatprep.subr.mxu0 0.0
    %v548 = vand.u32 %v70, 4294901760
    %v549 = vsub.f32 %v70, %v548
    %v550 = vand.u32 %v549, 4294901760
    %551 = vmatpush1.msra.mxu0 %v550
    %552 = vmatprep.subr.mxu0 0.0
    %v553 = vand.u32 %v71, 4294901760
    %v554 = vsub.f32 %v71, %v553
    %v555 = vand.u32 %v554, 4294901760
    %556 = vmatpush1.msra.mxu0 %v555
    %557 = vmatprep.subr.mxu0 0.0
    %v558 = vand.u32 %v72, 4294901760
    %v559 = vsub.f32 %v72, %v558
    %v560 = vand.u32 %v559, 4294901760
    %561 = vmatpush1.msra.mxu0 %v560
    %562 = vmatprep.subr.mxu0 0.0
    %v563 = vand.u32 %v73, 4294901760
    %v564 = vsub.f32 %v73, %v563
    %v565 = vand.u32 %v564, 4294901760
    %566 = vmatpush1.msra.mxu0 %v565
    %567 = vmatprep.subr.mxu0 0.0
    %v568 = vand.u32 %v74, 4294901760
    %v569 = vsub.f32 %v74, %v568
    %v570 = vand.u32 %v569, 4294901760
    %571 = vmatpush1.msra.mxu0 %v570
    %572 = vmatprep.subr.mxu0 0.0
    %v573 = vand.u32 %v75, 4294901760
    %v574 = vsub.f32 %v75, %v573
    %v575 = vand.u32 %v574, 4294901760
    %576 = vmatpush1.msra.mxu0 %v575
    %577 = vmatprep.subr.mxu0 0.0
    %v578 = vand.u32 %v76, 4294901760
    %v579 = vsub.f32 %v76, %v578
    %v580 = vand.u32 %v579, 4294901760
    %581 = vmatpush1.msra.mxu0 %v580
    %582 = vmatprep.subr.mxu0 0.0
    %v583 = vand.u32 %v77, 4294901760
    %v584 = vsub.f32 %v77, %v583
    %v585 = vand.u32 %v584, 4294901760
    %586 = vmatpush1.msra.mxu0 %v585
    %587 = vmatprep.subr.mxu0 0.0
    %v588 = vand.u32 %v78, 4294901760
    %v589 = vsub.f32 %v78, %v588
    %v590 = vand.u32 %v589, 4294901760
    %591 = vmatpush1.msra.mxu0 %v590
    %592 = vmatprep.subr.mxu0 0.0
    %v593 = vand.u32 %v79, 4294901760
    %v594 = vsub.f32 %v79, %v593
    %v595 = vand.u32 %v594, 4294901760
    %596 = vmatpush1.msra.mxu0 %v595
    %597 = vmatprep.subr.mxu0 0.0
    %598 = vmatpush1.msra.mxu0 0.0
    %599 = vmatprep.subr.mxu0 0.0
    %600 = vmatpush1.msra.mxu0 0.0
    %601 = vmatprep.subr.mxu0 0.0
    %602 = vmatpush1.msra.mxu0 0.0
    %603 = vmatprep.subr.mxu0 0.0
    %604 = vmatpush1.msra.mxu0 0.0
    %605 = vmatprep.subr.mxu0 0.0
    %606 = vmatpush1.msra.mxu0 0.0
    %607 = vmatprep.subr.mxu0 0.0
    %608 = vmatpush1.msra.mxu0 0.0
    %609 = vmatprep.subr.mxu0 0.0
    %610 = vmatpush1.msra.mxu0 0.0
    %611 = vmatprep.subr.mxu0 0.0
    %612 = vmatpush1.msra.mxu0 0.0
    %613 = vmatprep.subr.mxu0 0.0
    %614 = vmatpush1.msra.mxu0 0.0
    %615 = vmatprep.subr.mxu0 0.0
    %616 = vmatpush1.msra.mxu0 0.0
    %617 = vmatprep.subr.mxu0 0.0
    %618 = vmatpush1.msra.mxu0 0.0
    %619 = vmatprep.subr.mxu0 0.0
    %620 = vmatpush1.msra.mxu0 0.0
    %621 = vmatprep.subr.mxu0 0.0
    %622 = vmatpush1.msra.mxu0 0.0
    %623 = vmatprep.subr.mxu0 0.0
    %624 = vmatpush1.msra.mxu0 0.0
    %625 = vmatprep.subr.mxu0 0.0
    %626 = vmatpush1.msra.mxu0 0.0
    %627 = vmatprep.subr.mxu0 0.0
    %628 = vmatpush1.msra.mxu0 0.0
    %629 = vmatprep.mubr.f32.mxu0 0.0
    %v630 = vand.u32 %v80, 4294901760
    %631 = vmatmul.mubr.f32.gmra.mrb[0].mxu0 %v630
    %v632 = vpop.f32.mrb[0].mxu0
    %v633 = vadd.f32 %v514, %v632
    %v634 = vpop.f32.mrb[0].mxu0
    %635 = vdwg.mxu0
    %636 = vmatprep.subr.mxu0 0.0
    %v637 = vand.u32 %v64, 4294901760
    %638 = vmatpush1.msra.mxu0 %v637
    %639 = vmatprep.subr.mxu0 0.0
    %v640 = vand.u32 %v65, 4294901760
    %641 = vmatpush1.msra.mxu0 %v640
    %642 = vmatprep.subr.mxu0 0.0
    %v643 = vand.u32 %v66, 4294901760
    %644 = vmatpush1.msra.mxu0 %v643
    %645 = vmatprep.subr.mxu0 0.0
    %v646 = vand.u32 %v67, 4294901760
    %647 = vmatpush1.msra.mxu0 %v646
    %648 = vmatprep.subr.mxu0 0.0
    %v649 = vand.u32 %v68, 4294901760
    %650 = vmatpush1.msra.mxu0 %v649
    %651 = vmatprep.subr.mxu0 0.0
    %v652 = vand.u32 %v69, 4294901760
    %653 = vmatpush1.msra.mxu0 %v652
    %654 = vmatprep.subr.mxu0 0.0
    %v655 = vand.u32 %v70, 4294901760
    %656 = vmatpush1.msra.mxu0 %v655
    %657 = vmatprep.subr.mxu0 0.0
    %v658 = vand.u32 %v71, 4294901760
    %659 = vmatpush1.msra.mxu0 %v658
    %660 = vmatprep.subr.mxu0 0.0
    %v661 = vand.u32 %v72, 4294901760
    %662 = vmatpush1.msra.mxu0 %v661
    %663 = vmatprep.subr.mxu0 0.0
    %v664 = vand.u32 %v73, 4294901760
    %665 = vmatpush1.msra.mxu0 %v664
    %666 = vmatprep.subr.mxu0 0.0
    %v667 = vand.u32 %v74, 4294901760
    %668 = vmatpush1.msra.mxu0 %v667
    %669 = vmatprep.subr.mxu0 0.0
    %v670 = vand.u32 %v75, 4294901760
    %671 = vmatpush1.msra.mxu0 %v670
    %672 = vmatprep.subr.mxu0 0.0
    %v673 = vand.u32 %v76, 4294901760
    %674 = vmatpush1.msra.mxu0 %v673
    %675 = vmatprep.subr.mxu0 0.0
    %v676 = vand.u32 %v77, 4294901760
    %677 = vmatpush1.msra.mxu0 %v676
    %678 = vmatprep.subr.mxu0 0.0
    %v679 = vand.u32 %v78, 4294901760
    %680 = vmatpush1.msra.mxu0 %v679
    %681 = vmatprep.subr.mxu0 0.0
    %v682 = vand.u32 %v79, 4294901760
    %683 = vmatpush1.msra.mxu0 %v682
    %684 = vmatprep.subr.mxu0 0.0
    %685 = vmatpush1.msra.mxu0 0.0
    %686 = vmatprep.subr.mxu0 0.0
    %687 = vmatpush1.msra.mxu0 0.0
    %688 = vmatprep.subr.mxu0 0.0
    %689 = vmatpush1.msra.mxu0 0.0
    %690 = vmatprep.subr.mxu0 0.0
    %691 = vmatpush1.msra.mxu0 0.0
    %692 = vmatprep.subr.mxu0 0.0
    %693 = vmatpush1.msra.mxu0 0.0
    %694 = vmatprep.subr.mxu0 0.0
    %695 = vmatpush1.msra.mxu0 0.0
    %696 = vmatprep.subr.mxu0 0.0
    %697 = vmatpush1.msra.mxu0 0.0
    %698 = vmatprep.subr.mxu0 0.0
    %699 = vmatpush1.msra.mxu0 0.0
    %700 = vmatprep.subr.mxu0 0.0
    %701 = vmatpush1.msra.mxu0 0.0
    %702 = vmatprep.subr.mxu0 0.0
    %703 = vmatpush1.msra.mxu0 0.0
    %704 = vmatprep.subr.mxu0 0.0
    %705 = vmatpush1.msra.mxu0 0.0
    %706 = vmatprep.subr.mxu0 0.0
    %707 = vmatpush1.msra.mxu0 0.0
    %708 = vmatprep.subr.mxu0 0.0
    %709 = vmatpush1.msra.mxu0 0.0
    %710 = vmatprep.subr.mxu0 0.0
    %711 = vmatpush1.msra.mxu0 0.0
    %712 = vmatprep.subr.mxu0 0.0
    %713 = vmatpush1.msra.mxu0 0.0
    %714 = vmatprep.subr.mxu0 0.0
    %715 = vmatpush1.msra.mxu0 0.0
    %716 = vmatprep.mubr.f32.mxu0 0.0
    %v717 = vand.u32 %v80, 4294901760
    %718 = vmatmul.mubr.f32.gmra.mrb[0].mxu0 %v717
    %v719 = vpop.f32.mrb[0].mxu0
    %v720 = vadd.f32 %v633, %v719
    %v721 = vpop.f32.mrb[0].mxu0
    %722 = vdwg.mxu0
    %v723 = vtanh.pop %v720
    %s724 = scalar_lea.vmem [#allocation3], 8
    %v725 = vld [vmem:[%s724] sm:$0xff]
    %726 = vmatprep.subr.mxu0 0.0
    %v727 = vand.u32 %v64, 4294901760
    %728 = vmatpush1.msra.mxu0 %v727
    %729 = vmatprep.subr.mxu0 0.0
    %v730 = vand.u32 %v65, 4294901760
    %731 = vmatpush1.msra.mxu0 %v730
    %732 = vmatprep.subr.mxu0 0.0
    %v733 = vand.u32 %v66, 4294901760
    %734 = vmatpush1.msra.mxu0 %v733
    %735 = vmatprep.subr.mxu0 0.0
    %v736 = vand.u32 %v67, 4294901760
    %737 = vmatpush1.msra.mxu0 %v736
    %738 = vmatprep.subr.mxu0 0.0
    %v739 = vand.u32 %v68, 4294901760
    %740 = vmatpush1.msra.mxu0 %v739
    %741 = vmatprep.subr.mxu0 0.0
    %v742 = vand.u32 %v69, 4294901760
    %743 = vmatpush1.msra.mxu0 %v742
    %744 = vmatprep.subr.mxu0 0.0
    %v745 = vand.u32 %v70, 4294901760
    %746 = vmatpush1.msra.mxu0 %v745
    %747 = vmatprep.subr.mxu0 0.0
    %v748 = vand.u32 %v71, 4294901760
    %749 = vmatpush1.msra.mxu0 %v748
    %750 = vmatprep.subr.mxu0 0.0
    %v751 = vand.u32 %v72, 4294901760
    %752 = vmatpush1.msra.mxu0 %v751
    %753 = vmatprep.subr.mxu0 0.0
    %v754 = vand.u32 %v73, 4294901760
    %755 = vmatpush1.msra.mxu0 %v754
    %756 = vmatprep.subr.mxu0 0.0
    %v757 = vand.u32 %v74, 4294901760
    %758 = vmatpush1.msra.mxu0 %v757
    %759 = vmatprep.subr.mxu0 0.0
    %v760 = vand.u32 %v75, 4294901760
    %761 = vmatpush1.msra.mxu0 %v760
    %762 = vmatprep.subr.mxu0 0.0
    %v763 = vand.u32 %v76, 4294901760
    %764 = vmatpush1.msra.mxu0 %v763
    %765 = vmatprep.subr.mxu0 0.0
    %v766 = vand.u32 %v77, 4294901760
    %767 = vmatpush1.msra.mxu0 %v766
    %768 = vmatprep.subr.mxu0 0.0
    %v769 = vand.u32 %v78, 4294901760
    %770 = vmatpush1.msra.mxu0 %v769
    %771 = vmatprep.subr.mxu0 0.0
    %v772 = vand.u32 %v79, 4294901760
    %773 = vmatpush1.msra.mxu0 %v772
    %774 = vmatprep.subr.mxu0 0.0
    %775 = vmatpush1.msra.mxu0 0.0
    %776 = vmatprep.subr.mxu0 0.0
    %777 = vmatpush1.msra.mxu0 0.0
    %778 = vmatprep.subr.mxu0 0.0
    %779 = vmatpush1.msra.mxu0 0.0
    %780 = vmatprep.subr.mxu0 0.0
    %781 = vmatpush1.msra.mxu0 0.0
    %782 = vmatprep.subr.mxu0 0.0
    %783 = vmatpush1.msra.mxu0 0.0
    %784 = vmatprep.subr.mxu0 0.0
    %785 = vmatpush1.msra.mxu0 0.0
    %786 = vmatprep.subr.mxu0 0.0
    %787 = vmatpush1.msra.mxu0 0.0
    %788 = vmatprep.subr.mxu0 0.0
    %789 = vmatpush1.msra.mxu0 0.0
    %790 = vmatprep.subr.mxu0 0.0
    %791 = vmatpush1.msra.mxu0 0.0
    %792 = vmatprep.subr.mxu0 0.0
    %793 = vmatpush1.msra.mxu0 0.0
    %794 = vmatprep.subr.mxu0 0.0
    %795 = vmatpush1.msra.mxu0 0.0
    %796 = vmatprep.subr.mxu0 0.0
    %797 = vmatpush1.msra.mxu0 0.0
    %798 = vmatprep.subr.mxu0 0.0
    %799 = vmatpush1.msra.mxu0 0.0
    %800 = vmatprep.subr.mxu0 0.0
    %801 = vmatpush1.msra.mxu0 0.0
    %802 = vmatprep.subr.mxu0 0.0
    %803 = vmatpush1.msra.mxu0 0.0
    %804 = vmatprep.subr.mxu0 0.0
    %805 = vmatpush1.msra.mxu0 0.0
    %806 = vmatprep.mubr.f32.mxu0 0.0
    %v807 = vand.u32 %v723, 4294901760
    %v808 = vsub.f32 %v723, %v807
    %v809 = vand.u32 %v808, 4294901760
    %v810 = vsub.f32 %v808, %v809
    %v811 = vand.u32 %v810, 4294901760
    %812 = vmatmul.mubr.f32.gmra.mrb[0].mxu0 %v811
    %v813 = vpop.f32.mrb[0].mxu0
    %v814 = vadd.f32 %v725, %v813
    %v815 = vpop.f32.mrb[0].mxu0
    %816 = vdwg.mxu0
    %817 = vmatprep.subr.mxu0 0.0
    %v818 = vand.u32 %v64, 4294901760
    %v819 = vsub.f32 %v64, %v818
    %v820 = vand.u32 %v819, 4294901760
    %v821 = vsub.f32 %v819, %v820
    %v822 = vand.u32 %v821, 4294901760
    %823 = vmatpush1.msra.mxu0 %v822
    %824 = vmatprep.subr.mxu0 0.0
    %v825 = vand.u32 %v65, 4294901760
    %v826 = vsub.f32 %v65, %v825
    %v827 = vand.u32 %v826, 4294901760
    %v828 = vsub.f32 %v826, %v827
    %v829 = vand.u32 %v828, 4294901760
    %830 = vmatpush1.msra.mxu0 %v829
    %831 = vmatprep.subr.mxu0 0.0
    %v832 = vand.u32 %v66, 4294901760
    %v833 = vsub.f32 %v66, %v832
    %v834 = vand.u32 %v833, 4294901760
    %v835 = vsub.f32 %v833, %v834
    %v836 = vand.u32 %v835, 4294901760
    %837 = vmatpush1.msra.mxu0 %v836
    %838 = vmatprep.subr.mxu0 0.0
    %v839 = vand.u32 %v67, 4294901760
    %v840 = vsub.f32 %v67, %v839
    %v841 = vand.u32 %v840, 4294901760
    %v842 = vsub.f32 %v840, %v841
    %v843 = vand.u32 %v842, 4294901760
    %844 = vmatpush1.msra.mxu0 %v843
    %845 = vmatprep.subr.mxu0 0.0
    %v846 = vand.u32 %v68, 4294901760
    %v847 = vsub.f32 %v68, %v846
    %v848 = vand.u32 %v847, 4294901760
    %v849 = vsub.f32 %v847, %v848
    %v850 = vand.u32 %v849, 4294901760
    %851 = vmatpush1.msra.mxu0 %v850
    %852 = vmatprep.subr.mxu0 0.0
    %v853 = vand.u32 %v69, 4294901760
    %v854 = vsub.f32 %v69, %v853
    %v855 = vand.u32 %v854, 4294901760
    %v856 = vsub.f32 %v854, %v855
    %v857 = vand.u32 %v856, 4294901760
    %858 = vmatpush1.msra.mxu0 %v857
    %859 = vmatprep.subr.mxu0 0.0
    %v860 = vand.u32 %v70, 4294901760
    %v861 = vsub.f32 %v70, %v860
    %v862 = vand.u32 %v861, 4294901760
    %v863 = vsub.f32 %v861, %v862
    %v864 = vand.u32 %v863, 4294901760
    %865 = vmatpush1.msra.mxu0 %v864
    %866 = vmatprep.subr.mxu0 0.0
    %v867 = vand.u32 %v71, 4294901760
    %v868 = vsub.f32 %v71, %v867
    %v869 = vand.u32 %v868, 4294901760
    %v870 = vsub.f32 %v868, %v869
    %v871 = vand.u32 %v870, 4294901760
    %872 = vmatpush1.msra.mxu0 %v871
    %873 = vmatprep.subr.mxu0 0.0
    %v874 = vand.u32 %v72, 4294901760
    %v875 = vsub.f32 %v72, %v874
    %v876 = vand.u32 %v875, 4294901760
    %v877 = vsub.f32 %v875, %v876
    %v878 = vand.u32 %v877, 4294901760
    %879 = vmatpush1.msra.mxu0 %v878
    %880 = vmatprep.subr.mxu0 0.0
    %v881 = vand.u32 %v73, 4294901760
    %v882 = vsub.f32 %v73, %v881
    %v883 = vand.u32 %v882, 4294901760
    %v884 = vsub.f32 %v882, %v883
    %v885 = vand.u32 %v884, 4294901760
    %886 = vmatpush1.msra.mxu0 %v885
    %887 = vmatprep.subr.mxu0 0.0
    %v888 = vand.u32 %v74, 4294901760
    %v889 = vsub.f32 %v74, %v888
    %v890 = vand.u32 %v889, 4294901760
    %v891 = vsub.f32 %v889, %v890
    %v892 = vand.u32 %v891, 4294901760
    %893 = vmatpush1.msra.mxu0 %v892
    %894 = vmatprep.subr.mxu0 0.0
    %v895 = vand.u32 %v75, 4294901760
    %v896 = vsub.f32 %v75, %v895
    %v897 = vand.u32 %v896, 4294901760
    %v898 = vsub.f32 %v896, %v897
    %v899 = vand.u32 %v898, 4294901760
    %900 = vmatpush1.msra.mxu0 %v899
    %901 = vmatprep.subr.mxu0 0.0
    %v902 = vand.u32 %v76, 4294901760
    %v903 = vsub.f32 %v76, %v902
    %v904 = vand.u32 %v903, 4294901760
    %v905 = vsub.f32 %v903, %v904
    %v906 = vand.u32 %v905, 4294901760
    %907 = vmatpush1.msra.mxu0 %v906
    %908 = vmatprep.subr.mxu0 0.0
    %v909 = vand.u32 %v77, 4294901760
    %v910 = vsub.f32 %v77, %v909
    %v911 = vand.u32 %v910, 4294901760
    %v912 = vsub.f32 %v910, %v911
    %v913 = vand.u32 %v912, 4294901760
    %914 = vmatpush1.msra.mxu0 %v913
    %915 = vmatprep.subr.mxu0 0.0
    %v916 = vand.u32 %v78, 4294901760
    %v917 = vsub.f32 %v78, %v916
    %v918 = vand.u32 %v917, 4294901760
    %v919 = vsub.f32 %v917, %v918
    %v920 = vand.u32 %v919, 4294901760
    %921 = vmatpush1.msra.mxu0 %v920
    %922 = vmatprep.subr.mxu0 0.0
    %v923 = vand.u32 %v79, 4294901760
    %v924 = vsub.f32 %v79, %v923
    %v925 = vand.u32 %v924, 4294901760
    %v926 = vsub.f32 %v924, %v925
    %v927 = vand.u32 %v926, 4294901760
    %928 = vmatpush1.msra.mxu0 %v927
    %929 = vmatprep.subr.mxu0 0.0
    %930 = vmatpush1.msra.mxu0 0.0
    %931 = vmatprep.subr.mxu0 0.0
    %932 = vmatpush1.msra.mxu0 0.0
    %933 = vmatprep.subr.mxu0 0.0
    %934 = vmatpush1.msra.mxu0 0.0
    %935 = vmatprep.subr.mxu0 0.0
    %936 = vmatpush1.msra.mxu0 0.0
    %937 = vmatprep.subr.mxu0 0.0
    %938 = vmatpush1.msra.mxu0 0.0
    %939 = vmatprep.subr.mxu0 0.0
    %940 = vmatpush1.msra.mxu0 0.0
    %941 = vmatprep.subr.mxu0 0.0
    %942 = vmatpush1.msra.mxu0 0.0
    %943 = vmatprep.subr.mxu0 0.0
    %944 = vmatpush1.msra.mxu0 0.0
    %945 = vmatprep.subr.mxu0 0.0
    %946 = vmatpush1.msra.mxu0 0.0
    %947 = vmatprep.subr.mxu0 0.0
    %948 = vmatpush1.msra.mxu0 0.0
    %949 = vmatprep.subr.mxu0 0.0
    %950 = vmatpush1.msra.mxu0 0.0
    %951 = vmatprep.subr.mxu0 0.0
    %952 = vmatpush1.msra.mxu0 0.0
    %953 = vmatprep.subr.mxu0 0.0
    %954 = vmatpush1.msra.mxu0 0.0
    %955 = vmatprep.subr.mxu0 0.0
    %956 = vmatpush1.msra.mxu0 0.0
    %957 = vmatprep.subr.mxu0 0.0
    %958 = vmatpush1.msra.mxu0 0.0
    %959 = vmatprep.subr.mxu0 0.0
    %960 = vmatpush1.msra.mxu0 0.0
    %961 = vmatprep.mubr.f32.mxu0 0.0
    %v962 = vand.u32 %v723, 4294901760
    %963 = vmatmul.mubr.f32.gmra.mrb[0].mxu0 %v962
    %v964 = vpop.f32.mrb[0].mxu0
    %v965 = vadd.f32 %v814, %v964
    %v966 = vpop.f32.mrb[0].mxu0
    %967 = vdwg.mxu0
    %968 = vmatprep.subr.mxu0 0.0
    %v969 = vand.u32 %v64, 4294901760
    %v970 = vsub.f32 %v64, %v969
    %971 = vmatpush1.msra.mxu0 %v970
    %972 = vmatprep.subr.mxu0 0.0
    %v973 = vand.u32 %v65, 4294901760
    %v974 = vsub.f32 %v65, %v973
    %975 = vmatpush1.msra.mxu0 %v974
    %976 = vmatprep.subr.mxu0 0.0
    %v977 = vand.u32 %v66, 4294901760
    %v978 = vsub.f32 %v66, %v977
    %979 = vmatpush1.msra.mxu0 %v978
    %980 = vmatprep.subr.mxu0 0.0
    %v981 = vand.u32 %v67, 4294901760
    %v982 = vsub.f32 %v67, %v981
    %983 = vmatpush1.msra.mxu0 %v982
    %984 = vmatprep.subr.mxu0 0.0
    %v985 = vand.u32 %v68, 4294901760
    %v986 = vsub.f32 %v68, %v985
    %987 = vmatpush1.msra.mxu0 %v986
    %988 = vmatprep.subr.mxu0 0.0
    %v989 = vand.u32 %v69, 4294901760
    %v990 = vsub.f32 %v69, %v989
    %991 = vmatpush1.msra.mxu0 %v990
    %992 = vmatprep.subr.mxu0 0.0
    %v993 = vand.u32 %v70, 4294901760
    %v994 = vsub.f32 %v70, %v993
    %995 = vmatpush1.msra.mxu0 %v994
    %996 = vmatprep.subr.mxu0 0.0
    %v997 = vand.u32 %v71, 4294901760
    %v998 = vsub.f32 %v71, %v997
    %999 = vmatpush1.msra.mxu0 %v998
    %1000 = vmatprep.subr.mxu0 0.0
    %v1001 = vand.u32 %v72, 4294901760
    %v1002 = vsub.f32 %v72, %v1001
    %1003 = vmatpush1.msra.mxu0 %v1002
    %1004 = vmatprep.subr.mxu0 0.0
    %v1005 = vand.u32 %v73, 4294901760
    %v1006 = vsub.f32 %v73, %v1005
    %1007 = vmatpush1.msra.mxu0 %v1006
    %1008 = vmatprep.subr.mxu0 0.0
    %v1009 = vand.u32 %v74, 4294901760
    %v1010 = vsub.f32 %v74, %v1009
    %1011 = vmatpush1.msra.mxu0 %v1010
    %1012 = vmatprep.subr.mxu0 0.0
    %v1013 = vand.u32 %v75, 4294901760
    %v1014 = vsub.f32 %v75, %v1013
    %1015 = vmatpush1.msra.mxu0 %v1014
    %1016 = vmatprep.subr.mxu0 0.0
    %v1017 = vand.u32 %v76, 4294901760
    %v1018 = vsub.f32 %v76, %v1017
    %1019 = vmatpush1.msra.mxu0 %v1018
    %1020 = vmatprep.subr.mxu0 0.0
    %v1021 = vand.u32 %v77, 4294901760
    %v1022 = vsub.f32 %v77, %v1021
    %1023 = vmatpush1.msra.mxu0 %v1022
    %1024 = vmatprep.subr.mxu0 0.0
    %v1025 = vand.u32 %v78, 4294901760
    %v1026 = vsub.f32 %v78, %v1025
    %1027 = vmatpush1.msra.mxu0 %v1026
    %1028 = vmatprep.subr.mxu0 0.0
    %v1029 = vand.u32 %v79, 4294901760
    %v1030 = vsub.f32 %v79, %v1029
    %1031 = vmatpush1.msra.mxu0 %v1030
    %1032 = vmatprep.subr.mxu0 0.0
    %1033 = vmatpush1.msra.mxu0 0.0
    %1034 = vmatprep.subr.mxu0 0.0
    %1035 = vmatpush1.msra.mxu0 0.0
    %1036 = vmatprep.subr.mxu0 0.0
    %1037 = vmatpush1.msra.mxu0 0.0
    %1038 = vmatprep.subr.mxu0 0.0
    %1039 = vmatpush1.msra.mxu0 0.0
    %1040 = vmatprep.subr.mxu0 0.0
    %1041 = vmatpush1.msra.mxu0 0.0
    %1042 = vmatprep.subr.mxu0 0.0
    %1043 = vmatpush1.msra.mxu0 0.0
    %1044 = vmatprep.subr.mxu0 0.0
    %1045 = vmatpush1.msra.mxu0 0.0
    %1046 = vmatprep.subr.mxu0 0.0
    %1047 = vmatpush1.msra.mxu0 0.0
    %1048 = vmatprep.subr.mxu0 0.0
    %1049 = vmatpush1.msra.mxu0 0.0
    %1050 = vmatprep.subr.mxu0 0.0
    %1051 = vmatpush1.msra.mxu0 0.0
    %1052 = vmatprep.subr.mxu0 0.0
    %1053 = vmatpush1.msra.mxu0 0.0
    %1054 = vmatprep.subr.mxu0 0.0
    %1055 = vmatpush1.msra.mxu0 0.0
    %1056 = vmatprep.subr.mxu0 0.0
    %1057 = vmatpush1.msra.mxu0 0.0
    %1058 = vmatprep.subr.mxu0 0.0
    %1059 = vmatpush1.msra.mxu0 0.0
    %1060 = vmatprep.subr.mxu0 0.0
    %1061 = vmatpush1.msra.mxu0 0.0
    %1062 = vmatprep.subr.mxu0 0.0
    %1063 = vmatpush1.msra.mxu0 0.0
    %1064 = vmatprep.mubr.f32.mxu0 0.0
    %v1065 = vand.u32 %v723, 4294901760
    %v1066 = vsub.f32 %v723, %v1065
    %1067 = vmatmul.mubr.f32.gmra.mrb[0].mxu0 %v1066
    %v1068 = vpop.f32.mrb[0].mxu0
    %v1069 = vadd.f32 %v965, %v1068
    %v1070 = vpop.f32.mrb[0].mxu0
    %1071 = vdwg.mxu0
    %1072 = vmatprep.subr.mxu0 0.0
    %v1073 = vand.u32 %v64, 4294901760
    %1074 = vmatpush1.msra.mxu0 %v1073
    %1075 = vmatprep.subr.mxu0 0.0
    %v1076 = vand.u32 %v65, 4294901760
    %1077 = vmatpush1.msra.mxu0 %v1076
    %1078 = vmatprep.subr.mxu0 0.0
    %v1079 = vand.u32 %v66, 4294901760
    %1080 = vmatpush1.msra.mxu0 %v1079
    %1081 = vmatprep.subr.mxu0 0.0
    %v1082 = vand.u32 %v67, 4294901760
    %1083 = vmatpush1.msra.mxu0 %v1082
    %1084 = vmatprep.subr.mxu0 0.0
    %v1085 = vand.u32 %v68, 4294901760
    %1086 = vmatpush1.msra.mxu0 %v1085
    %1087 = vmatprep.subr.mxu0 0.0
    %v1088 = vand.u32 %v69, 4294901760
    %1089 = vmatpush1.msra.mxu0 %v1088
    %1090 = vmatprep.subr.mxu0 0.0
    %v1091 = vand.u32 %v70, 4294901760
    %1092 = vmatpush1.msra.mxu0 %v1091
    %1093 = vmatprep.subr.mxu0 0.0
    %v1094 = vand.u32 %v71, 4294901760
    %1095 = vmatpush1.msra.mxu0 %v1094
    %1096 = vmatprep.subr.mxu0 0.0
    %v1097 = vand.u32 %v72, 4294901760
    %1098 = vmatpush1.msra.mxu0 %v1097
    %1099 = vmatprep.subr.mxu0 0.0
    %v1100 = vand.u32 %v73, 4294901760
    %1101 = vmatpush1.msra.mxu0 %v1100
    %1102 = vmatprep.subr.mxu0 0.0
    %v1103 = vand.u32 %v74, 4294901760
    %1104 = vmatpush1.msra.mxu0 %v1103
    %1105 = vmatprep.subr.mxu0 0.0
    %v1106 = vand.u32 %v75, 4294901760
    %1107 = vmatpush1.msra.mxu0 %v1106
    %1108 = vmatprep.subr.mxu0 0.0
    %v1109 = vand.u32 %v76, 4294901760
    %1110 = vmatpush1.msra.mxu0 %v1109
    %1111 = vmatprep.subr.mxu0 0.0
    %v1112 = vand.u32 %v77, 4294901760
    %1113 = vmatpush1.msra.mxu0 %v1112
    %1114 = vmatprep.subr.mxu0 0.0
    %v1115 = vand.u32 %v78, 4294901760
    %1116 = vmatpush1.msra.mxu0 %v1115
    %1117 = vmatprep.subr.mxu0 0.0
    %v1118 = vand.u32 %v79, 4294901760
    %1119 = vmatpush1.msra.mxu0 %v1118
    %1120 = vmatprep.subr.mxu0 0.0
    %1121 = vmatpush1.msra.mxu0 0.0
    %1122 = vmatprep.subr.mxu0 0.0
    %1123 = vmatpush1.msra.mxu0 0.0
    %1124 = vmatprep.subr.mxu0 0.0
    %1125 = vmatpush1.msra.mxu0 0.0
    %1126 = vmatprep.subr.mxu0 0.0
    %1127 = vmatpush1.msra.mxu0 0.0
    %1128 = vmatprep.subr.mxu0 0.0
    %1129 = vmatpush1.msra.mxu0 0.0
    %1130 = vmatprep.subr.mxu0 0.0
    %1131 = vmatpush1.msra.mxu0 0.0
    %1132 = vmatprep.subr.mxu0 0.0
    %1133 = vmatpush1.msra.mxu0 0.0
    %1134 = vmatprep.subr.mxu0 0.0
    %1135 = vmatpush1.msra.mxu0 0.0
    %1136 = vmatprep.subr.mxu0 0.0
    %1137 = vmatpush1.msra.mxu0 0.0
    %1138 = vmatprep.subr.mxu0 0.0
    %1139 = vmatpush1.msra.mxu0 0.0
    %1140 = vmatprep.subr.mxu0 0.0
    %1141 = vmatpush1.msra.mxu0 0.0
    %1142 = vmatprep.subr.mxu0 0.0
    %1143 = vmatpush1.msra.mxu0 0.0
    %1144 = vmatprep.subr.mxu0 0.0
    %1145 = vmatpush1.msra.mxu0 0.0
    %1146 = vmatprep.subr.mxu0 0.0
    %1147 = vmatpush1.msra.mxu0 0.0
    %1148 = vmatprep.subr.mxu0 0.0
    %1149 = vmatpush1.msra.mxu0 0.0
    %1150 = vmatprep.subr.mxu0 0.0
    %1151 = vmatpush1.msra.mxu0 0.0
    %1152 = vmatprep.mubr.f32.mxu0 0.0
    %v1153 = vand.u32 %v723, 4294901760
    %v1154 = vsub.f32 %v723, %v1153
    %v1155 = vand.u32 %v1154, 4294901760
    %1156 = vmatmul.mubr.f32.gmra.mrb[0].mxu0 %v1155
    %v1157 = vpop.f32.mrb[0].mxu0
    %v1158 = vadd.f32 %v1069, %v1157
    %v1159 = vpop.f32.mrb[0].mxu0
    %1160 = vdwg.mxu0
    %1161 = vmatprep.subr.mxu0 0.0
    %v1162 = vand.u32 %v64, 4294901760
    %v1163 = vsub.f32 %v64, %v1162
    %v1164 = vand.u32 %v1163, 4294901760
    %1165 = vmatpush1.msra.mxu0 %v1164
    %1166 = vmatprep.subr.mxu0 0.0
    %v1167 = vand.u32 %v65, 4294901760
    %v1168 = vsub.f32 %v65, %v1167
    %v1169 = vand.u32 %v1168, 4294901760
    %1170 = vmatpush1.msra.mxu0 %v1169
    %1171 = vmatprep.subr.mxu0 0.0
    %v1172 = vand.u32 %v66, 4294901760
    %v1173 = vsub.f32 %v66, %v1172
    %v1174 = vand.u32 %v1173, 4294901760
    %1175 = vmatpush1.msra.mxu0 %v1174
    %1176 = vmatprep.subr.mxu0 0.0
    %v1177 = vand.u32 %v67, 4294901760
    %v1178 = vsub.f32 %v67, %v1177
    %v1179 = vand.u32 %v1178, 4294901760
    %1180 = vmatpush1.msra.mxu0 %v1179
    %1181 = vmatprep.subr.mxu0 0.0
    %v1182 = vand.u32 %v68, 4294901760
    %v1183 = vsub.f32 %v68, %v1182
    %v1184 = vand.u32 %v1183, 4294901760
    %1185 = vmatpush1.msra.mxu0 %v1184
    %1186 = vmatprep.subr.mxu0 0.0
    %v1187 = vand.u32 %v69, 4294901760
    %v1188 = vsub.f32 %v69, %v1187
    %v1189 = vand.u32 %v1188, 4294901760
    %1190 = vmatpush1.msra.mxu0 %v1189
    %1191 = vmatprep.subr.mxu0 0.0
    %v1192 = vand.u32 %v70, 4294901760
    %v1193 = vsub.f32 %v70, %v1192
    %v1194 = vand.u32 %v1193, 4294901760
    %1195 = vmatpush1.msra.mxu0 %v1194
    %1196 = vmatprep.subr.mxu0 0.0
    %v1197 = vand.u32 %v71, 4294901760
    %v1198 = vsub.f32 %v71, %v1197
    %v1199 = vand.u32 %v1198, 4294901760
    %1200 = vmatpush1.msra.mxu0 %v1199
    %1201 = vmatprep.subr.mxu0 0.0
    %v1202 = vand.u32 %v72, 4294901760
    %v1203 = vsub.f32 %v72, %v1202
    %v1204 = vand.u32 %v1203, 4294901760
    %1205 = vmatpush1.msra.mxu0 %v1204
    %1206 = vmatprep.subr.mxu0 0.0
    %v1207 = vand.u32 %v73, 4294901760
    %v1208 = vsub.f32 %v73, %v1207
    %v1209 = vand.u32 %v1208, 4294901760
    %1210 = vmatpush1.msra.mxu0 %v1209
    %1211 = vmatprep.subr.mxu0 0.0
    %v1212 = vand.u32 %v74, 4294901760
    %v1213 = vsub.f32 %v74, %v1212
    %v1214 = vand.u32 %v1213, 4294901760
    %1215 = vmatpush1.msra.mxu0 %v1214
    %1216 = vmatprep.subr.mxu0 0.0
    %v1217 = vand.u32 %v75, 4294901760
    %v1218 = vsub.f32 %v75, %v1217
    %v1219 = vand.u32 %v1218, 4294901760
    %1220 = vmatpush1.msra.mxu0 %v1219
    %1221 = vmatprep.subr.mxu0 0.0
    %v1222 = vand.u32 %v76, 4294901760
    %v1223 = vsub.f32 %v76, %v1222
    %v1224 = vand.u32 %v1223, 4294901760
    %1225 = vmatpush1.msra.mxu0 %v1224
    %1226 = vmatprep.subr.mxu0 0.0
    %v1227 = vand.u32 %v77, 4294901760
    %v1228 = vsub.f32 %v77, %v1227
    %v1229 = vand.u32 %v1228, 4294901760
    %1230 = vmatpush1.msra.mxu0 %v1229
    %1231 = vmatprep.subr.mxu0 0.0
    %v1232 = vand.u32 %v78, 4294901760
    %v1233 = vsub.f32 %v78, %v1232
    %v1234 = vand.u32 %v1233, 4294901760
    %1235 = vmatpush1.msra.mxu0 %v1234
    %1236 = vmatprep.subr.mxu0 0.0
    %v1237 = vand.u32 %v79, 4294901760
    %v1238 = vsub.f32 %v79, %v1237
    %v1239 = vand.u32 %v1238, 4294901760
    %1240 = vmatpush1.msra.mxu0 %v1239
    %1241 = vmatprep.subr.mxu0 0.0
    %1242 = vmatpush1.msra.mxu0 0.0
    %1243 = vmatprep.subr.mxu0 0.0
    %1244 = vmatpush1.msra.mxu0 0.0
    %1245 = vmatprep.subr.mxu0 0.0
    %1246 = vmatpush1.msra.mxu0 0.0
    %1247 = vmatprep.subr.mxu0 0.0
    %1248 = vmatpush1.msra.mxu0 0.0
    %1249 = vmatprep.subr.mxu0 0.0
    %1250 = vmatpush1.msra.mxu0 0.0
    %1251 = vmatprep.subr.mxu0 0.0
    %1252 = vmatpush1.msra.mxu0 0.0
    %1253 = vmatprep.subr.mxu0 0.0
    %1254 = vmatpush1.msra.mxu0 0.0
    %1255 = vmatprep.subr.mxu0 0.0
    %1256 = vmatpush1.msra.mxu0 0.0
    %1257 = vmatprep.subr.mxu0 0.0
    %1258 = vmatpush1.msra.mxu0 0.0
    %1259 = vmatprep.subr.mxu0 0.0
    %1260 = vmatpush1.msra.mxu0 0.0
    %1261 = vmatprep.subr.mxu0 0.0
    %1262 = vmatpush1.msra.mxu0 0.0
    %1263 = vmatprep.subr.mxu0 0.0
    %1264 = vmatpush1.msra.mxu0 0.0
    %1265 = vmatprep.subr.mxu0 0.0
    %1266 = vmatpush1.msra.mxu0 0.0
    %1267 = vmatprep.subr.mxu0 0.0
    %1268 = vmatpush1.msra.mxu0 0.0
    %1269 = vmatprep.subr.mxu0 0.0
    %1270 = vmatpush1.msra.mxu0 0.0
    %1271 = vmatprep.subr.mxu0 0.0
    %1272 = vmatpush1.msra.mxu0 0.0
    %1273 = vmatprep.mubr.f32.mxu0 0.0
    %v1274 = vand.u32 %v723, 4294901760
    %1275 = vmatmul.mubr.f32.gmra.mrb[0].mxu0 %v1274
    %v1276 = vpop.f32.mrb[0].mxu0
    %v1277 = vadd.f32 %v1158, %v1276
    %v1278 = vpop.f32.mrb[0].mxu0
    %1279 = vdwg.mxu0
    %1280 = vmatprep.subr.mxu0 0.0
    %v1281 = vand.u32 %v64, 4294901760
    %1282 = vmatpush1.msra.mxu0 %v1281
    %1283 = vmatprep.subr.mxu0 0.0
    %v1284 = vand.u32 %v65, 4294901760
    %1285 = vmatpush1.msra.mxu0 %v1284
    %1286 = vmatprep.subr.mxu0 0.0
    %v1287 = vand.u32 %v66, 4294901760
    %1288 = vmatpush1.msra.mxu0 %v1287
    %1289 = vmatprep.subr.mxu0 0.0
    %v1290 = vand.u32 %v67, 4294901760
    %1291 = vmatpush1.msra.mxu0 %v1290
    %1292 = vmatprep.subr.mxu0 0.0
    %v1293 = vand.u32 %v68, 4294901760
    %1294 = vmatpush1.msra.mxu0 %v1293
    %1295 = vmatprep.subr.mxu0 0.0
    %v1296 = vand.u32 %v69, 4294901760
    %1297 = vmatpush1.msra.mxu0 %v1296
    %1298 = vmatprep.subr.mxu0 0.0
    %v1299 = vand.u32 %v70, 4294901760
    %1300 = vmatpush1.msra.mxu0 %v1299
    %1301 = vmatprep.subr.mxu0 0.0
    %v1302 = vand.u32 %v71, 4294901760
    %1303 = vmatpush1.msra.mxu0 %v1302
    %1304 = vmatprep.subr.mxu0 0.0
    %v1305 = vand.u32 %v72, 4294901760
    %1306 = vmatpush1.msra.mxu0 %v1305
    %1307 = vmatprep.subr.mxu0 0.0
    %v1308 = vand.u32 %v73, 4294901760
    %1309 = vmatpush1.msra.mxu0 %v1308
    %1310 = vmatprep.subr.mxu0 0.0
    %v1311 = vand.u32 %v74, 4294901760
    %1312 = vmatpush1.msra.mxu0 %v1311
    %1313 = vmatprep.subr.mxu0 0.0
    %v1314 = vand.u32 %v75, 4294901760
    %1315 = vmatpush1.msra.mxu0 %v1314
    %1316 = vmatprep.subr.mxu0 0.0
    %v1317 = vand.u32 %v76, 4294901760
    %1318 = vmatpush1.msra.mxu0 %v1317
    %1319 = vmatprep.subr.mxu0 0.0
    %v1320 = vand.u32 %v77, 4294901760
    %1321 = vmatpush1.msra.mxu0 %v1320
    %1322 = vmatprep.subr.mxu0 0.0
    %v1323 = vand.u32 %v78, 4294901760
    %1324 = vmatpush1.msra.mxu0 %v1323
    %1325 = vmatprep.subr.mxu0 0.0
    %v1326 = vand.u32 %v79, 4294901760
    %1327 = vmatpush1.msra.mxu0 %v1326
    %1328 = vmatprep.subr.mxu0 0.0
    %1329 = vmatpush1.msra.mxu0 0.0
    %1330 = vmatprep.subr.mxu0 0.0
    %1331 = vmatpush1.msra.mxu0 0.0
    %1332 = vmatprep.subr.mxu0 0.0
    %1333 = vmatpush1.msra.mxu0 0.0
    %1334 = vmatprep.subr.mxu0 0.0
    %1335 = vmatpush1.msra.mxu0 0.0
    %1336 = vmatprep.subr.mxu0 0.0
    %1337 = vmatpush1.msra.mxu0 0.0
    %1338 = vmatprep.subr.mxu0 0.0
    %1339 = vmatpush1.msra.mxu0 0.0
    %1340 = vmatprep.subr.mxu0 0.0
    %1341 = vmatpush1.msra.mxu0 0.0
    %1342 = vmatprep.subr.mxu0 0.0
    %1343 = vmatpush1.msra.mxu0 0.0
    %1344 = vmatprep.subr.mxu0 0.0
    %1345 = vmatpush1.msra.mxu0 0.0
    %1346 = vmatprep.subr.mxu0 0.0
    %1347 = vmatpush1.msra.mxu0 0.0
    %1348 = vmatprep.subr.mxu0 0.0
    %1349 = vmatpush1.msra.mxu0 0.0
    %1350 = vmatprep.subr.mxu0 0.0
    %1351 = vmatpush1.msra.mxu0 0.0
    %1352 = vmatprep.subr.mxu0 0.0
    %1353 = vmatpush1.msra.mxu0 0.0
    %1354 = vmatprep.subr.mxu0 0.0
    %1355 = vmatpush1.msra.mxu0 0.0
    %1356 = vmatprep.subr.mxu0 0.0
    %1357 = vmatpush1.msra.mxu0 0.0
    %1358 = vmatprep.subr.mxu0 0.0
    %1359 = vmatpush1.msra.mxu0 0.0
    %1360 = vmatprep.mubr.f32.mxu0 0.0
    %v1361 = vand.u32 %v723, 4294901760
    %1362 = vmatmul.mubr.f32.gmra.mrb[0].mxu0 %v1361
    %v1363 = vpop.f32.mrb[0].mxu0
    %v1364 = vadd.f32 %v1277, %v1363
    %v1365 = vpop.f32.mrb[0].mxu0
    %1366 = vdwg.mxu0
    %v1367 = vtanh.pop %v1364
    %s1368 = scalar_lea.vmem [#allocation3], 16
    %v1369 = vld [vmem:[%s1368] sm:$0xff]
    %1370 = vmatprep.subr.mxu0 0.0
    %v1371 = vand.u32 %v64, 4294901760
    %1372 = vmatpush1.msra.mxu0 %v1371
    %1373 = vmatprep.subr.mxu0 0.0
    %v1374 = vand.u32 %v65, 4294901760
    %1375 = vmatpush1.msra.mxu0 %v1374
    %1376 = vmatprep.subr.mxu0 0.0
    %v1377 = vand.u32 %v66, 4294901760
    %1378 = vmatpush1.msra.mxu0 %v1377
    %1379 = vmatprep.subr.mxu0 0.0
    %v1380 = vand.u32 %v67, 4294901760
    %1381 = vmatpush1.msra.mxu0 %v1380
    %1382 = vmatprep.subr.mxu0 0.0
    %v1383 = vand.u32 %v68, 4294901760
    %1384 = vmatpush1.msra.mxu0 %v1383
    %1385 = vmatprep.subr.mxu0 0.0
    %v1386 = vand.u32 %v69, 4294901760
    %1387 = vmatpush1.msra.mxu0 %v1386
    %1388 = vmatprep.subr.mxu0 0.0
    %v1389 = vand.u32 %v70, 4294901760
    %1390 = vmatpush1.msra.mxu0 %v1389
    %1391 = vmatprep.subr.mxu0 0.0
    %v1392 = vand.u32 %v71, 4294901760
    %1393 = vmatpush1.msra.mxu0 %v1392
    %1394 = vmatprep.subr.mxu0 0.0
    %v1395 = vand.u32 %v72, 4294901760
    %1396 = vmatpush1.msra.mxu0 %v1395
    %1397 = vmatprep.subr.mxu0 0.0
    %v1398 = vand.u32 %v73, 4294901760
    %1399 = vmatpush1.msra.mxu0 %v1398
    %1400 = vmatprep.subr.mxu0 0.0
    %v1401 = vand.u32 %v74, 4294901760
    %1402 = vmatpush1.msra.mxu0 %v1401
    %1403 = vmatprep.subr.mxu0 0.0
    %v1404 = vand.u32 %v75, 4294901760
    %1405 = vmatpush1.msra.mxu0 %v1404
    %1406 = vmatprep.subr.mxu0 0.0
    %v1407 = vand.u32 %v76, 4294901760
    %1408 = vmatpush1.msra.mxu0 %v1407
    %1409 = vmatprep.subr.mxu0 0.0
    %v1410 = vand.u32 %v77, 4294901760
    %1411 = vmatpush1.msra.mxu0 %v1410
    %1412 = vmatprep.subr.mxu0 0.0
    %v1413 = vand.u32 %v78, 4294901760
    %1414 = vmatpush1.msra.mxu0 %v1413
    %1415 = vmatprep.subr.mxu0 0.0
    %v1416 = vand.u32 %v79, 4294901760
    %1417 = vmatpush1.msra.mxu0 %v1416
    %1418 = vmatprep.subr.mxu0 0.0
    %1419 = vmatpush1.msra.mxu0 0.0
    %1420 = vmatprep.subr.mxu0 0.0
    %1421 = vmatpush1.msra.mxu0 0.0
    %1422 = vmatprep.subr.mxu0 0.0
    %1423 = vmatpush1.msra.mxu0 0.0
    %1424 = vmatprep.subr.mxu0 0.0
    %1425 = vmatpush1.msra.mxu0 0.0
    %1426 = vmatprep.subr.mxu0 0.0
    %1427 = vmatpush1.msra.mxu0 0.0
    %1428 = vmatprep.subr.mxu0 0.0
    %1429 = vmatpush1.msra.mxu0 0.0
    %1430 = vmatprep.subr.mxu0 0.0
    %1431 = vmatpush1.msra.mxu0 0.0
    %1432 = vmatprep.subr.mxu0 0.0
    %1433 = vmatpush1.msra.mxu0 0.0
    %1434 = vmatprep.subr.mxu0 0.0
    %1435 = vmatpush1.msra.mxu0 0.0
    %1436 = vmatprep.subr.mxu0 0.0
    %1437 = vmatpush1.msra.mxu0 0.0
    %1438 = vmatprep.subr.mxu0 0.0
    %1439 = vmatpush1.msra.mxu0 0.0
    %1440 = vmatprep.subr.mxu0 0.0
    %1441 = vmatpush1.msra.mxu0 0.0
    %1442 = vmatprep.subr.mxu0 0.0
    %1443 = vmatpush1.msra.mxu0 0.0
    %1444 = vmatprep.subr.mxu0 0.0
    %1445 = vmatpush1.msra.mxu0 0.0
    %1446 = vmatprep.subr.mxu0 0.0
    %1447 = vmatpush1.msra.mxu0 0.0
    %1448 = vmatprep.subr.mxu0 0.0
    %1449 = vmatpush1.msra.mxu0 0.0
    %1450 = vmatprep.mubr.f32.mxu0 0.0
    %v1451 = vand.u32 %v1367, 4294901760
    %v1452 = vsub.f32 %v1367, %v1451
    %v1453 = vand.u32 %v1452, 4294901760
    %v1454 = vsub.f32 %v1452, %v1453
    %v1455 = vand.u32 %v1454, 4294901760
    %1456 = vmatmul.mubr.f32.gmra.mrb[0].mxu0 %v1455
    %v1457 = vpop.f32.mrb[0].mxu0
    %v1458 = vadd.f32 %v1369, %v1457
    %v1459 = vpop.f32.mrb[0].mxu0
    %1460 = vdwg.mxu0
    %1461 = vmatprep.subr.mxu0 0.0
    %v1462 = vand.u32 %v64, 4294901760
    %v1463 = vsub.f32 %v64, %v1462
    %v1464 = vand.u32 %v1463, 4294901760
    %v1465 = vsub.f32 %v1463, %v1464
    %v1466 = vand.u32 %v1465, 4294901760
    %1467 = vmatpush1.msra.mxu0 %v1466
    %1468 = vmatprep.subr.mxu0 0.0
    %v1469 = vand.u32 %v65, 4294901760
    %v1470 = vsub.f32 %v65, %v1469
    %v1471 = vand.u32 %v1470, 4294901760
    %v1472 = vsub.f32 %v1470, %v1471
    %v1473 = vand.u32 %v1472, 4294901760
    %1474 = vmatpush1.msra.mxu0 %v1473
    %1475 = vmatprep.subr.mxu0 0.0
    %v1476 = vand.u32 %v66, 4294901760
    %v1477 = vsub.f32 %v66, %v1476
    %v1478 = vand.u32 %v1477, 4294901760
    %v1479 = vsub.f32 %v1477, %v1478
    %v1480 = vand.u32 %v1479, 4294901760
    %1481 = vmatpush1.msra.mxu0 %v1480
    %1482 = vmatprep.subr.mxu0 0.0
    %v1483 = vand.u32 %v67, 4294901760
    %v1484 = vsub.f32 %v67, %v1483
    %v1485 = vand.u32 %v1484, 4294901760
    %v1486 = vsub.f32 %v1484, %v1485
    %v1487 = vand.u32 %v1486, 4294901760
    %1488 = vmatpush1.msra.mxu0 %v1487
    %1489 = vmatprep.subr.mxu0 0.0
    %v1490 = vand.u32 %v68, 4294901760
    %v1491 = vsub.f32 %v68, %v1490
    %v1492 = vand.u32 %v1491, 4294901760
    %v1493 = vsub.f32 %v1491, %v1492
    %v1494 = vand.u32 %v1493, 4294901760
    %1495 = vmatpush1.msra.mxu0 %v1494
    %1496 = vmatprep.subr.mxu0 0.0
    %v1497 = vand.u32 %v69, 4294901760
    %v1498 = vsub.f32 %v69, %v1497
    %v1499 = vand.u32 %v1498, 4294901760
    %v1500 = vsub.f32 %v1498, %v1499
    %v1501 = vand.u32 %v1500, 4294901760
    %1502 = vmatpush1.msra.mxu0 %v1501
    %1503 = vmatprep.subr.mxu0 0.0
    %v1504 = vand.u32 %v70, 4294901760
    %v1505 = vsub.f32 %v70, %v1504
    %v1506 = vand.u32 %v1505, 4294901760
    %v1507 = vsub.f32 %v1505, %v1506
    %v1508 = vand.u32 %v1507, 4294901760
    %1509 = vmatpush1.msra.mxu0 %v1508
    %1510 = vmatprep.subr.mxu0 0.0
    %v1511 = vand.u32 %v71, 4294901760
    %v1512 = vsub.f32 %v71, %v1511
    %v1513 = vand.u32 %v1512, 4294901760
    %v1514 = vsub.f32 %v1512, %v1513
    %v1515 = vand.u32 %v1514, 4294901760
    %1516 = vmatpush1.msra.mxu0 %v1515
    %1517 = vmatprep.subr.mxu0 0.0
    %v1518 = vand.u32 %v72, 4294901760
    %v1519 = vsub.f32 %v72, %v1518
    %v1520 = vand.u32 %v1519, 4294901760
    %v1521 = vsub.f32 %v1519, %v1520
    %v1522 = vand.u32 %v1521, 4294901760
    %1523 = vmatpush1.msra.mxu0 %v1522
    %1524 = vmatprep.subr.mxu0 0.0
    %v1525 = vand.u32 %v73, 4294901760
    %v1526 = vsub.f32 %v73, %v1525
    %v1527 = vand.u32 %v1526, 4294901760
    %v1528 = vsub.f32 %v1526, %v1527
    %v1529 = vand.u32 %v1528, 4294901760
    %1530 = vmatpush1.msra.mxu0 %v1529
    %1531 = vmatprep.subr.mxu0 0.0
    %v1532 = vand.u32 %v74, 4294901760
    %v1533 = vsub.f32 %v74, %v1532
    %v1534 = vand.u32 %v1533, 4294901760
    %v1535 = vsub.f32 %v1533, %v1534
    %v1536 = vand.u32 %v1535, 4294901760
    %1537 = vmatpush1.msra.mxu0 %v1536
    %1538 = vmatprep.subr.mxu0 0.0
    %v1539 = vand.u32 %v75, 4294901760
    %v1540 = vsub.f32 %v75, %v1539
    %v1541 = vand.u32 %v1540, 4294901760
    %v1542 = vsub.f32 %v1540, %v1541
    %v1543 = vand.u32 %v1542, 4294901760
    %1544 = vmatpush1.msra.mxu0 %v1543
    %1545 = vmatprep.subr.mxu0 0.0
    %v1546 = vand.u32 %v76, 4294901760
    %v1547 = vsub.f32 %v76, %v1546
    %v1548 = vand.u32 %v1547, 4294901760
    %v1549 = vsub.f32 %v1547, %v1548
    %v1550 = vand.u32 %v1549, 4294901760
    %1551 = vmatpush1.msra.mxu0 %v1550
    %1552 = vmatprep.subr.mxu0 0.0
    %v1553 = vand.u32 %v77, 4294901760
    %v1554 = vsub.f32 %v77, %v1553
    %v1555 = vand.u32 %v1554, 4294901760
    %v1556 = vsub.f32 %v1554, %v1555
    %v1557 = vand.u32 %v1556, 4294901760
    %1558 = vmatpush1.msra.mxu0 %v1557
    %1559 = vmatprep.subr.mxu0 0.0
    %v1560 = vand.u32 %v78, 4294901760
    %v1561 = vsub.f32 %v78, %v1560
    %v1562 = vand.u32 %v1561, 4294901760
    %v1563 = vsub.f32 %v1561, %v1562
    %v1564 = vand.u32 %v1563, 4294901760
    %1565 = vmatpush1.msra.mxu0 %v1564
    %1566 = vmatprep.subr.mxu0 0.0
    %v1567 = vand.u32 %v79, 4294901760
    %v1568 = vsub.f32 %v79, %v1567
    %v1569 = vand.u32 %v1568, 4294901760
    %v1570 = vsub.f32 %v1568, %v1569
    %v1571 = vand.u32 %v1570, 4294901760
    %1572 = vmatpush1.msra.mxu0 %v1571
    %1573 = vmatprep.subr.mxu0 0.0
    %1574 = vmatpush1.msra.mxu0 0.0
    %1575 = vmatprep.subr.mxu0 0.0
    %1576 = vmatpush1.msra.mxu0 0.0
    %1577 = vmatprep.subr.mxu0 0.0
    %1578 = vmatpush1.msra.mxu0 0.0
    %1579 = vmatprep.subr.mxu0 0.0
    %1580 = vmatpush1.msra.mxu0 0.0
    %1581 = vmatprep.subr.mxu0 0.0
    %1582 = vmatpush1.msra.mxu0 0.0
    %1583 = vmatprep.subr.mxu0 0.0
    %1584 = vmatpush1.msra.mxu0 0.0
    %1585 = vmatprep.subr.mxu0 0.0
    %1586 = vmatpush1.msra.mxu0 0.0
    %1587 = vmatprep.subr.mxu0 0.0
    %1588 = vmatpush1.msra.mxu0 0.0
    %1589 = vmatprep.subr.mxu0 0.0
    %1590 = vmatpush1.msra.mxu0 0.0
    %1591 = vmatprep.subr.mxu0 0.0
    %1592 = vmatpush1.msra.mxu0 0.0
    %1593 = vmatprep.subr.mxu0 0.0
    %1594 = vmatpush1.msra.mxu0 0.0
    %1595 = vmatprep.subr.mxu0 0.0
    %1596 = vmatpush1.msra.mxu0 0.0
    %1597 = vmatprep.subr.mxu0 0.0
    %1598 = vmatpush1.msra.mxu0 0.0
    %1599 = vmatprep.subr.mxu0 0.0
    %1600 = vmatpush1.msra.mxu0 0.0
    %1601 = vmatprep.subr.mxu0 0.0
    %1602 = vmatpush1.msra.mxu0 0.0
    %1603 = vmatprep.subr.mxu0 0.0
    %1604 = vmatpush1.msra.mxu0 0.0
    %1605 = vmatprep.mubr.f32.mxu0 0.0
    %v1606 = vand.u32 %v1367, 4294901760
    %1607 = vmatmul.mubr.f32.gmra.mrb[0].mxu0 %v1606
    %v1608 = vpop.f32.mrb[0].mxu0
    %v1609 = vadd.f32 %v1458, %v1608
    %v1610 = vpop.f32.mrb[0].mxu0
    %1611 = vdwg.mxu0
    %1612 = vmatprep.subr.mxu0 0.0
    %v1613 = vand.u32 %v64, 4294901760
    %v1614 = vsub.f32 %v64, %v1613
    %1615 = vmatpush1.msra.mxu0 %v1614
    %1616 = vmatprep.subr.mxu0 0.0
    %v1617 = vand.u32 %v65, 4294901760
    %v1618 = vsub.f32 %v65, %v1617
    %1619 = vmatpush1.msra.mxu0 %v1618
    %1620 = vmatprep.subr.mxu0 0.0
    %v1621 = vand.u32 %v66, 4294901760
    %v1622 = vsub.f32 %v66, %v1621
    %1623 = vmatpush1.msra.mxu0 %v1622
    %1624 = vmatprep.subr.mxu0 0.0
    %v1625 = vand.u32 %v67, 4294901760
    %v1626 = vsub.f32 %v67, %v1625
    %1627 = vmatpush1.msra.mxu0 %v1626
    %1628 = vmatprep.subr.mxu0 0.0
    %v1629 = vand.u32 %v68, 4294901760
    %v1630 = vsub.f32 %v68, %v1629
    %1631 = vmatpush1.msra.mxu0 %v1630
    %1632 = vmatprep.subr.mxu0 0.0
    %v1633 = vand.u32 %v69, 4294901760
    %v1634 = vsub.f32 %v69, %v1633
    %1635 = vmatpush1.msra.mxu0 %v1634
    %1636 = vmatprep.subr.mxu0 0.0
    %v1637 = vand.u32 %v70, 4294901760
    %v1638 = vsub.f32 %v70, %v1637
    %1639 = vmatpush1.msra.mxu0 %v1638
    %1640 = vmatprep.subr.mxu0 0.0
    %v1641 = vand.u32 %v71, 4294901760
    %v1642 = vsub.f32 %v71, %v1641
    %1643 = vmatpush1.msra.mxu0 %v1642
    %1644 = vmatprep.subr.mxu0 0.0
    %v1645 = vand.u32 %v72, 4294901760
    %v1646 = vsub.f32 %v72, %v1645
    %1647 = vmatpush1.msra.mxu0 %v1646
    %1648 = vmatprep.subr.mxu0 0.0
    %v1649 = vand.u32 %v73, 4294901760
    %v1650 = vsub.f32 %v73, %v1649
    %1651 = vmatpush1.msra.mxu0 %v1650
    %1652 = vmatprep.subr.mxu0 0.0
    %v1653 = vand.u32 %v74, 4294901760
    %v1654 = vsub.f32 %v74, %v1653
    %1655 = vmatpush1.msra.mxu0 %v1654
    %1656 = vmatprep.subr.mxu0 0.0
    %v1657 = vand.u32 %v75, 4294901760
    %v1658 = vsub.f32 %v75, %v1657
    %1659 = vmatpush1.msra.mxu0 %v1658
    %1660 = vmatprep.subr.mxu0 0.0
    %v1661 = vand.u32 %v76, 4294901760
    %v1662 = vsub.f32 %v76, %v1661
    %1663 = vmatpush1.msra.mxu0 %v1662
    %1664 = vmatprep.subr.mxu0 0.0
    %v1665 = vand.u32 %v77, 4294901760
    %v1666 = vsub.f32 %v77, %v1665
    %1667 = vmatpush1.msra.mxu0 %v1666
    %1668 = vmatprep.subr.mxu0 0.0
    %v1669 = vand.u32 %v78, 4294901760
    %v1670 = vsub.f32 %v78, %v1669
    %1671 = vmatpush1.msra.mxu0 %v1670
    %1672 = vmatprep.subr.mxu0 0.0
    %v1673 = vand.u32 %v79, 4294901760
    %v1674 = vsub.f32 %v79, %v1673
    %1675 = vmatpush1.msra.mxu0 %v1674
    %1676 = vmatprep.subr.mxu0 0.0
    %1677 = vmatpush1.msra.mxu0 0.0
    %1678 = vmatprep.subr.mxu0 0.0
    %1679 = vmatpush1.msra.mxu0 0.0
    %1680 = vmatprep.subr.mxu0 0.0
    %1681 = vmatpush1.msra.mxu0 0.0
    %1682 = vmatprep.subr.mxu0 0.0
    %1683 = vmatpush1.msra.mxu0 0.0
    %1684 = vmatprep.subr.mxu0 0.0
    %1685 = vmatpush1.msra.mxu0 0.0
    %1686 = vmatprep.subr.mxu0 0.0
    %1687 = vmatpush1.msra.mxu0 0.0
    %1688 = vmatprep.subr.mxu0 0.0
    %1689 = vmatpush1.msra.mxu0 0.0
    %1690 = vmatprep.subr.mxu0 0.0
    %1691 = vmatpush1.msra.mxu0 0.0
    %1692 = vmatprep.subr.mxu0 0.0
    %1693 = vmatpush1.msra.mxu0 0.0
    %1694 = vmatprep.subr.mxu0 0.0
    %1695 = vmatpush1.msra.mxu0 0.0
    %1696 = vmatprep.subr.mxu0 0.0
    %1697 = vmatpush1.msra.mxu0 0.0
    %1698 = vmatprep.subr.mxu0 0.0
    %1699 = vmatpush1.msra.mxu0 0.0
    %1700 = vmatprep.subr.mxu0 0.0
    %1701 = vmatpush1.msra.mxu0 0.0
    %1702 = vmatprep.subr.mxu0 0.0
    %1703 = vmatpush1.msra.mxu0 0.0
    %1704 = vmatprep.subr.mxu0 0.0
    %1705 = vmatpush1.msra.mxu0 0.0
    %1706 = vmatprep.subr.mxu0 0.0
    %1707 = vmatpush1.msra.mxu0 0.0
    %1708 = vmatprep.mubr.f32.mxu0 0.0
    %v1709 = vand.u32 %v1367, 4294901760
    %v1710 = vsub.f32 %v1367, %v1709
    %1711 = vmatmul.mubr.f32.gmra.mrb[0].mxu0 %v1710
    %v1712 = vpop.f32.mrb[0].mxu0
    %v1713 = vadd.f32 %v1609, %v1712
    %v1714 = vpop.f32.mrb[0].mxu0
    %1715 = vdwg.mxu0
    %1716 = vmatprep.subr.mxu0 0.0
    %v1717 = vand.u32 %v64, 4294901760
    %1718 = vmatpush1.msra.mxu0 %v1717
    %1719 = vmatprep.subr.mxu0 0.0
    %v1720 = vand.u32 %v65, 4294901760
    %1721 = vmatpush1.msra.mxu0 %v1720
    %1722 = vmatprep.subr.mxu0 0.0
    %v1723 = vand.u32 %v66, 4294901760
    %1724 = vmatpush1.msra.mxu0 %v1723
    %1725 = vmatprep.subr.mxu0 0.0
    %v1726 = vand.u32 %v67, 4294901760
    %1727 = vmatpush1.msra.mxu0 %v1726
    %1728 = vmatprep.subr.mxu0 0.0
    %v1729 = vand.u32 %v68, 4294901760
    %1730 = vmatpush1.msra.mxu0 %v1729
    %1731 = vmatprep.subr.mxu0 0.0
    %v1732 = vand.u32 %v69, 4294901760
    %1733 = vmatpush1.msra.mxu0 %v1732
    %1734 = vmatprep.subr.mxu0 0.0
    %v1735 = vand.u32 %v70, 4294901760
    %1736 = vmatpush1.msra.mxu0 %v1735
    %1737 = vmatprep.subr.mxu0 0.0
    %v1738 = vand.u32 %v71, 4294901760
    %1739 = vmatpush1.msra.mxu0 %v1738
    %1740 = vmatprep.subr.mxu0 0.0
    %v1741 = vand.u32 %v72, 4294901760
    %1742 = vmatpush1.msra.mxu0 %v1741
    %1743 = vmatprep.subr.mxu0 0.0
    %v1744 = vand.u32 %v73, 4294901760
    %1745 = vmatpush1.msra.mxu0 %v1744
    %1746 = vmatprep.subr.mxu0 0.0
    %v1747 = vand.u32 %v74, 4294901760
    %1748 = vmatpush1.msra.mxu0 %v1747
    %1749 = vmatprep.subr.mxu0 0.0
    %v1750 = vand.u32 %v75, 4294901760
    %1751 = vmatpush1.msra.mxu0 %v1750
    %1752 = vmatprep.subr.mxu0 0.0
    %v1753 = vand.u32 %v76, 4294901760
    %1754 = vmatpush1.msra.mxu0 %v1753
    %1755 = vmatprep.subr.mxu0 0.0
    %v1756 = vand.u32 %v77, 4294901760
    %1757 = vmatpush1.msra.mxu0 %v1756
    %1758 = vmatprep.subr.mxu0 0.0
    %v1759 = vand.u32 %v78, 4294901760
    %1760 = vmatpush1.msra.mxu0 %v1759
    %1761 = vmatprep.subr.mxu0 0.0
    %v1762 = vand.u32 %v79, 4294901760
    %1763 = vmatpush1.msra.mxu0 %v1762
    %1764 = vmatprep.subr.mxu0 0.0
    %1765 = vmatpush1.msra.mxu0 0.0
    %1766 = vmatprep.subr.mxu0 0.0
    %1767 = vmatpush1.msra.mxu0 0.0
    %1768 = vmatprep.subr.mxu0 0.0
    %1769 = vmatpush1.msra.mxu0 0.0
    %1770 = vmatprep.subr.mxu0 0.0
    %1771 = vmatpush1.msra.mxu0 0.0
    %1772 = vmatprep.subr.mxu0 0.0
    %1773 = vmatpush1.msra.mxu0 0.0
    %1774 = vmatprep.subr.mxu0 0.0
    %1775 = vmatpush1.msra.mxu0 0.0
    %1776 = vmatprep.subr.mxu0 0.0
    %1777 = vmatpush1.msra.mxu0 0.0
    %1778 = vmatprep.subr.mxu0 0.0
    %1779 = vmatpush1.msra.mxu0 0.0
    %1780 = vmatprep.subr.mxu0 0.0
    %1781 = vmatpush1.msra.mxu0 0.0
    %1782 = vmatprep.subr.mxu0 0.0
    %1783 = vmatpush1.msra.mxu0 0.0
    %1784 = vmatprep.subr.mxu0 0.0
    %1785 = vmatpush1.msra.mxu0 0.0
    %1786 = vmatprep.subr.mxu0 0.0
    %1787 = vmatpush1.msra.mxu0 0.0
    %1788 = vmatprep.subr.mxu0 0.0
    %1789 = vmatpush1.msra.mxu0 0.0
    %1790 = vmatprep.subr.mxu0 0.0
    %1791 = vmatpush1.msra.mxu0 0.0
    %1792 = vmatprep.subr.mxu0 0.0
    %1793 = vmatpush1.msra.mxu0 0.0
    %1794 = vmatprep.subr.mxu0 0.0
    %1795 = vmatpush1.msra.mxu0 0.0
    %1796 = vmatprep.mubr.f32.mxu0 0.0
    %v1797 = vand.u32 %v1367, 4294901760
    %v1798 = vsub.f32 %v1367, %v1797
    %v1799 = vand.u32 %v1798, 4294901760
    %1800 = vmatmul.mubr.f32.gmra.mrb[0].mxu0 %v1799
    %v1801 = vpop.f32.mrb[0].mxu0
    %v1802 = vadd.f32 %v1713, %v1801
    %v1803 = vpop.f32.mrb[0].mxu0
    %1804 = vdwg.mxu0
    %1805 = vmatprep.subr.mxu0 0.0
    %v1806 = vand.u32 %v64, 4294901760
    %v1807 = vsub.f32 %v64, %v1806
    %v1808 = vand.u32 %v1807, 4294901760
    %1809 = vmatpush1.msra.mxu0 %v1808
    %1810 = vmatprep.subr.mxu0 0.0
    %v1811 = vand.u32 %v65, 4294901760
    %v1812 = vsub.f32 %v65, %v1811
    %v1813 = vand.u32 %v1812, 4294901760
    %1814 = vmatpush1.msra.mxu0 %v1813
    %1815 = vmatprep.subr.mxu0 0.0
    %v1816 = vand.u32 %v66, 4294901760
    %v1817 = vsub.f32 %v66, %v1816
    %v1818 = vand.u32 %v1817, 4294901760
    %1819 = vmatpush1.msra.mxu0 %v1818
    %1820 = vmatprep.subr.mxu0 0.0
    %v1821 = vand.u32 %v67, 4294901760
    %v1822 = vsub.f32 %v67, %v1821
    %v1823 = vand.u32 %v1822, 4294901760
    %1824 = vmatpush1.msra.mxu0 %v1823
    %1825 = vmatprep.subr.mxu0 0.0
    %v1826 = vand.u32 %v68, 4294901760
    %v1827 = vsub.f32 %v68, %v1826
    %v1828 = vand.u32 %v1827, 4294901760
    %1829 = vmatpush1.msra.mxu0 %v1828
    %1830 = vmatprep.subr.mxu0 0.0
    %v1831 = vand.u32 %v69, 4294901760
    %v1832 = vsub.f32 %v69, %v1831
    %v1833 = vand.u32 %v1832, 4294901760
    %1834 = vmatpush1.msra.mxu0 %v1833
    %1835 = vmatprep.subr.mxu0 0.0
    %v1836 = vand.u32 %v70, 4294901760
    %v1837 = vsub.f32 %v70, %v1836
    %v1838 = vand.u32 %v1837, 4294901760
    %1839 = vmatpush1.msra.mxu0 %v1838
    %1840 = vmatprep.subr.mxu0 0.0
    %v1841 = vand.u32 %v71, 4294901760
    %v1842 = vsub.f32 %v71, %v1841
    %v1843 = vand.u32 %v1842, 4294901760
    %1844 = vmatpush1.msra.mxu0 %v1843
    %1845 = vmatprep.subr.mxu0 0.0
    %v1846 = vand.u32 %v72, 4294901760
    %v1847 = vsub.f32 %v72, %v1846
    %v1848 = vand.u32 %v1847, 4294901760
    %1849 = vmatpush1.msra.mxu0 %v1848
    %1850 = vmatprep.subr.mxu0 0.0
    %v1851 = vand.u32 %v73, 4294901760
    %v1852 = vsub.f32 %v73, %v1851
    %v1853 = vand.u32 %v1852, 4294901760
    %1854 = vmatpush1.msra.mxu0 %v1853
    %1855 = vmatprep.subr.mxu0 0.0
    %v1856 = vand.u32 %v74, 4294901760
    %v1857 = vsub.f32 %v74, %v1856
    %v1858 = vand.u32 %v1857, 4294901760
    %1859 = vmatpush1.msra.mxu0 %v1858
    %1860 = vmatprep.subr.mxu0 0.0
    %v1861 = vand.u32 %v75, 4294901760
    %v1862 = vsub.f32 %v75, %v1861
    %v1863 = vand.u32 %v1862, 4294901760
    %1864 = vmatpush1.msra.mxu0 %v1863
    %1865 = vmatprep.subr.mxu0 0.0
    %v1866 = vand.u32 %v76, 4294901760
    %v1867 = vsub.f32 %v76, %v1866
    %v1868 = vand.u32 %v1867, 4294901760
    %1869 = vmatpush1.msra.mxu0 %v1868
    %1870 = vmatprep.subr.mxu0 0.0
    %v1871 = vand.u32 %v77, 4294901760
    %v1872 = vsub.f32 %v77, %v1871
    %v1873 = vand.u32 %v1872, 4294901760
    %1874 = vmatpush1.msra.mxu0 %v1873
    %1875 = vmatprep.subr.mxu0 0.0
    %v1876 = vand.u32 %v78, 4294901760
    %v1877 = vsub.f32 %v78, %v1876
    %v1878 = vand.u32 %v1877, 4294901760
    %1879 = vmatpush1.msra.mxu0 %v1878
    %1880 = vmatprep.subr.mxu0 0.0
    %v1881 = vand.u32 %v79, 4294901760
    %v1882 = vsub.f32 %v79, %v1881
    %v1883 = vand.u32 %v1882, 4294901760
    %1884 = vmatpush1.msra.mxu0 %v1883
    %1885 = vmatprep.subr.mxu0 0.0
    %1886 = vmatpush1.msra.mxu0 0.0
    %1887 = vmatprep.subr.mxu0 0.0
    %1888 = vmatpush1.msra.mxu0 0.0
    %1889 = vmatprep.subr.mxu0 0.0
    %1890 = vmatpush1.msra.mxu0 0.0
    %1891 = vmatprep.subr.mxu0 0.0
    %1892 = vmatpush1.msra.mxu0 0.0
    %1893 = vmatprep.subr.mxu0 0.0
    %1894 = vmatpush1.msra.mxu0 0.0
    %1895 = vmatprep.subr.mxu0 0.0
    %1896 = vmatpush1.msra.mxu0 0.0
    %1897 = vmatprep.subr.mxu0 0.0
    %1898 = vmatpush1.msra.mxu0 0.0
    %1899 = vmatprep.subr.mxu0 0.0
    %1900 = vmatpush1.msra.mxu0 0.0
    %1901 = vmatprep.subr.mxu0 0.0
    %1902 = vmatpush1.msra.mxu0 0.0
    %1903 = vmatprep.subr.mxu0 0.0
    %1904 = vmatpush1.msra.mxu0 0.0
    %1905 = vmatprep.subr.mxu0 0.0
    %1906 = vmatpush1.msra.mxu0 0.0
    %1907 = vmatprep.subr.mxu0 0.0
    %1908 = vmatpush1.msra.mxu0 0.0
    %1909 = vmatprep.subr.mxu0 0.0
    %1910 = vmatpush1.msra.mxu0 0.0
    %1911 = vmatprep.subr.mxu0 0.0
    %1912 = vmatpush1.msra.mxu0 0.0
    %1913 = vmatprep.subr.mxu0 0.0
    %1914 = vmatpush1.msra.mxu0 0.0
    %1915 = vmatprep.subr.mxu0 0.0
    %1916 = vmatpush1.msra.mxu0 0.0
    %1917 = vmatprep.mubr.f32.mxu0 0.0
    %v1918 = vand.u32 %v1367, 4294901760
    %1919 = vmatmul.mubr.f32.gmra.mrb[0].mxu0 %v1918
    %v1920 = vpop.f32.mrb[0].mxu0
    %v1921 = vadd.f32 %v1802, %v1920
    %v1922 = vpop.f32.mrb[0].mxu0
    %1923 = vdwg.mxu0
    %1924 = vmatprep.subr.mxu0 0.0
    %v1925 = vand.u32 %v64, 4294901760
    %1926 = vmatpush1.msra.mxu0 %v1925
    %1927 = vmatprep.subr.mxu0 0.0
    %v1928 = vand.u32 %v65, 4294901760
    %1929 = vmatpush1.msra.mxu0 %v1928
    %1930 = vmatprep.subr.mxu0 0.0
    %v1931 = vand.u32 %v66, 4294901760
    %1932 = vmatpush1.msra.mxu0 %v1931
    %1933 = vmatprep.subr.mxu0 0.0
    %v1934 = vand.u32 %v67, 4294901760
    %1935 = vmatpush1.msra.mxu0 %v1934
    %1936 = vmatprep.subr.mxu0 0.0
    %v1937 = vand.u32 %v68, 4294901760
    %1938 = vmatpush1.msra.mxu0 %v1937
    %1939 = vmatprep.subr.mxu0 0.0
    %v1940 = vand.u32 %v69, 4294901760
    %1941 = vmatpush1.msra.mxu0 %v1940
    %1942 = vmatprep.subr.mxu0 0.0
    %v1943 = vand.u32 %v70, 4294901760
    %1944 = vmatpush1.msra.mxu0 %v1943
    %1945 = vmatprep.subr.mxu0 0.0
    %v1946 = vand.u32 %v71, 4294901760
    %1947 = vmatpush1.msra.mxu0 %v1946
    %1948 = vmatprep.subr.mxu0 0.0
    %v1949 = vand.u32 %v72, 4294901760
    %1950 = vmatpush1.msra.mxu0 %v1949
    %1951 = vmatprep.subr.mxu0 0.0
    %v1952 = vand.u32 %v73, 4294901760
    %1953 = vmatpush1.msra.mxu0 %v1952
    %1954 = vmatprep.subr.mxu0 0.0
    %v1955 = vand.u32 %v74, 4294901760
    %1956 = vmatpush1.msra.mxu0 %v1955
    %1957 = vmatprep.subr.mxu0 0.0
    %v1958 = vand.u32 %v75, 4294901760
    %1959 = vmatpush1.msra.mxu0 %v1958
    %1960 = vmatprep.subr.mxu0 0.0
    %v1961 = vand.u32 %v76, 4294901760
    %1962 = vmatpush1.msra.mxu0 %v1961
    %1963 = vmatprep.subr.mxu0 0.0
    %v1964 = vand.u32 %v77, 4294901760
    %1965 = vmatpush1.msra.mxu0 %v1964
    %1966 = vmatprep.subr.mxu0 0.0
    %v1967 = vand.u32 %v78, 4294901760
    %1968 = vmatpush1.msra.mxu0 %v1967
    %1969 = vmatprep.subr.mxu0 0.0
    %v1970 = vand.u32 %v79, 4294901760
    %1971 = vmatpush1.msra.mxu0 %v1970
    %1972 = vmatprep.subr.mxu0 0.0
    %1973 = vmatpush1.msra.mxu0 0.0
    %1974 = vmatprep.subr.mxu0 0.0
    %1975 = vmatpush1.msra.mxu0 0.0
    %1976 = vmatprep.subr.mxu0 0.0
    %1977 = vmatpush1.msra.mxu0 0.0
    %1978 = vmatprep.subr.mxu0 0.0
    %1979 = vmatpush1.msra.mxu0 0.0
    %1980 = vmatprep.subr.mxu0 0.0
    %1981 = vmatpush1.msra.mxu0 0.0
    %1982 = vmatprep.subr.mxu0 0.0
    %1983 = vmatpush1.msra.mxu0 0.0
    %1984 = vmatprep.subr.mxu0 0.0
    %1985 = vmatpush1.msra.mxu0 0.0
    %1986 = vmatprep.subr.mxu0 0.0
    %1987 = vmatpush1.msra.mxu0 0.0
    %1988 = vmatprep.subr.mxu0 0.0
    %1989 = vmatpush1.msra.mxu0 0.0
    %1990 = vmatprep.subr.mxu0 0.0
    %1991 = vmatpush1.msra.mxu0 0.0
    %1992 = vmatprep.subr.mxu0 0.0
    %1993 = vmatpush1.msra.mxu0 0.0
    %1994 = vmatprep.subr.mxu0 0.0
    %1995 = vmatpush1.msra.mxu0 0.0
    %1996 = vmatprep.subr.mxu0 0.0
    %1997 = vmatpush1.msra.mxu0 0.0
    %1998 = vmatprep.subr.mxu0 0.0
    %1999 = vmatpush1.msra.mxu0 0.0
    %2000 = vmatprep.subr.mxu0 0.0
    %2001 = vmatpush1.msra.mxu0 0.0
    %2002 = vmatprep.subr.mxu0 0.0
    %2003 = vmatpush1.msra.mxu0 0.0
    %2004 = vmatprep.mubr.f32.mxu0 0.0
    %v2005 = vand.u32 %v1367, 4294901760
    %2006 = vmatmul.mubr.f32.gmra.mrb[0].mxu0 %v2005
    %v2007 = vpop.f32.mrb[0].mxu0
    %v2008 = vadd.f32 %v1921, %v2007
    %v2009 = vpop.f32.mrb[0].mxu0
    %2010 = vdwg.mxu0
    %v2011 = vtanh.pop %v2008
    %s2012 = scalar_lea.vmem [#allocation3], 24
    %v2013 = vld [vmem:[%s2012] sm:$0xff]
    %2014 = vmatprep.subr.mxu0 0.0
    %v2015 = vand.u32 %v64, 4294901760
    %2016 = vmatpush1.msra.mxu0 %v2015
    %2017 = vmatprep.subr.mxu0 0.0
    %v2018 = vand.u32 %v65, 4294901760
    %2019 = vmatpush1.msra.mxu0 %v2018
    %2020 = vmatprep.subr.mxu0 0.0
    %v2021 = vand.u32 %v66, 4294901760
    %2022 = vmatpush1.msra.mxu0 %v2021
    %2023 = vmatprep.subr.mxu0 0.0
    %v2024 = vand.u32 %v67, 4294901760
    %2025 = vmatpush1.msra.mxu0 %v2024
    %2026 = vmatprep.subr.mxu0 0.0
    %v2027 = vand.u32 %v68, 4294901760
    %2028 = vmatpush1.msra.mxu0 %v2027
    %2029 = vmatprep.subr.mxu0 0.0
    %v2030 = vand.u32 %v69, 4294901760
    %2031 = vmatpush1.msra.mxu0 %v2030
    %2032 = vmatprep.subr.mxu0 0.0
    %v2033 = vand.u32 %v70, 4294901760
    %2034 = vmatpush1.msra.mxu0 %v2033
    %2035 = vmatprep.subr.mxu0 0.0
    %v2036 = vand.u32 %v71, 4294901760
    %2037 = vmatpush1.msra.mxu0 %v2036
    %2038 = vmatprep.subr.mxu0 0.0
    %v2039 = vand.u32 %v72, 4294901760
    %2040 = vmatpush1.msra.mxu0 %v2039
    %2041 = vmatprep.subr.mxu0 0.0
    %v2042 = vand.u32 %v73, 4294901760
    %2043 = vmatpush1.msra.mxu0 %v2042
    %2044 = vmatprep.subr.mxu0 0.0
    %v2045 = vand.u32 %v74, 4294901760
    %2046 = vmatpush1.msra.mxu0 %v2045
    %2047 = vmatprep.subr.mxu0 0.0
    %v2048 = vand.u32 %v75, 4294901760
    %2049 = vmatpush1.msra.mxu0 %v2048
    %2050 = vmatprep.subr.mxu0 0.0
    %v2051 = vand.u32 %v76, 4294901760
    %2052 = vmatpush1.msra.mxu0 %v2051
    %2053 = vmatprep.subr.mxu0 0.0
    %v2054 = vand.u32 %v77, 4294901760
    %2055 = vmatpush1.msra.mxu0 %v2054
    %2056 = vmatprep.subr.mxu0 0.0
    %v2057 = vand.u32 %v78, 4294901760
    %2058 = vmatpush1.msra.mxu0 %v2057
    %2059 = vmatprep.subr.mxu0 0.0
    %v2060 = vand.u32 %v79, 4294901760
    %2061 = vmatpush1.msra.mxu0 %v2060
    %2062 = vmatprep.subr.mxu0 0.0
    %2063 = vmatpush1.msra.mxu0 0.0
    %2064 = vmatprep.subr.mxu0 0.0
    %2065 = vmatpush1.msra.mxu0 0.0
    %2066 = vmatprep.subr.mxu0 0.0
    %2067 = vmatpush1.msra.mxu0 0.0
    %2068 = vmatprep.subr.mxu0 0.0
    %2069 = vmatpush1.msra.mxu0 0.0
    %2070 = vmatprep.subr.mxu0 0.0
    %2071 = vmatpush1.msra.mxu0 0.0
    %2072 = vmatprep.subr.mxu0 0.0
    %2073 = vmatpush1.msra.mxu0 0.0
    %2074 = vmatprep.subr.mxu0 0.0
    %2075 = vmatpush1.msra.mxu0 0.0
    %2076 = vmatprep.subr.mxu0 0.0
    %2077 = vmatpush1.msra.mxu0 0.0
    %2078 = vmatprep.subr.mxu0 0.0
    %2079 = vmatpush1.msra.mxu0 0.0
    %2080 = vmatprep.subr.mxu0 0.0
    %2081 = vmatpush1.msra.mxu0 0.0
    %2082 = vmatprep.subr.mxu0 0.0
    %2083 = vmatpush1.msra.mxu0 0.0
    %2084 = vmatprep.subr.mxu0 0.0
    %2085 = vmatpush1.msra.mxu0 0.0
    %2086 = vmatprep.subr.mxu0 0.0
    %2087 = vmatpush1.msra.mxu0 0.0
    %2088 = vmatprep.subr.mxu0 0.0
    %2089 = vmatpush1.msra.mxu0 0.0
    %2090 = vmatprep.subr.mxu0 0.0
    %2091 = vmatpush1.msra.mxu0 0.0
    %2092 = vmatprep.subr.mxu0 0.0
    %2093 = vmatpush1.msra.mxu0 0.0
    %2094 = vmatprep.mubr.f32.mxu0 0.0
    %v2095 = vand.u32 %v2011, 4294901760
    %v2096 = vsub.f32 %v2011, %v2095
    %v2097 = vand.u32 %v2096, 4294901760
    %v2098 = vsub.f32 %v2096, %v2097
    %v2099 = vand.u32 %v2098, 4294901760
    %2100 = vmatmul.mubr.f32.gmra.mrb[0].mxu0 %v2099
    %v2101 = vpop.f32.mrb[0].mxu0
    %v2102 = vadd.f32 %v2013, %v2101
    %v2103 = vpop.f32.mrb[0].mxu0
    %2104 = vdwg.mxu0
    %2105 = vmatprep.subr.mxu0 0.0
    %v2106 = vand.u32 %v64, 4294901760
    %v2107 = vsub.f32 %v64, %v2106
    %v2108 = vand.u32 %v2107, 4294901760
    %v2109 = vsub.f32 %v2107, %v2108
    %v2110 = vand.u32 %v2109, 4294901760
    %2111 = vmatpush1.msra.mxu0 %v2110
    %2112 = vmatprep.subr.mxu0 0.0
    %v2113 = vand.u32 %v65, 4294901760
    %v2114 = vsub.f32 %v65, %v2113
    %v2115 = vand.u32 %v2114, 4294901760
    %v2116 = vsub.f32 %v2114, %v2115
    %v2117 = vand.u32 %v2116, 4294901760
    %2118 = vmatpush1.msra.mxu0 %v2117
    %2119 = vmatprep.subr.mxu0 0.0
    %v2120 = vand.u32 %v66, 4294901760
    %v2121 = vsub.f32 %v66, %v2120
    %v2122 = vand.u32 %v2121, 4294901760
    %v2123 = vsub.f32 %v2121, %v2122
    %v2124 = vand.u32 %v2123, 4294901760
    %2125 = vmatpush1.msra.mxu0 %v2124
    %2126 = vmatprep.subr.mxu0 0.0
    %v2127 = vand.u32 %v67, 4294901760
    %v2128 = vsub.f32 %v67, %v2127
    %v2129 = vand.u32 %v2128, 4294901760
    %v2130 = vsub.f32 %v2128, %v2129
    %v2131 = vand.u32 %v2130, 4294901760
    %2132 = vmatpush1.msra.mxu0 %v2131
    %2133 = vmatprep.subr.mxu0 0.0
    %v2134 = vand.u32 %v68, 4294901760
    %v2135 = vsub.f32 %v68, %v2134
    %v2136 = vand.u32 %v2135, 4294901760
    %v2137 = vsub.f32 %v2135, %v2136
    %v2138 = vand.u32 %v2137, 4294901760
    %2139 = vmatpush1.msra.mxu0 %v2138
    %2140 = vmatprep.subr.mxu0 0.0
    %v2141 = vand.u32 %v69, 4294901760
    %v2142 = vsub.f32 %v69, %v2141
    %v2143 = vand.u32 %v2142, 4294901760
    %v2144 = vsub.f32 %v2142, %v2143
    %v2145 = vand.u32 %v2144, 4294901760
    %2146 = vmatpush1.msra.mxu0 %v2145
    %2147 = vmatprep.subr.mxu0 0.0
    %v2148 = vand.u32 %v70, 4294901760
    %v2149 = vsub.f32 %v70, %v2148
    %v2150 = vand.u32 %v2149, 4294901760
    %v2151 = vsub.f32 %v2149, %v2150
    %v2152 = vand.u32 %v2151, 4294901760
    %2153 = vmatpush1.msra.mxu0 %v2152
    %2154 = vmatprep.subr.mxu0 0.0
    %v2155 = vand.u32 %v71, 4294901760
    %v2156 = vsub.f32 %v71, %v2155
    %v2157 = vand.u32 %v2156, 4294901760
    %v2158 = vsub.f32 %v2156, %v2157
    %v2159 = vand.u32 %v2158, 4294901760
    %2160 = vmatpush1.msra.mxu0 %v2159
    %2161 = vmatprep.subr.mxu0 0.0
    %v2162 = vand.u32 %v72, 4294901760
    %v2163 = vsub.f32 %v72, %v2162
    %v2164 = vand.u32 %v2163, 4294901760
    %v2165 = vsub.f32 %v2163, %v2164
    %v2166 = vand.u32 %v2165, 4294901760
    %2167 = vmatpush1.msra.mxu0 %v2166
    %2168 = vmatprep.subr.mxu0 0.0
    %v2169 = vand.u32 %v73, 4294901760
    %v2170 = vsub.f32 %v73, %v2169
    %v2171 = vand.u32 %v2170, 4294901760
    %v2172 = vsub.f32 %v2170, %v2171
    %v2173 = vand.u32 %v2172, 4294901760
    %2174 = vmatpush1.msra.mxu0 %v2173
    %2175 = vmatprep.subr.mxu0 0.0
    %v2176 = vand.u32 %v74, 4294901760
    %v2177 = vsub.f32 %v74, %v2176
    %v2178 = vand.u32 %v2177, 4294901760
    %v2179 = vsub.f32 %v2177, %v2178
    %v2180 = vand.u32 %v2179, 4294901760
    %2181 = vmatpush1.msra.mxu0 %v2180
    %2182 = vmatprep.subr.mxu0 0.0
    %v2183 = vand.u32 %v75, 4294901760
    %v2184 = vsub.f32 %v75, %v2183
    %v2185 = vand.u32 %v2184, 4294901760
    %v2186 = vsub.f32 %v2184, %v2185
    %v2187 = vand.u32 %v2186, 4294901760
    %2188 = vmatpush1.msra.mxu0 %v2187
    %2189 = vmatprep.subr.mxu0 0.0
    %v2190 = vand.u32 %v76, 4294901760
    %v2191 = vsub.f32 %v76, %v2190
    %v2192 = vand.u32 %v2191, 4294901760
    %v2193 = vsub.f32 %v2191, %v2192
    %v2194 = vand.u32 %v2193, 4294901760
    %2195 = vmatpush1.msra.mxu0 %v2194
    %2196 = vmatprep.subr.mxu0 0.0
    %v2197 = vand.u32 %v77, 4294901760
    %v2198 = vsub.f32 %v77, %v2197
    %v2199 = vand.u32 %v2198, 4294901760
    %v2200 = vsub.f32 %v2198, %v2199
    %v2201 = vand.u32 %v2200, 4294901760
    %2202 = vmatpush1.msra.mxu0 %v2201
    %2203 = vmatprep.subr.mxu0 0.0
    %v2204 = vand.u32 %v78, 4294901760
    %v2205 = vsub.f32 %v78, %v2204
    %v2206 = vand.u32 %v2205, 4294901760
    %v2207 = vsub.f32 %v2205, %v2206
    %v2208 = vand.u32 %v2207, 4294901760
    %2209 = vmatpush1.msra.mxu0 %v2208
    %2210 = vmatprep.subr.mxu0 0.0
    %v2211 = vand.u32 %v79, 4294901760
    %v2212 = vsub.f32 %v79, %v2211
    %v2213 = vand.u32 %v2212, 4294901760
    %v2214 = vsub.f32 %v2212, %v2213
    %v2215 = vand.u32 %v2214, 4294901760
    %2216 = vmatpush1.msra.mxu0 %v2215
    %2217 = vmatprep.subr.mxu0 0.0
    %2218 = vmatpush1.msra.mxu0 0.0
    %2219 = vmatprep.subr.mxu0 0.0
    %2220 = vmatpush1.msra.mxu0 0.0
    %2221 = vmatprep.subr.mxu0 0.0
    %2222 = vmatpush1.msra.mxu0 0.0
    %2223 = vmatprep.subr.mxu0 0.0
    %2224 = vmatpush1.msra.mxu0 0.0
    %2225 = vmatprep.subr.mxu0 0.0
    %2226 = vmatpush1.msra.mxu0 0.0
    %2227 = vmatprep.subr.mxu0 0.0
    %2228 = vmatpush1.msra.mxu0 0.0
    %2229 = vmatprep.subr.mxu0 0.0
    %2230 = vmatpush1.msra.mxu0 0.0
    %2231 = vmatprep.subr.mxu0 0.0
    %2232 = vmatpush1.msra.mxu0 0.0
    %2233 = vmatprep.subr.mxu0 0.0
    %2234 = vmatpush1.msra.mxu0 0.0
    %2235 = vmatprep.subr.mxu0 0.0
    %2236 = vmatpush1.msra.mxu0 0.0
    %2237 = vmatprep.subr.mxu0 0.0
    %2238 = vmatpush1.msra.mxu0 0.0
    %2239 = vmatprep.subr.mxu0 0.0
    %2240 = vmatpush1.msra.mxu0 0.0
    %2241 = vmatprep.subr.mxu0 0.0
    %2242 = vmatpush1.msra.mxu0 0.0
    %2243 = vmatprep.subr.mxu0 0.0
    %2244 = vmatpush1.msra.mxu0 0.0
    %2245 = vmatprep.subr.mxu0 0.0
    %2246 = vmatpush1.msra.mxu0 0.0
    %2247 = vmatprep.subr.mxu0 0.0
    %2248 = vmatpush1.msra.mxu0 0.0
    %2249 = vmatprep.mubr.f32.mxu0 0.0
    %v2250 = vand.u32 %v2011, 4294901760
    %2251 = vmatmul.mubr.f32.gmra.mrb[0].mxu0 %v2250
    %v2252 = vpop.f32.mrb[0].mxu0
    %v2253 = vadd.f32 %v2102, %v2252
    %v2254 = vpop.f32.mrb[0].mxu0
    %2255 = vdwg.mxu0
    %2256 = vmatprep.subr.mxu0 0.0
    %v2257 = vand.u32 %v64, 4294901760
    %v2258 = vsub.f32 %v64, %v2257
    %2259 = vmatpush1.msra.mxu0 %v2258
    %2260 = vmatprep.subr.mxu0 0.0
    %v2261 = vand.u32 %v65, 4294901760
    %v2262 = vsub.f32 %v65, %v2261
    %2263 = vmatpush1.msra.mxu0 %v2262
    %2264 = vmatprep.subr.mxu0 0.0
    %v2265 = vand.u32 %v66, 4294901760
    %v2266 = vsub.f32 %v66, %v2265
    %2267 = vmatpush1.msra.mxu0 %v2266
    %2268 = vmatprep.subr.mxu0 0.0
    %v2269 = vand.u32 %v67, 4294901760
    %v2270 = vsub.f32 %v67, %v2269
    %2271 = vmatpush1.msra.mxu0 %v2270
    %2272 = vmatprep.subr.mxu0 0.0
    %v2273 = vand.u32 %v68, 4294901760
    %v2274 = vsub.f32 %v68, %v2273
    %2275 = vmatpush1.msra.mxu0 %v2274
    %2276 = vmatprep.subr.mxu0 0.0
    %v2277 = vand.u32 %v69, 4294901760
    %v2278 = vsub.f32 %v69, %v2277
    %2279 = vmatpush1.msra.mxu0 %v2278
    %2280 = vmatprep.subr.mxu0 0.0
    %v2281 = vand.u32 %v70, 4294901760
    %v2282 = vsub.f32 %v70, %v2281
    %2283 = vmatpush1.msra.mxu0 %v2282
    %2284 = vmatprep.subr.mxu0 0.0
    %v2285 = vand.u32 %v71, 4294901760
    %v2286 = vsub.f32 %v71, %v2285
    %2287 = vmatpush1.msra.mxu0 %v2286
    %2288 = vmatprep.subr.mxu0 0.0
    %v2289 = vand.u32 %v72, 4294901760
    %v2290 = vsub.f32 %v72, %v2289
    %2291 = vmatpush1.msra.mxu0 %v2290
    %2292 = vmatprep.subr.mxu0 0.0
    %v2293 = vand.u32 %v73, 4294901760
    %v2294 = vsub.f32 %v73, %v2293
    %2295 = vmatpush1.msra.mxu0 %v2294
    %2296 = vmatprep.subr.mxu0 0.0
    %v2297 = vand.u32 %v74, 4294901760
    %v2298 = vsub.f32 %v74, %v2297
    %2299 = vmatpush1.msra.mxu0 %v2298
    %2300 = vmatprep.subr.mxu0 0.0
    %v2301 = vand.u32 %v75, 4294901760
    %v2302 = vsub.f32 %v75, %v2301
    %2303 = vmatpush1.msra.mxu0 %v2302
    %2304 = vmatprep.subr.mxu0 0.0
    %v2305 = vand.u32 %v76, 4294901760
    %v2306 = vsub.f32 %v76, %v2305
    %2307 = vmatpush1.msra.mxu0 %v2306
    %2308 = vmatprep.subr.mxu0 0.0
    %v2309 = vand.u32 %v77, 4294901760
    %v2310 = vsub.f32 %v77, %v2309
    %2311 = vmatpush1.msra.mxu0 %v2310
    %2312 = vmatprep.subr.mxu0 0.0
    %v2313 = vand.u32 %v78, 4294901760
    %v2314 = vsub.f32 %v78, %v2313
    %2315 = vmatpush1.msra.mxu0 %v2314
    %2316 = vmatprep.subr.mxu0 0.0
    %v2317 = vand.u32 %v79, 4294901760
    %v2318 = vsub.f32 %v79, %v2317
    %2319 = vmatpush1.msra.mxu0 %v2318
    %2320 = vmatprep.subr.mxu0 0.0
    %2321 = vmatpush1.msra.mxu0 0.0
    %2322 = vmatprep.subr.mxu0 0.0
    %2323 = vmatpush1.msra.mxu0 0.0
    %2324 = vmatprep.subr.mxu0 0.0
    %2325 = vmatpush1.msra.mxu0 0.0
    %2326 = vmatprep.subr.mxu0 0.0
    %2327 = vmatpush1.msra.mxu0 0.0
    %2328 = vmatprep.subr.mxu0 0.0
    %2329 = vmatpush1.msra.mxu0 0.0
    %2330 = vmatprep.subr.mxu0 0.0
    %2331 = vmatpush1.msra.mxu0 0.0
    %2332 = vmatprep.subr.mxu0 0.0
    %2333 = vmatpush1.msra.mxu0 0.0
    %2334 = vmatprep.subr.mxu0 0.0
    %2335 = vmatpush1.msra.mxu0 0.0
    %2336 = vmatprep.subr.mxu0 0.0
    %2337 = vmatpush1.msra.mxu0 0.0
    %2338 = vmatprep.subr.mxu0 0.0
    %2339 = vmatpush1.msra.mxu0 0.0
    %2340 = vmatprep.subr.mxu0 0.0
    %2341 = vmatpush1.msra.mxu0 0.0
    %2342 = vmatprep.subr.mxu0 0.0
    %2343 = vmatpush1.msra.mxu0 0.0
    %2344 = vmatprep.subr.mxu0 0.0
    %2345 = vmatpush1.msra.mxu0 0.0
    %2346 = vmatprep.subr.mxu0 0.0
    %2347 = vmatpush1.msra.mxu0 0.0
    %2348 = vmatprep.subr.mxu0 0.0
    %2349 = vmatpush1.msra.mxu0 0.0
    %2350 = vmatprep.subr.mxu0 0.0
    %2351 = vmatpush1.msra.mxu0 0.0
    %2352 = vmatprep.mubr.f32.mxu0 0.0
    %v2353 = vand.u32 %v2011, 4294901760
    %v2354 = vsub.f32 %v2011, %v2353
    %2355 = vmatmul.mubr.f32.gmra.mrb[0].mxu0 %v2354
    %v2356 = vpop.f32.mrb[0].mxu0
    %v2357 = vadd.f32 %v2253, %v2356
    %v2358 = vpop.f32.mrb[0].mxu0
    %2359 = vdwg.mxu0
    %2360 = vmatprep.subr.mxu0 0.0
    %v2361 = vand.u32 %v64, 4294901760
    %2362 = vmatpush1.msra.mxu0 %v2361
    %2363 = vmatprep.subr.mxu0 0.0
    %v2364 = vand.u32 %v65, 4294901760
    %2365 = vmatpush1.msra.mxu0 %v2364
    %2366 = vmatprep.subr.mxu0 0.0
    %v2367 = vand.u32 %v66, 4294901760
    %2368 = vmatpush1.msra.mxu0 %v2367
    %2369 = vmatprep.subr.mxu0 0.0
    %v2370 = vand.u32 %v67, 4294901760
    %2371 = vmatpush1.msra.mxu0 %v2370
    %2372 = vmatprep.subr.mxu0 0.0
    %v2373 = vand.u32 %v68, 4294901760
    %2374 = vmatpush1.msra.mxu0 %v2373
    %2375 = vmatprep.subr.mxu0 0.0
    %v2376 = vand.u32 %v69, 4294901760
    %2377 = vmatpush1.msra.mxu0 %v2376
    %2378 = vmatprep.subr.mxu0 0.0
    %v2379 = vand.u32 %v70, 4294901760
    %2380 = vmatpush1.msra.mxu0 %v2379
    %2381 = vmatprep.subr.mxu0 0.0
    %v2382 = vand.u32 %v71, 4294901760
    %2383 = vmatpush1.msra.mxu0 %v2382
    %2384 = vmatprep.subr.mxu0 0.0
    %v2385 = vand.u32 %v72, 4294901760
    %2386 = vmatpush1.msra.mxu0 %v2385
    %2387 = vmatprep.subr.mxu0 0.0
    %v2388 = vand.u32 %v73, 4294901760
    %2389 = vmatpush1.msra.mxu0 %v2388
    %2390 = vmatprep.subr.mxu0 0.0
    %v2391 = vand.u32 %v74, 4294901760
    %2392 = vmatpush1.msra.mxu0 %v2391
    %2393 = vmatprep.subr.mxu0 0.0
    %v2394 = vand.u32 %v75, 4294901760
    %2395 = vmatpush1.msra.mxu0 %v2394
    %2396 = vmatprep.subr.mxu0 0.0
    %v2397 = vand.u32 %v76, 4294901760
    %2398 = vmatpush1.msra.mxu0 %v2397
    %2399 = vmatprep.subr.mxu0 0.0
    %v2400 = vand.u32 %v77, 4294901760
    %2401 = vmatpush1.msra.mxu0 %v2400
    %2402 = vmatprep.subr.mxu0 0.0
    %v2403 = vand.u32 %v78, 4294901760
    %2404 = vmatpush1.msra.mxu0 %v2403
    %2405 = vmatprep.subr.mxu0 0.0
    %v2406 = vand.u32 %v79, 4294901760
    %2407 = vmatpush1.msra.mxu0 %v2406
    %2408 = vmatprep.subr.mxu0 0.0
    %2409 = vmatpush1.msra.mxu0 0.0
    %2410 = vmatprep.subr.mxu0 0.0
    %2411 = vmatpush1.msra.mxu0 0.0
    %2412 = vmatprep.subr.mxu0 0.0
    %2413 = vmatpush1.msra.mxu0 0.0
    %2414 = vmatprep.subr.mxu0 0.0
    %2415 = vmatpush1.msra.mxu0 0.0
    %2416 = vmatprep.subr.mxu0 0.0
    %2417 = vmatpush1.msra.mxu0 0.0
    %2418 = vmatprep.subr.mxu0 0.0
    %2419 = vmatpush1.msra.mxu0 0.0
    %2420 = vmatprep.subr.mxu0 0.0
    %2421 = vmatpush1.msra.mxu0 0.0
    %2422 = vmatprep.subr.mxu0 0.0
    %2423 = vmatpush1.msra.mxu0 0.0
    %2424 = vmatprep.subr.mxu0 0.0
    %2425 = vmatpush1.msra.mxu0 0.0
    %2426 = vmatprep.subr.mxu0 0.0
    %2427 = vmatpush1.msra.mxu0 0.0
    %2428 = vmatprep.subr.mxu0 0.0
    %2429 = vmatpush1.msra.mxu0 0.0
    %2430 = vmatprep.subr.mxu0 0.0
    %2431 = vmatpush1.msra.mxu0 0.0
    %2432 = vmatprep.subr.mxu0 0.0
    %2433 = vmatpush1.msra.mxu0 0.0
    %2434 = vmatprep.subr.mxu0 0.0
    %2435 = vmatpush1.msra.mxu0 0.0
    %2436 = vmatprep.subr.mxu0 0.0
    %2437 = vmatpush1.msra.mxu0 0.0
    %2438 = vmatprep.subr.mxu0 0.0
    %2439 = vmatpush1.msra.mxu0 0.0
    %2440 = vmatprep.mubr.f32.mxu0 0.0
    %v2441 = vand.u32 %v2011, 4294901760
    %v2442 = vsub.f32 %v2011, %v2441
    %v2443 = vand.u32 %v2442, 4294901760
    %2444 = vmatmul.mubr.f32.gmra.mrb[0].mxu0 %v2443
    %v2445 = vpop.f32.mrb[0].mxu0
    %v2446 = vadd.f32 %v2357, %v2445
    %v2447 = vpop.f32.mrb[0].mxu0
    %2448 = vdwg.mxu0
    %2449 = vmatprep.subr.mxu0 0.0
    %v2450 = vand.u32 %v64, 4294901760
    %v2451 = vsub.f32 %v64, %v2450
    %v2452 = vand.u32 %v2451, 4294901760
    %2453 = vmatpush1.msra.mxu0 %v2452
    %2454 = vmatprep.subr.mxu0 0.0
    %v2455 = vand.u32 %v65, 4294901760
    %v2456 = vsub.f32 %v65, %v2455
    %v2457 = vand.u32 %v2456, 4294901760
    %2458 = vmatpush1.msra.mxu0 %v2457
    %2459 = vmatprep.subr.mxu0 0.0
    %v2460 = vand.u32 %v66, 4294901760
    %v2461 = vsub.f32 %v66, %v2460
    %v2462 = vand.u32 %v2461, 4294901760
    %2463 = vmatpush1.msra.mxu0 %v2462
    %2464 = vmatprep.subr.mxu0 0.0
    %v2465 = vand.u32 %v67, 4294901760
    %v2466 = vsub.f32 %v67, %v2465
    %v2467 = vand.u32 %v2466, 4294901760
    %2468 = vmatpush1.msra.mxu0 %v2467
    %2469 = vmatprep.subr.mxu0 0.0
    %v2470 = vand.u32 %v68, 4294901760
    %v2471 = vsub.f32 %v68, %v2470
    %v2472 = vand.u32 %v2471, 4294901760
    %2473 = vmatpush1.msra.mxu0 %v2472
    %2474 = vmatprep.subr.mxu0 0.0
    %v2475 = vand.u32 %v69, 4294901760
    %v2476 = vsub.f32 %v69, %v2475
    %v2477 = vand.u32 %v2476, 4294901760
    %2478 = vmatpush1.msra.mxu0 %v2477
    %2479 = vmatprep.subr.mxu0 0.0
    %v2480 = vand.u32 %v70, 4294901760
    %v2481 = vsub.f32 %v70, %v2480
    %v2482 = vand.u32 %v2481, 4294901760
    %2483 = vmatpush1.msra.mxu0 %v2482
    %2484 = vmatprep.subr.mxu0 0.0
    %v2485 = vand.u32 %v71, 4294901760
    %v2486 = vsub.f32 %v71, %v2485
    %v2487 = vand.u32 %v2486, 4294901760
    %2488 = vmatpush1.msra.mxu0 %v2487
    %2489 = vmatprep.subr.mxu0 0.0
    %v2490 = vand.u32 %v72, 4294901760
    %v2491 = vsub.f32 %v72, %v2490
    %v2492 = vand.u32 %v2491, 4294901760
    %2493 = vmatpush1.msra.mxu0 %v2492
    %2494 = vmatprep.subr.mxu0 0.0
    %v2495 = vand.u32 %v73, 4294901760
    %v2496 = vsub.f32 %v73, %v2495
    %v2497 = vand.u32 %v2496, 4294901760
    %2498 = vmatpush1.msra.mxu0 %v2497
    %2499 = vmatprep.subr.mxu0 0.0
    %v2500 = vand.u32 %v74, 4294901760
    %v2501 = vsub.f32 %v74, %v2500
    %v2502 = vand.u32 %v2501, 4294901760
    %2503 = vmatpush1.msra.mxu0 %v2502
    %2504 = vmatprep.subr.mxu0 0.0
    %v2505 = vand.u32 %v75, 4294901760
    %v2506 = vsub.f32 %v75, %v2505
    %v2507 = vand.u32 %v2506, 4294901760
    %2508 = vmatpush1.msra.mxu0 %v2507
    %2509 = vmatprep.subr.mxu0 0.0
    %v2510 = vand.u32 %v76, 4294901760
    %v2511 = vsub.f32 %v76, %v2510
    %v2512 = vand.u32 %v2511, 4294901760
    %2513 = vmatpush1.msra.mxu0 %v2512
    %2514 = vmatprep.subr.mxu0 0.0
    %v2515 = vand.u32 %v77, 4294901760
    %v2516 = vsub.f32 %v77, %v2515
    %v2517 = vand.u32 %v2516, 4294901760
    %2518 = vmatpush1.msra.mxu0 %v2517
    %2519 = vmatprep.subr.mxu0 0.0
    %v2520 = vand.u32 %v78, 4294901760
    %v2521 = vsub.f32 %v78, %v2520
    %v2522 = vand.u32 %v2521, 4294901760
    %2523 = vmatpush1.msra.mxu0 %v2522
    %2524 = vmatprep.subr.mxu0 0.0
    %v2525 = vand.u32 %v79, 4294901760
    %v2526 = vsub.f32 %v79, %v2525
    %v2527 = vand.u32 %v2526, 4294901760
    %2528 = vmatpush1.msra.mxu0 %v2527
    %2529 = vmatprep.subr.mxu0 0.0
    %2530 = vmatpush1.msra.mxu0 0.0
    %2531 = vmatprep.subr.mxu0 0.0
    %2532 = vmatpush1.msra.mxu0 0.0
    %2533 = vmatprep.subr.mxu0 0.0
    %2534 = vmatpush1.msra.mxu0 0.0
    %2535 = vmatprep.subr.mxu0 0.0
    %2536 = vmatpush1.msra.mxu0 0.0
    %2537 = vmatprep.subr.mxu0 0.0
    %2538 = vmatpush1.msra.mxu0 0.0
    %2539 = vmatprep.subr.mxu0 0.0
    %2540 = vmatpush1.msra.mxu0 0.0
    %2541 = vmatprep.subr.mxu0 0.0
    %2542 = vmatpush1.msra.mxu0 0.0
    %2543 = vmatprep.subr.mxu0 0.0
    %2544 = vmatpush1.msra.mxu0 0.0
    %2545 = vmatprep.subr.mxu0 0.0
    %2546 = vmatpush1.msra.mxu0 0.0
    %2547 = vmatprep.subr.mxu0 0.0
    %2548 = vmatpush1.msra.mxu0 0.0
    %2549 = vmatprep.subr.mxu0 0.0
    %2550 = vmatpush1.msra.mxu0 0.0
    %2551 = vmatprep.subr.mxu0 0.0
    %2552 = vmatpush1.msra.mxu0 0.0
    %2553 = vmatprep.subr.mxu0 0.0
    %2554 = vmatpush1.msra.mxu0 0.0
    %2555 = vmatprep.subr.mxu0 0.0
    %2556 = vmatpush1.msra.mxu0 0.0
    %2557 = vmatprep.subr.mxu0 0.0
    %2558 = vmatpush1.msra.mxu0 0.0
    %2559 = vmatprep.subr.mxu0 0.0
    %2560 = vmatpush1.msra.mxu0 0.0
    %2561 = vmatprep.mubr.f32.mxu0 0.0
    %v2562 = vand.u32 %v2011, 4294901760
    %2563 = vmatmul.mubr.f32.gmra.mrb[0].mxu0 %v2562
    %v2564 = vpop.f32.mrb[0].mxu0
    %v2565 = vadd.f32 %v2446, %v2564
    %v2566 = vpop.f32.mrb[0].mxu0
    %2567 = vdwg.mxu0
    %2568 = vmatprep.subr.mxu0 0.0
    %v2569 = vand.u32 %v64, 4294901760
    %2570 = vmatpush1.msra.mxu0 %v2569
    %2571 = vmatprep.subr.mxu0 0.0
    %v2572 = vand.u32 %v65, 4294901760
    %2573 = vmatpush1.msra.mxu0 %v2572
    %2574 = vmatprep.subr.mxu0 0.0
    %v2575 = vand.u32 %v66, 4294901760
    %2576 = vmatpush1.msra.mxu0 %v2575
    %2577 = vmatprep.subr.mxu0 0.0
    %v2578 = vand.u32 %v67, 4294901760
    %2579 = vmatpush1.msra.mxu0 %v2578
    %2580 = vmatprep.subr.mxu0 0.0
    %v2581 = vand.u32 %v68, 4294901760
    %2582 = vmatpush1.msra.mxu0 %v2581
    %2583 = vmatprep.subr.mxu0 0.0
    %v2584 = vand.u32 %v69, 4294901760
    %2585 = vmatpush1.msra.mxu0 %v2584
    %2586 = vmatprep.subr.mxu0 0.0
    %v2587 = vand.u32 %v70, 4294901760
    %2588 = vmatpush1.msra.mxu0 %v2587
    %2589 = vmatprep.subr.mxu0 0.0
    %v2590 = vand.u32 %v71, 4294901760
    %2591 = vmatpush1.msra.mxu0 %v2590
    %2592 = vmatprep.subr.mxu0 0.0
    %v2593 = vand.u32 %v72, 4294901760
    %2594 = vmatpush1.msra.mxu0 %v2593
    %2595 = vmatprep.subr.mxu0 0.0
    %v2596 = vand.u32 %v73, 4294901760
    %2597 = vmatpush1.msra.mxu0 %v2596
    %2598 = vmatprep.subr.mxu0 0.0
    %v2599 = vand.u32 %v74, 4294901760
    %2600 = vmatpush1.msra.mxu0 %v2599
    %2601 = vmatprep.subr.mxu0 0.0
    %v2602 = vand.u32 %v75, 4294901760
    %2603 = vmatpush1.msra.mxu0 %v2602
    %2604 = vmatprep.subr.mxu0 0.0
    %v2605 = vand.u32 %v76, 4294901760
    %2606 = vmatpush1.msra.mxu0 %v2605
    %2607 = vmatprep.subr.mxu0 0.0
    %v2608 = vand.u32 %v77, 4294901760
    %2609 = vmatpush1.msra.mxu0 %v2608
    %2610 = vmatprep.subr.mxu0 0.0
    %v2611 = vand.u32 %v78, 4294901760
    %2612 = vmatpush1.msra.mxu0 %v2611
    %2613 = vmatprep.subr.mxu0 0.0
    %v2614 = vand.u32 %v79, 4294901760
    %2615 = vmatpush1.msra.mxu0 %v2614
    %2616 = vmatprep.subr.mxu0 0.0
    %2617 = vmatpush1.msra.mxu0 0.0
    %2618 = vmatprep.subr.mxu0 0.0
    %2619 = vmatpush1.msra.mxu0 0.0
    %2620 = vmatprep.subr.mxu0 0.0
    %2621 = vmatpush1.msra.mxu0 0.0
    %2622 = vmatprep.subr.mxu0 0.0
    %2623 = vmatpush1.msra.mxu0 0.0
    %2624 = vmatprep.subr.mxu0 0.0
    %2625 = vmatpush1.msra.mxu0 0.0
    %2626 = vmatprep.subr.mxu0 0.0
    %2627 = vmatpush1.msra.mxu0 0.0
    %2628 = vmatprep.subr.mxu0 0.0
    %2629 = vmatpush1.msra.mxu0 0.0
    %2630 = vmatprep.subr.mxu0 0.0
    %2631 = vmatpush1.msra.mxu0 0.0
    %2632 = vmatprep.subr.mxu0 0.0
    %2633 = vmatpush1.msra.mxu0 0.0
    %2634 = vmatprep.subr.mxu0 0.0
    %2635 = vmatpush1.msra.mxu0 0.0
    %2636 = vmatprep.subr.mxu0 0.0
    %2637 = vmatpush1.msra.mxu0 0.0
    %2638 = vmatprep.subr.mxu0 0.0
    %2639 = vmatpush1.msra.mxu0 0.0
    %2640 = vmatprep.subr.mxu0 0.0
    %2641 = vmatpush1.msra.mxu0 0.0
    %2642 = vmatprep.subr.mxu0 0.0
    %2643 = vmatpush1.msra.mxu0 0.0
    %2644 = vmatprep.subr.mxu0 0.0
    %2645 = vmatpush1.msra.mxu0 0.0
    %2646 = vmatprep.subr.mxu0 0.0
    %2647 = vmatpush1.msra.mxu0 0.0
    %2648 = vmatprep.mubr.f32.mxu0 0.0
    %v2649 = vand.u32 %v2011, 4294901760
    %2650 = vmatmul.mubr.f32.gmra.mrb[0].mxu0 %v2649
    %v2651 = vpop.f32.mrb[0].mxu0
    %v2652 = vadd.f32 %v2565, %v2651
    %v2653 = vpop.f32.mrb[0].mxu0
    %2654 = vdwg.mxu0
    %v2655 = vtanh.pop %v2652
    %s2656 = scalar_lea.vmem [#allocation3], 32
    %v2657 = vld [vmem:[%s2656] sm:$0xff]
    %2658 = vmatprep.subr.mxu0 0.0
    %v2659 = vand.u32 %v64, 4294901760
    %2660 = vmatpush1.msra.mxu0 %v2659
    %2661 = vmatprep.subr.mxu0 0.0
    %v2662 = vand.u32 %v65, 4294901760
    %2663 = vmatpush1.msra.mxu0 %v2662
    %2664 = vmatprep.subr.mxu0 0.0
    %v2665 = vand.u32 %v66, 4294901760
    %2666 = vmatpush1.msra.mxu0 %v2665
    %2667 = vmatprep.subr.mxu0 0.0
    %v2668 = vand.u32 %v67, 4294901760
    %2669 = vmatpush1.msra.mxu0 %v2668
    %2670 = vmatprep.subr.mxu0 0.0
    %v2671 = vand.u32 %v68, 4294901760
    %2672 = vmatpush1.msra.mxu0 %v2671
    %2673 = vmatprep.subr.mxu0 0.0
    %v2674 = vand.u32 %v69, 4294901760
    %2675 = vmatpush1.msra.mxu0 %v2674
    %2676 = vmatprep.subr.mxu0 0.0
    %v2677 = vand.u32 %v70, 4294901760
    %2678 = vmatpush1.msra.mxu0 %v2677
    %2679 = vmatprep.subr.mxu0 0.0
    %v2680 = vand.u32 %v71, 4294901760
    %2681 = vmatpush1.msra.mxu0 %v2680
    %2682 = vmatprep.subr.mxu0 0.0
    %v2683 = vand.u32 %v72, 4294901760
    %2684 = vmatpush1.msra.mxu0 %v2683
    %2685 = vmatprep.subr.mxu0 0.0
    %v2686 = vand.u32 %v73, 4294901760
    %2687 = vmatpush1.msra.mxu0 %v2686
    %2688 = vmatprep.subr.mxu0 0.0
    %v2689 = vand.u32 %v74, 4294901760
    %2690 = vmatpush1.msra.mxu0 %v2689
    %2691 = vmatprep.subr.mxu0 0.0
    %v2692 = vand.u32 %v75, 4294901760
    %2693 = vmatpush1.msra.mxu0 %v2692
    %2694 = vmatprep.subr.mxu0 0.0
    %v2695 = vand.u32 %v76, 4294901760
    %2696 = vmatpush1.msra.mxu0 %v2695
    %2697 = vmatprep.subr.mxu0 0.0
    %v2698 = vand.u32 %v77, 4294901760
    %2699 = vmatpush1.msra.mxu0 %v2698
    %2700 = vmatprep.subr.mxu0 0.0
    %v2701 = vand.u32 %v78, 4294901760
    %2702 = vmatpush1.msra.mxu0 %v2701
    %2703 = vmatprep.subr.mxu0 0.0
    %v2704 = vand.u32 %v79, 4294901760
    %2705 = vmatpush1.msra.mxu0 %v2704
    %2706 = vmatprep.subr.mxu0 0.0
    %2707 = vmatpush1.msra.mxu0 0.0
    %2708 = vmatprep.subr.mxu0 0.0
    %2709 = vmatpush1.msra.mxu0 0.0
    %2710 = vmatprep.subr.mxu0 0.0
    %2711 = vmatpush1.msra.mxu0 0.0
    %2712 = vmatprep.subr.mxu0 0.0
    %2713 = vmatpush1.msra.mxu0 0.0
    %2714 = vmatprep.subr.mxu0 0.0
    %2715 = vmatpush1.msra.mxu0 0.0
    %2716 = vmatprep.subr.mxu0 0.0
    %2717 = vmatpush1.msra.mxu0 0.0
    %2718 = vmatprep.subr.mxu0 0.0
    %2719 = vmatpush1.msra.mxu0 0.0
    %2720 = vmatprep.subr.mxu0 0.0
    %2721 = vmatpush1.msra.mxu0 0.0
    %2722 = vmatprep.subr.mxu0 0.0
    %2723 = vmatpush1.msra.mxu0 0.0
    %2724 = vmatprep.subr.mxu0 0.0
    %2725 = vmatpush1.msra.mxu0 0.0
    %2726 = vmatprep.subr.mxu0 0.0
    %2727 = vmatpush1.msra.mxu0 0.0
    %2728 = vmatprep.subr.mxu0 0.0
    %2729 = vmatpush1.msra.mxu0 0.0
    %2730 = vmatprep.subr.mxu0 0.0
    %2731 = vmatpush1.msra.mxu0 0.0
    %2732 = vmatprep.subr.mxu0 0.0
    %2733 = vmatpush1.msra.mxu0 0.0
    %2734 = vmatprep.subr.mxu0 0.0
    %2735 = vmatpush1.msra.mxu0 0.0
    %2736 = vmatprep.subr.mxu0 0.0
    %2737 = vmatpush1.msra.mxu0 0.0
    %2738 = vmatprep.mubr.f32.mxu0 0.0
    %v2739 = vand.u32 %v2655, 4294901760
    %v2740 = vsub.f32 %v2655, %v2739
    %v2741 = vand.u32 %v2740, 4294901760
    %v2742 = vsub.f32 %v2740, %v2741
    %v2743 = vand.u32 %v2742, 4294901760
    %2744 = vmatmul.mubr.f32.gmra.mrb[0].mxu0 %v2743
    %v2745 = vpop.f32.mrb[0].mxu0
    %v2746 = vadd.f32 %v2657, %v2745
    %v2747 = vpop.f32.mrb[0].mxu0
    %2748 = vdwg.mxu0
    %2749 = vmatprep.subr.mxu0 0.0
    %v2750 = vand.u32 %v64, 4294901760
    %v2751 = vsub.f32 %v64, %v2750
    %v2752 = vand.u32 %v2751, 4294901760
    %v2753 = vsub.f32 %v2751, %v2752
    %v2754 = vand.u32 %v2753, 4294901760
    %2755 = vmatpush1.msra.mxu0 %v2754
    %2756 = vmatprep.subr.mxu0 0.0
    %v2757 = vand.u32 %v65, 4294901760
    %v2758 = vsub.f32 %v65, %v2757
    %v2759 = vand.u32 %v2758, 4294901760
    %v2760 = vsub.f32 %v2758, %v2759
    %v2761 = vand.u32 %v2760, 4294901760
    %2762 = vmatpush1.msra.mxu0 %v2761
    %2763 = vmatprep.subr.mxu0 0.0
    %v2764 = vand.u32 %v66, 4294901760
    %v2765 = vsub.f32 %v66, %v2764
    %v2766 = vand.u32 %v2765, 4294901760
    %v2767 = vsub.f32 %v2765, %v2766
    %v2768 = vand.u32 %v2767, 4294901760
    %2769 = vmatpush1.msra.mxu0 %v2768
    %2770 = vmatprep.subr.mxu0 0.0
    %v2771 = vand.u32 %v67, 4294901760
    %v2772 = vsub.f32 %v67, %v2771
    %v2773 = vand.u32 %v2772, 4294901760
    %v2774 = vsub.f32 %v2772, %v2773
    %v2775 = vand.u32 %v2774, 4294901760
    %2776 = vmatpush1.msra.mxu0 %v2775
    %2777 = vmatprep.subr.mxu0 0.0
    %v2778 = vand.u32 %v68, 4294901760
    %v2779 = vsub.f32 %v68, %v2778
    %v2780 = vand.u32 %v2779, 4294901760
    %v2781 = vsub.f32 %v2779, %v2780
    %v2782 = vand.u32 %v2781, 4294901760
    %2783 = vmatpush1.msra.mxu0 %v2782
    %2784 = vmatprep.subr.mxu0 0.0
    %v2785 = vand.u32 %v69, 4294901760
    %v2786 = vsub.f32 %v69, %v2785
    %v2787 = vand.u32 %v2786, 4294901760
    %v2788 = vsub.f32 %v2786, %v2787
    %v2789 = vand.u32 %v2788, 4294901760
    %2790 = vmatpush1.msra.mxu0 %v2789
    %2791 = vmatprep.subr.mxu0 0.0
    %v2792 = vand.u32 %v70, 4294901760
    %v2793 = vsub.f32 %v70, %v2792
    %v2794 = vand.u32 %v2793, 4294901760
    %v2795 = vsub.f32 %v2793, %v2794
    %v2796 = vand.u32 %v2795, 4294901760
    %2797 = vmatpush1.msra.mxu0 %v2796
    %2798 = vmatprep.subr.mxu0 0.0
    %v2799 = vand.u32 %v71, 4294901760
    %v2800 = vsub.f32 %v71, %v2799
    %v2801 = vand.u32 %v2800, 4294901760
    %v2802 = vsub.f32 %v2800, %v2801
    %v2803 = vand.u32 %v2802, 4294901760
    %2804 = vmatpush1.msra.mxu0 %v2803
    %2805 = vmatprep.subr.mxu0 0.0
    %v2806 = vand.u32 %v72, 4294901760
    %v2807 = vsub.f32 %v72, %v2806
    %v2808 = vand.u32 %v2807, 4294901760
    %v2809 = vsub.f32 %v2807, %v2808
    %v2810 = vand.u32 %v2809, 4294901760
    %2811 = vmatpush1.msra.mxu0 %v2810
    %2812 = vmatprep.subr.mxu0 0.0
    %v2813 = vand.u32 %v73, 4294901760
    %v2814 = vsub.f32 %v73, %v2813
    %v2815 = vand.u32 %v2814, 4294901760
    %v2816 = vsub.f32 %v2814, %v2815
    %v2817 = vand.u32 %v2816, 4294901760
    %2818 = vmatpush1.msra.mxu0 %v2817
    %2819 = vmatprep.subr.mxu0 0.0
    %v2820 = vand.u32 %v74, 4294901760
    %v2821 = vsub.f32 %v74, %v2820
    %v2822 = vand.u32 %v2821, 4294901760
    %v2823 = vsub.f32 %v2821, %v2822
    %v2824 = vand.u32 %v2823, 4294901760
    %2825 = vmatpush1.msra.mxu0 %v2824
    %2826 = vmatprep.subr.mxu0 0.0
    %v2827 = vand.u32 %v75, 4294901760
    %v2828 = vsub.f32 %v75, %v2827
    %v2829 = vand.u32 %v2828, 4294901760
    %v2830 = vsub.f32 %v2828, %v2829
    %v2831 = vand.u32 %v2830, 4294901760
    %2832 = vmatpush1.msra.mxu0 %v2831
    %2833 = vmatprep.subr.mxu0 0.0
    %v2834 = vand.u32 %v76, 4294901760
    %v2835 = vsub.f32 %v76, %v2834
    %v2836 = vand.u32 %v2835, 4294901760
    %v2837 = vsub.f32 %v2835, %v2836
    %v2838 = vand.u32 %v2837, 4294901760
    %2839 = vmatpush1.msra.mxu0 %v2838
    %2840 = vmatprep.subr.mxu0 0.0
    %v2841 = vand.u32 %v77, 4294901760
    %v2842 = vsub.f32 %v77, %v2841
    %v2843 = vand.u32 %v2842, 4294901760
    %v2844 = vsub.f32 %v2842, %v2843
    %v2845 = vand.u32 %v2844, 4294901760
    %2846 = vmatpush1.msra.mxu0 %v2845
    %2847 = vmatprep.subr.mxu0 0.0
    %v2848 = vand.u32 %v78, 4294901760
    %v2849 = vsub.f32 %v78, %v2848
    %v2850 = vand.u32 %v2849, 4294901760
    %v2851 = vsub.f32 %v2849, %v2850
    %v2852 = vand.u32 %v2851, 4294901760
    %2853 = vmatpush1.msra.mxu0 %v2852
    %2854 = vmatprep.subr.mxu0 0.0
    %v2855 = vand.u32 %v79, 4294901760
    %v2856 = vsub.f32 %v79, %v2855
    %v2857 = vand.u32 %v2856, 4294901760
    %v2858 = vsub.f32 %v2856, %v2857
    %v2859 = vand.u32 %v2858, 4294901760
    %2860 = vmatpush1.msra.mxu0 %v2859
    %2861 = vmatprep.subr.mxu0 0.0
    %2862 = vmatpush1.msra.mxu0 0.0
    %2863 = vmatprep.subr.mxu0 0.0
    %2864 = vmatpush1.msra.mxu0 0.0
    %2865 = vmatprep.subr.mxu0 0.0
    %2866 = vmatpush1.msra.mxu0 0.0
    %2867 = vmatprep.subr.mxu0 0.0
    %2868 = vmatpush1.msra.mxu0 0.0
    %2869 = vmatprep.subr.mxu0 0.0
    %2870 = vmatpush1.msra.mxu0 0.0
    %2871 = vmatprep.subr.mxu0 0.0
    %2872 = vmatpush1.msra.mxu0 0.0
    %2873 = vmatprep.subr.mxu0 0.0
    %2874 = vmatpush1.msra.mxu0 0.0
    %2875 = vmatprep.subr.mxu0 0.0
    %2876 = vmatpush1.msra.mxu0 0.0
    %2877 = vmatprep.subr.mxu0 0.0
    %2878 = vmatpush1.msra.mxu0 0.0
    %2879 = vmatprep.subr.mxu0 0.0
    %2880 = vmatpush1.msra.mxu0 0.0
    %2881 = vmatprep.subr.mxu0 0.0
    %2882 = vmatpush1.msra.mxu0 0.0
    %2883 = vmatprep.subr.mxu0 0.0
    %2884 = vmatpush1.msra.mxu0 0.0
    %2885 = vmatprep.subr.mxu0 0.0
    %2886 = vmatpush1.msra.mxu0 0.0
    %2887 = vmatprep.subr.mxu0 0.0
    %2888 = vmatpush1.msra.mxu0 0.0
    %2889 = vmatprep.subr.mxu0 0.0
    %2890 = vmatpush1.msra.mxu0 0.0
    %2891 = vmatprep.subr.mxu0 0.0
    %2892 = vmatpush1.msra.mxu0 0.0
    %2893 = vmatprep.mubr.f32.mxu0 0.0
    %v2894 = vand.u32 %v2655, 4294901760
    %2895 = vmatmul.mubr.f32.gmra.mrb[0].mxu0 %v2894
    %v2896 = vpop.f32.mrb[0].mxu0
    %v2897 = vadd.f32 %v2746, %v2896
    %v2898 = vpop.f32.mrb[0].mxu0
    %2899 = vdwg.mxu0
    %2900 = vmatprep.subr.mxu0 0.0
    %v2901 = vand.u32 %v64, 4294901760
    %v2902 = vsub.f32 %v64, %v2901
    %2903 = vmatpush1.msra.mxu0 %v2902
    %2904 = vmatprep.subr.mxu0 0.0
    %v2905 = vand.u32 %v65, 4294901760
    %v2906 = vsub.f32 %v65, %v2905
    %2907 = vmatpush1.msra.mxu0 %v2906
    %2908 = vmatprep.subr.mxu0 0.0
    %v2909 = vand.u32 %v66, 4294901760
    %v2910 = vsub.f32 %v66, %v2909
    %2911 = vmatpush1.msra.mxu0 %v2910
    %2912 = vmatprep.subr.mxu0 0.0
    %v2913 = vand.u32 %v67, 4294901760
    %v2914 = vsub.f32 %v67, %v2913
    %2915 = vmatpush1.msra.mxu0 %v2914
    %2916 = vmatprep.subr.mxu0 0.0
    %v2917 = vand.u32 %v68, 4294901760
    %v2918 = vsub.f32 %v68, %v2917
    %2919 = vmatpush1.msra.mxu0 %v2918
    %2920 = vmatprep.subr.mxu0 0.0
    %v2921 = vand.u32 %v69, 4294901760
    %v2922 = vsub.f32 %v69, %v2921
    %2923 = vmatpush1.msra.mxu0 %v2922
    %2924 = vmatprep.subr.mxu0 0.0
    %v2925 = vand.u32 %v70, 4294901760
    %v2926 = vsub.f32 %v70, %v2925
    %2927 = vmatpush1.msra.mxu0 %v2926
    %2928 = vmatprep.subr.mxu0 0.0
    %v2929 = vand.u32 %v71, 4294901760
    %v2930 = vsub.f32 %v71, %v2929
    %2931 = vmatpush1.msra.mxu0 %v2930
    %2932 = vmatprep.subr.mxu0 0.0
    %v2933 = vand.u32 %v72, 4294901760
    %v2934 = vsub.f32 %v72, %v2933
    %2935 = vmatpush1.msra.mxu0 %v2934
    %2936 = vmatprep.subr.mxu0 0.0
    %v2937 = vand.u32 %v73, 4294901760
    %v2938 = vsub.f32 %v73, %v2937
    %2939 = vmatpush1.msra.mxu0 %v2938
    %2940 = vmatprep.subr.mxu0 0.0
    %v2941 = vand.u32 %v74, 4294901760
    %v2942 = vsub.f32 %v74, %v2941
    %2943 = vmatpush1.msra.mxu0 %v2942
    %2944 = vmatprep.subr.mxu0 0.0
    %v2945 = vand.u32 %v75, 4294901760
    %v2946 = vsub.f32 %v75, %v2945
    %2947 = vmatpush1.msra.mxu0 %v2946
    %2948 = vmatprep.subr.mxu0 0.0
    %v2949 = vand.u32 %v76, 4294901760
    %v2950 = vsub.f32 %v76, %v2949
    %2951 = vmatpush1.msra.mxu0 %v2950
    %2952 = vmatprep.subr.mxu0 0.0
    %v2953 = vand.u32 %v77, 4294901760
    %v2954 = vsub.f32 %v77, %v2953
    %2955 = vmatpush1.msra.mxu0 %v2954
    %2956 = vmatprep.subr.mxu0 0.0
    %v2957 = vand.u32 %v78, 4294901760
    %v2958 = vsub.f32 %v78, %v2957
    %2959 = vmatpush1.msra.mxu0 %v2958
    %2960 = vmatprep.subr.mxu0 0.0
    %v2961 = vand.u32 %v79, 4294901760
    %v2962 = vsub.f32 %v79, %v2961
    %2963 = vmatpush1.msra.mxu0 %v2962
    %2964 = vmatprep.subr.mxu0 0.0
    %2965 = vmatpush1.msra.mxu0 0.0
    %2966 = vmatprep.subr.mxu0 0.0
    %2967 = vmatpush1.msra.mxu0 0.0
    %2968 = vmatprep.subr.mxu0 0.0
    %2969 = vmatpush1.msra.mxu0 0.0
    %2970 = vmatprep.subr.mxu0 0.0
    %2971 = vmatpush1.msra.mxu0 0.0
    %2972 = vmatprep.subr.mxu0 0.0
    %2973 = vmatpush1.msra.mxu0 0.0
    %2974 = vmatprep.subr.mxu0 0.0
    %2975 = vmatpush1.msra.mxu0 0.0
    %2976 = vmatprep.subr.mxu0 0.0
    %2977 = vmatpush1.msra.mxu0 0.0
    %2978 = vmatprep.subr.mxu0 0.0
    %2979 = vmatpush1.msra.mxu0 0.0
    %2980 = vmatprep.subr.mxu0 0.0
    %2981 = vmatpush1.msra.mxu0 0.0
    %2982 = vmatprep.subr.mxu0 0.0
    %2983 = vmatpush1.msra.mxu0 0.0
    %2984 = vmatprep.subr.mxu0 0.0
    %2985 = vmatpush1.msra.mxu0 0.0
    %2986 = vmatprep.subr.mxu0 0.0
    %2987 = vmatpush1.msra.mxu0 0.0
    %2988 = vmatprep.subr.mxu0 0.0
    %2989 = vmatpush1.msra.mxu0 0.0
    %2990 = vmatprep.subr.mxu0 0.0
    %2991 = vmatpush1.msra.mxu0 0.0
    %2992 = vmatprep.subr.mxu0 0.0
    %2993 = vmatpush1.msra.mxu0 0.0
    %2994 = vmatprep.subr.mxu0 0.0
    %2995 = vmatpush1.msra.mxu0 0.0
    %2996 = vmatprep.mubr.f32.mxu0 0.0
    %v2997 = vand.u32 %v2655, 4294901760
    %v2998 = vsub.f32 %v2655, %v2997
    %2999 = vmatmul.mubr.f32.gmra.mrb[0].mxu0 %v2998
    %v3000 = vpop.f32.mrb[0].mxu0
    %v3001 = vadd.f32 %v2897, %v3000
    %v3002 = vpop.f32.mrb[0].mxu0
    %3003 = vdwg.mxu0
    %3004 = vmatprep.subr.mxu0 0.0
    %v3005 = vand.u32 %v64, 4294901760
    %3006 = vmatpush1.msra.mxu0 %v3005
    %3007 = vmatprep.subr.mxu0 0.0
    %v3008 = vand.u32 %v65, 4294901760
    %3009 = vmatpush1.msra.mxu0 %v3008
    %3010 = vmatprep.subr.mxu0 0.0
    %v3011 = vand.u32 %v66, 4294901760
    %3012 = vmatpush1.msra.mxu0 %v3011
    %3013 = vmatprep.subr.mxu0 0.0
    %v3014 = vand.u32 %v67, 4294901760
    %3015 = vmatpush1.msra.mxu0 %v3014
    %3016 = vmatprep.subr.mxu0 0.0
    %v3017 = vand.u32 %v68, 4294901760
    %3018 = vmatpush1.msra.mxu0 %v3017
    %3019 = vmatprep.subr.mxu0 0.0
    %v3020 = vand.u32 %v69, 4294901760
    %3021 = vmatpush1.msra.mxu0 %v3020
    %3022 = vmatprep.subr.mxu0 0.0
    %v3023 = vand.u32 %v70, 4294901760
    %3024 = vmatpush1.msra.mxu0 %v3023
    %3025 = vmatprep.subr.mxu0 0.0
    %v3026 = vand.u32 %v71, 4294901760
    %3027 = vmatpush1.msra.mxu0 %v3026
    %3028 = vmatprep.subr.mxu0 0.0
    %v3029 = vand.u32 %v72, 4294901760
    %3030 = vmatpush1.msra.mxu0 %v3029
    %3031 = vmatprep.subr.mxu0 0.0
    %v3032 = vand.u32 %v73, 4294901760
    %3033 = vmatpush1.msra.mxu0 %v3032
    %3034 = vmatprep.subr.mxu0 0.0
    %v3035 = vand.u32 %v74, 4294901760
    %3036 = vmatpush1.msra.mxu0 %v3035
    %3037 = vmatprep.subr.mxu0 0.0
    %v3038 = vand.u32 %v75, 4294901760
    %3039 = vmatpush1.msra.mxu0 %v3038
    %3040 = vmatprep.subr.mxu0 0.0
    %v3041 = vand.u32 %v76, 4294901760
    %3042 = vmatpush1.msra.mxu0 %v3041
    %3043 = vmatprep.subr.mxu0 0.0
    %v3044 = vand.u32 %v77, 4294901760
    %3045 = vmatpush1.msra.mxu0 %v3044
    %3046 = vmatprep.subr.mxu0 0.0
    %v3047 = vand.u32 %v78, 4294901760
    %3048 = vmatpush1.msra.mxu0 %v3047
    %3049 = vmatprep.subr.mxu0 0.0
    %v3050 = vand.u32 %v79, 4294901760
    %3051 = vmatpush1.msra.mxu0 %v3050
    %3052 = vmatprep.subr.mxu0 0.0
    %3053 = vmatpush1.msra.mxu0 0.0
    %3054 = vmatprep.subr.mxu0 0.0
    %3055 = vmatpush1.msra.mxu0 0.0
    %3056 = vmatprep.subr.mxu0 0.0
    %3057 = vmatpush1.msra.mxu0 0.0
    %3058 = vmatprep.subr.mxu0 0.0
    %3059 = vmatpush1.msra.mxu0 0.0
    %3060 = vmatprep.subr.mxu0 0.0
    %3061 = vmatpush1.msra.mxu0 0.0
    %3062 = vmatprep.subr.mxu0 0.0
    %3063 = vmatpush1.msra.mxu0 0.0
    %3064 = vmatprep.subr.mxu0 0.0
    %3065 = vmatpush1.msra.mxu0 0.0
    %3066 = vmatprep.subr.mxu0 0.0
    %3067 = vmatpush1.msra.mxu0 0.0
    %3068 = vmatprep.subr.mxu0 0.0
    %3069 = vmatpush1.msra.mxu0 0.0
    %3070 = vmatprep.subr.mxu0 0.0
    %3071 = vmatpush1.msra.mxu0 0.0
    %3072 = vmatprep.subr.mxu0 0.0
    %3073 = vmatpush1.msra.mxu0 0.0
    %3074 = vmatprep.subr.mxu0 0.0
    %3075 = vmatpush1.msra.mxu0 0.0
    %3076 = vmatprep.subr.mxu0 0.0
    %3077 = vmatpush1.msra.mxu0 0.0
    %3078 = vmatprep.subr.mxu0 0.0
    %3079 = vmatpush1.msra.mxu0 0.0
    %3080 = vmatprep.subr.mxu0 0.0
    %3081 = vmatpush1.msra.mxu0 0.0
    %3082 = vmatprep.subr.mxu0 0.0
    %3083 = vmatpush1.msra.mxu0 0.0
    %3084 = vmatprep.mubr.f32.mxu0 0.0
    %v3085 = vand.u32 %v2655, 4294901760
    %v3086 = vsub.f32 %v2655, %v3085
    %v3087 = vand.u32 %v3086, 4294901760
    %3088 = vmatmul.mubr.f32.gmra.mrb[0].mxu0 %v3087
    %v3089 = vpop.f32.mrb[0].mxu0
    %v3090 = vadd.f32 %v3001, %v3089
    %v3091 = vpop.f32.mrb[0].mxu0
    %3092 = vdwg.mxu0
    %3093 = vmatprep.subr.mxu0 0.0
    %v3094 = vand.u32 %v64, 4294901760
    %v3095 = vsub.f32 %v64, %v3094
    %v3096 = vand.u32 %v3095, 4294901760
    %3097 = vmatpush1.msra.mxu0 %v3096
    %3098 = vmatprep.subr.mxu0 0.0
    %v3099 = vand.u32 %v65, 4294901760
    %v3100 = vsub.f32 %v65, %v3099
    %v3101 = vand.u32 %v3100, 4294901760
    %3102 = vmatpush1.msra.mxu0 %v3101
    %3103 = vmatprep.subr.mxu0 0.0
    %v3104 = vand.u32 %v66, 4294901760
    %v3105 = vsub.f32 %v66, %v3104
    %v3106 = vand.u32 %v3105, 4294901760
    %3107 = vmatpush1.msra.mxu0 %v3106
    %3108 = vmatprep.subr.mxu0 0.0
    %v3109 = vand.u32 %v67, 4294901760
    %v3110 = vsub.f32 %v67, %v3109
    %v3111 = vand.u32 %v3110, 4294901760
    %3112 = vmatpush1.msra.mxu0 %v3111
    %3113 = vmatprep.subr.mxu0 0.0
    %v3114 = vand.u32 %v68, 4294901760
    %v3115 = vsub.f32 %v68, %v3114
    %v3116 = vand.u32 %v3115, 4294901760
    %3117 = vmatpush1.msra.mxu0 %v3116
    %3118 = vmatprep.subr.mxu0 0.0
    %v3119 = vand.u32 %v69, 4294901760
    %v3120 = vsub.f32 %v69, %v3119
    %v3121 = vand.u32 %v3120, 4294901760
    %3122 = vmatpush1.msra.mxu0 %v3121
    %3123 = vmatprep.subr.mxu0 0.0
    %v3124 = vand.u32 %v70, 4294901760
    %v3125 = vsub.f32 %v70, %v3124
    %v3126 = vand.u32 %v3125, 4294901760
    %3127 = vmatpush1.msra.mxu0 %v3126
    %3128 = vmatprep.subr.mxu0 0.0
    %v3129 = vand.u32 %v71, 4294901760
    %v3130 = vsub.f32 %v71, %v3129
    %v3131 = vand.u32 %v3130, 4294901760
    %3132 = vmatpush1.msra.mxu0 %v3131
    %3133 = vmatprep.subr.mxu0 0.0
    %v3134 = vand.u32 %v72, 4294901760
    %v3135 = vsub.f32 %v72, %v3134
    %v3136 = vand.u32 %v3135, 4294901760
    %3137 = vmatpush1.msra.mxu0 %v3136
    %3138 = vmatprep.subr.mxu0 0.0
    %v3139 = vand.u32 %v73, 4294901760
    %v3140 = vsub.f32 %v73, %v3139
    %v3141 = vand.u32 %v3140, 4294901760
    %3142 = vmatpush1.msra.mxu0 %v3141
    %3143 = vmatprep.subr.mxu0 0.0
    %v3144 = vand.u32 %v74, 4294901760
    %v3145 = vsub.f32 %v74, %v3144
    %v3146 = vand.u32 %v3145, 4294901760
    %3147 = vmatpush1.msra.mxu0 %v3146
    %3148 = vmatprep.subr.mxu0 0.0
    %v3149 = vand.u32 %v75, 4294901760
    %v3150 = vsub.f32 %v75, %v3149
    %v3151 = vand.u32 %v3150, 4294901760
    %3152 = vmatpush1.msra.mxu0 %v3151
    %3153 = vmatprep.subr.mxu0 0.0
    %v3154 = vand.u32 %v76, 4294901760
    %v3155 = vsub.f32 %v76, %v3154
    %v3156 = vand.u32 %v3155, 4294901760
    %3157 = vmatpush1.msra.mxu0 %v3156
    %3158 = vmatprep.subr.mxu0 0.0
    %v3159 = vand.u32 %v77, 4294901760
    %v3160 = vsub.f32 %v77, %v3159
    %v3161 = vand.u32 %v3160, 4294901760
    %3162 = vmatpush1.msra.mxu0 %v3161
    %3163 = vmatprep.subr.mxu0 0.0
    %v3164 = vand.u32 %v78, 4294901760
    %v3165 = vsub.f32 %v78, %v3164
    %v3166 = vand.u32 %v3165, 4294901760
    %3167 = vmatpush1.msra.mxu0 %v3166
    %3168 = vmatprep.subr.mxu0 0.0
    %v3169 = vand.u32 %v79, 4294901760
    %v3170 = vsub.f32 %v79, %v3169
    %v3171 = vand.u32 %v3170, 4294901760
    %3172 = vmatpush1.msra.mxu0 %v3171
    %3173 = vmatprep.subr.mxu0 0.0
    %3174 = vmatpush1.msra.mxu0 0.0
    %3175 = vmatprep.subr.mxu0 0.0
    %3176 = vmatpush1.msra.mxu0 0.0
    %3177 = vmatprep.subr.mxu0 0.0
    %3178 = vmatpush1.msra.mxu0 0.0
    %3179 = vmatprep.subr.mxu0 0.0
    %3180 = vmatpush1.msra.mxu0 0.0
    %3181 = vmatprep.subr.mxu0 0.0
    %3182 = vmatpush1.msra.mxu0 0.0
    %3183 = vmatprep.subr.mxu0 0.0
    %3184 = vmatpush1.msra.mxu0 0.0
    %3185 = vmatprep.subr.mxu0 0.0
    %3186 = vmatpush1.msra.mxu0 0.0
    %3187 = vmatprep.subr.mxu0 0.0
    %3188 = vmatpush1.msra.mxu0 0.0
    %3189 = vmatprep.subr.mxu0 0.0
    %3190 = vmatpush1.msra.mxu0 0.0
    %3191 = vmatprep.subr.mxu0 0.0
    %3192 = vmatpush1.msra.mxu0 0.0
    %3193 = vmatprep.subr.mxu0 0.0
    %3194 = vmatpush1.msra.mxu0 0.0
    %3195 = vmatprep.subr.mxu0 0.0
    %3196 = vmatpush1.msra.mxu0 0.0
    %3197 = vmatprep.subr.mxu0 0.0
    %3198 = vmatpush1.msra.mxu0 0.0
    %3199 = vmatprep.subr.mxu0 0.0
    %3200 = vmatpush1.msra.mxu0 0.0
    %3201 = vmatprep.subr.mxu0 0.0
    %3202 = vmatpush1.msra.mxu0 0.0
    %3203 = vmatprep.subr.mxu0 0.0
    %3204 = vmatpush1.msra.mxu0 0.0
    %3205 = vmatprep.mubr.f32.mxu0 0.0
    %v3206 = vand.u32 %v2655, 4294901760
    %3207 = vmatmul.mubr.f32.gmra.mrb[0].mxu0 %v3206
    %v3208 = vpop.f32.mrb[0].mxu0
    %v3209 = vadd.f32 %v3090, %v3208
    %v3210 = vpop.f32.mrb[0].mxu0
    %3211 = vdwg.mxu0
    %3212 = vmatprep.subr.mxu0 0.0
    %v3213 = vand.u32 %v64, 4294901760
    %3214 = vmatpush1.msra.mxu0 %v3213
    %3215 = vmatprep.subr.mxu0 0.0
    %v3216 = vand.u32 %v65, 4294901760
    %3217 = vmatpush1.msra.mxu0 %v3216
    %3218 = vmatprep.subr.mxu0 0.0
    %v3219 = vand.u32 %v66, 4294901760
    %3220 = vmatpush1.msra.mxu0 %v3219
    %3221 = vmatprep.subr.mxu0 0.0
    %v3222 = vand.u32 %v67, 4294901760
    %3223 = vmatpush1.msra.mxu0 %v3222
    %3224 = vmatprep.subr.mxu0 0.0
    %v3225 = vand.u32 %v68, 4294901760
    %3226 = vmatpush1.msra.mxu0 %v3225
    %3227 = vmatprep.subr.mxu0 0.0
    %v3228 = vand.u32 %v69, 4294901760
    %3229 = vmatpush1.msra.mxu0 %v3228
    %3230 = vmatprep.subr.mxu0 0.0
    %v3231 = vand.u32 %v70, 4294901760
    %3232 = vmatpush1.msra.mxu0 %v3231
    %3233 = vmatprep.subr.mxu0 0.0
    %v3234 = vand.u32 %v71, 4294901760
    %3235 = vmatpush1.msra.mxu0 %v3234
    %3236 = vmatprep.subr.mxu0 0.0
    %v3237 = vand.u32 %v72, 4294901760
    %3238 = vmatpush1.msra.mxu0 %v3237
    %3239 = vmatprep.subr.mxu0 0.0
    %v3240 = vand.u32 %v73, 4294901760
    %3241 = vmatpush1.msra.mxu0 %v3240
    %3242 = vmatprep.subr.mxu0 0.0
    %v3243 = vand.u32 %v74, 4294901760
    %3244 = vmatpush1.msra.mxu0 %v3243
    %3245 = vmatprep.subr.mxu0 0.0
    %v3246 = vand.u32 %v75, 4294901760
    %3247 = vmatpush1.msra.mxu0 %v3246
    %3248 = vmatprep.subr.mxu0 0.0
    %v3249 = vand.u32 %v76, 4294901760
    %3250 = vmatpush1.msra.mxu0 %v3249
    %3251 = vmatprep.subr.mxu0 0.0
    %v3252 = vand.u32 %v77, 4294901760
    %3253 = vmatpush1.msra.mxu0 %v3252
    %3254 = vmatprep.subr.mxu0 0.0
    %v3255 = vand.u32 %v78, 4294901760
    %3256 = vmatpush1.msra.mxu0 %v3255
    %3257 = vmatprep.subr.mxu0 0.0
    %v3258 = vand.u32 %v79, 4294901760
    %3259 = vmatpush1.msra.mxu0 %v3258
    %3260 = vmatprep.subr.mxu0 0.0
    %3261 = vmatpush1.msra.mxu0 0.0
    %3262 = vmatprep.subr.mxu0 0.0
    %3263 = vmatpush1.msra.mxu0 0.0
    %3264 = vmatprep.subr.mxu0 0.0
    %3265 = vmatpush1.msra.mxu0 0.0
    %3266 = vmatprep.subr.mxu0 0.0
    %3267 = vmatpush1.msra.mxu0 0.0
    %3268 = vmatprep.subr.mxu0 0.0
    %3269 = vmatpush1.msra.mxu0 0.0
    %3270 = vmatprep.subr.mxu0 0.0
    %3271 = vmatpush1.msra.mxu0 0.0
    %3272 = vmatprep.subr.mxu0 0.0
    %3273 = vmatpush1.msra.mxu0 0.0
    %3274 = vmatprep.subr.mxu0 0.0
    %3275 = vmatpush1.msra.mxu0 0.0
    %3276 = vmatprep.subr.mxu0 0.0
    %3277 = vmatpush1.msra.mxu0 0.0
    %3278 = vmatprep.subr.mxu0 0.0
    %3279 = vmatpush1.msra.mxu0 0.0
    %3280 = vmatprep.subr.mxu0 0.0
    %3281 = vmatpush1.msra.mxu0 0.0
    %3282 = vmatprep.subr.mxu0 0.0
    %3283 = vmatpush1.msra.mxu0 0.0
    %3284 = vmatprep.subr.mxu0 0.0
    %3285 = vmatpush1.msra.mxu0 0.0
    %3286 = vmatprep.subr.mxu0 0.0
    %3287 = vmatpush1.msra.mxu0 0.0
    %3288 = vmatprep.subr.mxu0 0.0
    %3289 = vmatpush1.msra.mxu0 0.0
    %3290 = vmatprep.subr.mxu0 0.0
    %3291 = vmatpush1.msra.mxu0 0.0
    %3292 = vmatprep.mubr.f32.mxu0 0.0
    %v3293 = vand.u32 %v2655, 4294901760
    %3294 = vmatmul.mubr.f32.gmra.mrb[0].mxu0 %v3293
    %v3295 = vpop.f32.mrb[0].mxu0
    %v3296 = vadd.f32 %v3209, %v3295
    %v3297 = vpop.f32.mrb[0].mxu0
    %3298 = vdwg.mxu0
    %v3299 = vtanh.pop %v3296
    %s3300 = scalar_lea.vmem [#allocation3], 40
    %v3301 = vld [vmem:[%s3300] sm:$0xff]
    %3302 = vmatprep.subr.mxu0 0.0
    %v3303 = vand.u32 %v64, 4294901760
    %3304 = vmatpush1.msra.mxu0 %v3303
    %3305 = vmatprep.subr.mxu0 0.0
    %v3306 = vand.u32 %v65, 4294901760
    %3307 = vmatpush1.msra.mxu0 %v3306
    %3308 = vmatprep.subr.mxu0 0.0
    %v3309 = vand.u32 %v66, 4294901760
    %3310 = vmatpush1.msra.mxu0 %v3309
    %3311 = vmatprep.subr.mxu0 0.0
    %v3312 = vand.u32 %v67, 4294901760
    %3313 = vmatpush1.msra.mxu0 %v3312
    %3314 = vmatprep.subr.mxu0 0.0
    %v3315 = vand.u32 %v68, 4294901760
    %3316 = vmatpush1.msra.mxu0 %v3315
    %3317 = vmatprep.subr.mxu0 0.0
    %v3318 = vand.u32 %v69, 4294901760
    %3319 = vmatpush1.msra.mxu0 %v3318
    %3320 = vmatprep.subr.mxu0 0.0
    %v3321 = vand.u32 %v70, 4294901760
    %3322 = vmatpush1.msra.mxu0 %v3321
    %3323 = vmatprep.subr.mxu0 0.0
    %v3324 = vand.u32 %v71, 4294901760
    %3325 = vmatpush1.msra.mxu0 %v3324
    %3326 = vmatprep.subr.mxu0 0.0
    %v3327 = vand.u32 %v72, 4294901760
    %3328 = vmatpush1.msra.mxu0 %v3327
    %3329 = vmatprep.subr.mxu0 0.0
    %v3330 = vand.u32 %v73, 4294901760
    %3331 = vmatpush1.msra.mxu0 %v3330
    %3332 = vmatprep.subr.mxu0 0.0
    %v3333 = vand.u32 %v74, 4294901760
    %3334 = vmatpush1.msra.mxu0 %v3333
    %3335 = vmatprep.subr.mxu0 0.0
    %v3336 = vand.u32 %v75, 4294901760
    %3337 = vmatpush1.msra.mxu0 %v3336
    %3338 = vmatprep.subr.mxu0 0.0
    %v3339 = vand.u32 %v76, 4294901760
    %3340 = vmatpush1.msra.mxu0 %v3339
    %3341 = vmatprep.subr.mxu0 0.0
    %v3342 = vand.u32 %v77, 4294901760
    %3343 = vmatpush1.msra.mxu0 %v3342
    %3344 = vmatprep.subr.mxu0 0.0
    %v3345 = vand.u32 %v78, 4294901760
    %3346 = vmatpush1.msra.mxu0 %v3345
    %3347 = vmatprep.subr.mxu0 0.0
    %v3348 = vand.u32 %v79, 4294901760
    %3349 = vmatpush1.msra.mxu0 %v3348
    %3350 = vmatprep.subr.mxu0 0.0
    %3351 = vmatpush1.msra.mxu0 0.0
    %3352 = vmatprep.subr.mxu0 0.0
    %3353 = vmatpush1.msra.mxu0 0.0
    %3354 = vmatprep.subr.mxu0 0.0
    %3355 = vmatpush1.msra.mxu0 0.0
    %3356 = vmatprep.subr.mxu0 0.0
    %3357 = vmatpush1.msra.mxu0 0.0
    %3358 = vmatprep.subr.mxu0 0.0
    %3359 = vmatpush1.msra.mxu0 0.0
    %3360 = vmatprep.subr.mxu0 0.0
    %3361 = vmatpush1.msra.mxu0 0.0
    %3362 = vmatprep.subr.mxu0 0.0
    %3363 = vmatpush1.msra.mxu0 0.0
    %3364 = vmatprep.subr.mxu0 0.0
    %3365 = vmatpush1.msra.mxu0 0.0
    %3366 = vmatprep.subr.mxu0 0.0
    %3367 = vmatpush1.msra.mxu0 0.0
    %3368 = vmatprep.subr.mxu0 0.0
    %3369 = vmatpush1.msra.mxu0 0.0
    %3370 = vmatprep.subr.mxu0 0.0
    %3371 = vmatpush1.msra.mxu0 0.0
    %3372 = vmatprep.subr.mxu0 0.0
    %3373 = vmatpush1.msra.mxu0 0.0
    %3374 = vmatprep.subr.mxu0 0.0
    %3375 = vmatpush1.msra.mxu0 0.0
    %3376 = vmatprep.subr.mxu0 0.0
    %3377 = vmatpush1.msra.mxu0 0.0
    %3378 = vmatprep.subr.mxu0 0.0
    %3379 = vmatpush1.msra.mxu0 0.0
    %3380 = vmatprep.subr.mxu0 0.0
    %3381 = vmatpush1.msra.mxu0 0.0
    %3382 = vmatprep.mubr.f32.mxu0 0.0
    %v3383 = vand.u32 %v3299, 4294901760
    %v3384 = vsub.f32 %v3299, %v3383
    %v3385 = vand.u32 %v3384, 4294901760
    %v3386 = vsub.f32 %v3384, %v3385
    %v3387 = vand.u32 %v3386, 4294901760
    %3388 = vmatmul.mubr.f32.gmra.mrb[0].mxu0 %v3387
    %v3389 = vpop.f32.mrb[0].mxu0
    %v3390 = vadd.f32 %v3301, %v3389
    %v3391 = vpop.f32.mrb[0].mxu0
    %3392 = vdwg.mxu0
    %3393 = vmatprep.subr.mxu0 0.0
    %v3394 = vand.u32 %v64, 4294901760
    %v3395 = vsub.f32 %v64, %v3394
    %v3396 = vand.u32 %v3395, 4294901760
    %v3397 = vsub.f32 %v3395, %v3396
    %v3398 = vand.u32 %v3397, 4294901760
    %3399 = vmatpush1.msra.mxu0 %v3398
    %3400 = vmatprep.subr.mxu0 0.0
    %v3401 = vand.u32 %v65, 4294901760
    %v3402 = vsub.f32 %v65, %v3401
    %v3403 = vand.u32 %v3402, 4294901760
    %v3404 = vsub.f32 %v3402, %v3403
    %v3405 = vand.u32 %v3404, 4294901760
    %3406 = vmatpush1.msra.mxu0 %v3405
    %3407 = vmatprep.subr.mxu0 0.0
    %v3408 = vand.u32 %v66, 4294901760
    %v3409 = vsub.f32 %v66, %v3408
    %v3410 = vand.u32 %v3409, 4294901760
    %v3411 = vsub.f32 %v3409, %v3410
    %v3412 = vand.u32 %v3411, 4294901760
    %3413 = vmatpush1.msra.mxu0 %v3412
    %3414 = vmatprep.subr.mxu0 0.0
    %v3415 = vand.u32 %v67, 4294901760
    %v3416 = vsub.f32 %v67, %v3415
    %v3417 = vand.u32 %v3416, 4294901760
    %v3418 = vsub.f32 %v3416, %v3417
    %v3419 = vand.u32 %v3418, 4294901760
    %3420 = vmatpush1.msra.mxu0 %v3419
    %3421 = vmatprep.subr.mxu0 0.0
    %v3422 = vand.u32 %v68, 4294901760
    %v3423 = vsub.f32 %v68, %v3422
    %v3424 = vand.u32 %v3423, 4294901760
    %v3425 = vsub.f32 %v3423, %v3424
    %v3426 = vand.u32 %v3425, 4294901760
    %3427 = vmatpush1.msra.mxu0 %v3426
    %3428 = vmatprep.subr.mxu0 0.0
    %v3429 = vand.u32 %v69, 4294901760
    %v3430 = vsub.f32 %v69, %v3429
    %v3431 = vand.u32 %v3430, 4294901760
    %v3432 = vsub.f32 %v3430, %v3431
    %v3433 = vand.u32 %v3432, 4294901760
    %3434 = vmatpush1.msra.mxu0 %v3433
    %3435 = vmatprep.subr.mxu0 0.0
    %v3436 = vand.u32 %v70, 4294901760
    %v3437 = vsub.f32 %v70, %v3436
    %v3438 = vand.u32 %v3437, 4294901760
    %v3439 = vsub.f32 %v3437, %v3438
    %v3440 = vand.u32 %v3439, 4294901760
    %3441 = vmatpush1.msra.mxu0 %v3440
    %3442 = vmatprep.subr.mxu0 0.0
    %v3443 = vand.u32 %v71, 4294901760
    %v3444 = vsub.f32 %v71, %v3443
    %v3445 = vand.u32 %v3444, 4294901760
    %v3446 = vsub.f32 %v3444, %v3445
    %v3447 = vand.u32 %v3446, 4294901760
    %3448 = vmatpush1.msra.mxu0 %v3447
    %3449 = vmatprep.subr.mxu0 0.0
    %v3450 = vand.u32 %v72, 4294901760
    %v3451 = vsub.f32 %v72, %v3450
    %v3452 = vand.u32 %v3451, 4294901760
    %v3453 = vsub.f32 %v3451, %v3452
    %v3454 = vand.u32 %v3453, 4294901760
    %3455 = vmatpush1.msra.mxu0 %v3454
    %3456 = vmatprep.subr.mxu0 0.0
    %v3457 = vand.u32 %v73, 4294901760
    %v3458 = vsub.f32 %v73, %v3457
    %v3459 = vand.u32 %v3458, 4294901760
    %v3460 = vsub.f32 %v3458, %v3459
    %v3461 = vand.u32 %v3460, 4294901760
    %3462 = vmatpush1.msra.mxu0 %v3461
    %3463 = vmatprep.subr.mxu0 0.0
    %v3464 = vand.u32 %v74, 4294901760
    %v3465 = vsub.f32 %v74, %v3464
    %v3466 = vand.u32 %v3465, 4294901760
    %v3467 = vsub.f32 %v3465, %v3466
    %v3468 = vand.u32 %v3467, 4294901760
    %3469 = vmatpush1.msra.mxu0 %v3468
    %3470 = vmatprep.subr.mxu0 0.0
    %v3471 = vand.u32 %v75, 4294901760
    %v3472 = vsub.f32 %v75, %v3471
    %v3473 = vand.u32 %v3472, 4294901760
    %v3474 = vsub.f32 %v3472, %v3473
    %v3475 = vand.u32 %v3474, 4294901760
    %3476 = vmatpush1.msra.mxu0 %v3475
    %3477 = vmatprep.subr.mxu0 0.0
    %v3478 = vand.u32 %v76, 4294901760
    %v3479 = vsub.f32 %v76, %v3478
    %v3480 = vand.u32 %v3479, 4294901760
    %v3481 = vsub.f32 %v3479, %v3480
    %v3482 = vand.u32 %v3481, 4294901760
    %3483 = vmatpush1.msra.mxu0 %v3482
    %3484 = vmatprep.subr.mxu0 0.0
    %v3485 = vand.u32 %v77, 4294901760
    %v3486 = vsub.f32 %v77, %v3485
    %v3487 = vand.u32 %v3486, 4294901760
    %v3488 = vsub.f32 %v3486, %v3487
    %v3489 = vand.u32 %v3488, 4294901760
    %3490 = vmatpush1.msra.mxu0 %v3489
    %3491 = vmatprep.subr.mxu0 0.0
    %v3492 = vand.u32 %v78, 4294901760
    %v3493 = vsub.f32 %v78, %v3492
    %v3494 = vand.u32 %v3493, 4294901760
    %v3495 = vsub.f32 %v3493, %v3494
    %v3496 = vand.u32 %v3495, 4294901760
    %3497 = vmatpush1.msra.mxu0 %v3496
    %3498 = vmatprep.subr.mxu0 0.0
    %v3499 = vand.u32 %v79, 4294901760
    %v3500 = vsub.f32 %v79, %v3499
    %v3501 = vand.u32 %v3500, 4294901760
    %v3502 = vsub.f32 %v3500, %v3501
    %v3503 = vand.u32 %v3502, 4294901760
    %3504 = vmatpush1.msra.mxu0 %v3503
    %3505 = vmatprep.subr.mxu0 0.0
    %3506 = vmatpush1.msra.mxu0 0.0
    %3507 = vmatprep.subr.mxu0 0.0
    %3508 = vmatpush1.msra.mxu0 0.0
    %3509 = vmatprep.subr.mxu0 0.0
    %3510 = vmatpush1.msra.mxu0 0.0
    %3511 = vmatprep.subr.mxu0 0.0
    %3512 = vmatpush1.msra.mxu0 0.0
    %3513 = vmatprep.subr.mxu0 0.0
    %3514 = vmatpush1.msra.mxu0 0.0
    %3515 = vmatprep.subr.mxu0 0.0
    %3516 = vmatpush1.msra.mxu0 0.0
    %3517 = vmatprep.subr.mxu0 0.0
    %3518 = vmatpush1.msra.mxu0 0.0
    %3519 = vmatprep.subr.mxu0 0.0
    %3520 = vmatpush1.msra.mxu0 0.0
    %3521 = vmatprep.subr.mxu0 0.0
    %3522 = vmatpush1.msra.mxu0 0.0
    %3523 = vmatprep.subr.mxu0 0.0
    %3524 = vmatpush1.msra.mxu0 0.0
    %3525 = vmatprep.subr.mxu0 0.0
    %3526 = vmatpush1.msra.mxu0 0.0
    %3527 = vmatprep.subr.mxu0 0.0
    %3528 = vmatpush1.msra.mxu0 0.0
    %3529 = vmatprep.subr.mxu0 0.0
    %3530 = vmatpush1.msra.mxu0 0.0
    %3531 = vmatprep.subr.mxu0 0.0
    %3532 = vmatpush1.msra.mxu0 0.0
    %3533 = vmatprep.subr.mxu0 0.0
    %3534 = vmatpush1.msra.mxu0 0.0
    %3535 = vmatprep.subr.mxu0 0.0
    %3536 = vmatpush1.msra.mxu0 0.0
    %3537 = vmatprep.mubr.f32.mxu0 0.0
    %v3538 = vand.u32 %v3299, 4294901760
    %3539 = vmatmul.mubr.f32.gmra.mrb[0].mxu0 %v3538
    %v3540 = vpop.f32.mrb[0].mxu0
    %v3541 = vadd.f32 %v3390, %v3540
    %v3542 = vpop.f32.mrb[0].mxu0
    %3543 = vdwg.mxu0
    %3544 = vmatprep.subr.mxu0 0.0
    %v3545 = vand.u32 %v64, 4294901760
    %v3546 = vsub.f32 %v64, %v3545
    %3547 = vmatpush1.msra.mxu0 %v3546
    %3548 = vmatprep.subr.mxu0 0.0
    %v3549 = vand.u32 %v65, 4294901760
    %v3550 = vsub.f32 %v65, %v3549
    %3551 = vmatpush1.msra.mxu0 %v3550
    %3552 = vmatprep.subr.mxu0 0.0
    %v3553 = vand.u32 %v66, 4294901760
    %v3554 = vsub.f32 %v66, %v3553
    %3555 = vmatpush1.msra.mxu0 %v3554
    %3556 = vmatprep.subr.mxu0 0.0
    %v3557 = vand.u32 %v67, 4294901760
    %v3558 = vsub.f32 %v67, %v3557
    %3559 = vmatpush1.msra.mxu0 %v3558
    %3560 = vmatprep.subr.mxu0 0.0
    %v3561 = vand.u32 %v68, 4294901760
    %v3562 = vsub.f32 %v68, %v3561
    %3563 = vmatpush1.msra.mxu0 %v3562
    %3564 = vmatprep.subr.mxu0 0.0
    %v3565 = vand.u32 %v69, 4294901760
    %v3566 = vsub.f32 %v69, %v3565
    %3567 = vmatpush1.msra.mxu0 %v3566
    %3568 = vmatprep.subr.mxu0 0.0
    %v3569 = vand.u32 %v70, 4294901760
    %v3570 = vsub.f32 %v70, %v3569
    %3571 = vmatpush1.msra.mxu0 %v3570
    %3572 = vmatprep.subr.mxu0 0.0
    %v3573 = vand.u32 %v71, 4294901760
    %v3574 = vsub.f32 %v71, %v3573
    %3575 = vmatpush1.msra.mxu0 %v3574
    %3576 = vmatprep.subr.mxu0 0.0
    %v3577 = vand.u32 %v72, 4294901760
    %v3578 = vsub.f32 %v72, %v3577
    %3579 = vmatpush1.msra.mxu0 %v3578
    %3580 = vmatprep.subr.mxu0 0.0
    %v3581 = vand.u32 %v73, 4294901760
    %v3582 = vsub.f32 %v73, %v3581
    %3583 = vmatpush1.msra.mxu0 %v3582
    %3584 = vmatprep.subr.mxu0 0.0
    %v3585 = vand.u32 %v74, 4294901760
    %v3586 = vsub.f32 %v74, %v3585
    %3587 = vmatpush1.msra.mxu0 %v3586
    %3588 = vmatprep.subr.mxu0 0.0
    %v3589 = vand.u32 %v75, 4294901760
    %v3590 = vsub.f32 %v75, %v3589
    %3591 = vmatpush1.msra.mxu0 %v3590
    %3592 = vmatprep.subr.mxu0 0.0
    %v3593 = vand.u32 %v76, 4294901760
    %v3594 = vsub.f32 %v76, %v3593
    %3595 = vmatpush1.msra.mxu0 %v3594
    %3596 = vmatprep.subr.mxu0 0.0
    %v3597 = vand.u32 %v77, 4294901760
    %v3598 = vsub.f32 %v77, %v3597
    %3599 = vmatpush1.msra.mxu0 %v3598
    %3600 = vmatprep.subr.mxu0 0.0
    %v3601 = vand.u32 %v78, 4294901760
    %v3602 = vsub.f32 %v78, %v3601
    %3603 = vmatpush1.msra.mxu0 %v3602
    %3604 = vmatprep.subr.mxu0 0.0
    %v3605 = vand.u32 %v79, 4294901760
    %v3606 = vsub.f32 %v79, %v3605
    %3607 = vmatpush1.msra.mxu0 %v3606
    %3608 = vmatprep.subr.mxu0 0.0
    %3609 = vmatpush1.msra.mxu0 0.0
    %3610 = vmatprep.subr.mxu0 0.0
    %3611 = vmatpush1.msra.mxu0 0.0
    %3612 = vmatprep.subr.mxu0 0.0
    %3613 = vmatpush1.msra.mxu0 0.0
    %3614 = vmatprep.subr.mxu0 0.0
    %3615 = vmatpush1.msra.mxu0 0.0
    %3616 = vmatprep.subr.mxu0 0.0
    %3617 = vmatpush1.msra.mxu0 0.0
    %3618 = vmatprep.subr.mxu0 0.0
    %3619 = vmatpush1.msra.mxu0 0.0
    %3620 = vmatprep.subr.mxu0 0.0
    %3621 = vmatpush1.msra.mxu0 0.0
    %3622 = vmatprep.subr.mxu0 0.0
    %3623 = vmatpush1.msra.mxu0 0.0
    %3624 = vmatprep.subr.mxu0 0.0
    %3625 = vmatpush1.msra.mxu0 0.0
    %3626 = vmatprep.subr.mxu0 0.0
    %3627 = vmatpush1.msra.mxu0 0.0
    %3628 = vmatprep.subr.mxu0 0.0
    %3629 = vmatpush1.msra.mxu0 0.0
    %3630 = vmatprep.subr.mxu0 0.0
    %3631 = vmatpush1.msra.mxu0 0.0
    %3632 = vmatprep.subr.mxu0 0.0
    %3633 = vmatpush1.msra.mxu0 0.0
    %3634 = vmatprep.subr.mxu0 0.0
    %3635 = vmatpush1.msra.mxu0 0.0
    %3636 = vmatprep.subr.mxu0 0.0
    %3637 = vmatpush1.msra.mxu0 0.0
    %3638 = vmatprep.subr.mxu0 0.0
    %3639 = vmatpush1.msra.mxu0 0.0
    %3640 = vmatprep.mubr.f32.mxu0 0.0
    %v3641 = vand.u32 %v3299, 4294901760
    %v3642 = vsub.f32 %v3299, %v3641
    %3643 = vmatmul.mubr.f32.gmra.mrb[0].mxu0 %v3642
    %v3644 = vpop.f32.mrb[0].mxu0
    %v3645 = vadd.f32 %v3541, %v3644
    %v3646 = vpop.f32.mrb[0].mxu0
    %3647 = vdwg.mxu0
    %3648 = vmatprep.subr.mxu0 0.0
    %v3649 = vand.u32 %v64, 4294901760
    %3650 = vmatpush1.msra.mxu0 %v3649
    %3651 = vmatprep.subr.mxu0 0.0
    %v3652 = vand.u32 %v65, 4294901760
    %3653 = vmatpush1.msra.mxu0 %v3652
    %3654 = vmatprep.subr.mxu0 0.0
    %v3655 = vand.u32 %v66, 4294901760
    %3656 = vmatpush1.msra.mxu0 %v3655
    %3657 = vmatprep.subr.mxu0 0.0
    %v3658 = vand.u32 %v67, 4294901760
    %3659 = vmatpush1.msra.mxu0 %v3658
    %3660 = vmatprep.subr.mxu0 0.0
    %v3661 = vand.u32 %v68, 4294901760
    %3662 = vmatpush1.msra.mxu0 %v3661
    %3663 = vmatprep.subr.mxu0 0.0
    %v3664 = vand.u32 %v69, 4294901760
    %3665 = vmatpush1.msra.mxu0 %v3664
    %3666 = vmatprep.subr.mxu0 0.0
    %v3667 = vand.u32 %v70, 4294901760
    %3668 = vmatpush1.msra.mxu0 %v3667
    %3669 = vmatprep.subr.mxu0 0.0
    %v3670 = vand.u32 %v71, 4294901760
    %3671 = vmatpush1.msra.mxu0 %v3670
    %3672 = vmatprep.subr.mxu0 0.0
    %v3673 = vand.u32 %v72, 4294901760
    %3674 = vmatpush1.msra.mxu0 %v3673
    %3675 = vmatprep.subr.mxu0 0.0
    %v3676 = vand.u32 %v73, 4294901760
    %3677 = vmatpush1.msra.mxu0 %v3676
    %3678 = vmatprep.subr.mxu0 0.0
    %v3679 = vand.u32 %v74, 4294901760
    %3680 = vmatpush1.msra.mxu0 %v3679
    %3681 = vmatprep.subr.mxu0 0.0
    %v3682 = vand.u32 %v75, 4294901760
    %3683 = vmatpush1.msra.mxu0 %v3682
    %3684 = vmatprep.subr.mxu0 0.0
    %v3685 = vand.u32 %v76, 4294901760
    %3686 = vmatpush1.msra.mxu0 %v3685
    %3687 = vmatprep.subr.mxu0 0.0
    %v3688 = vand.u32 %v77, 4294901760
    %3689 = vmatpush1.msra.mxu0 %v3688
    %3690 = vmatprep.subr.mxu0 0.0
    %v3691 = vand.u32 %v78, 4294901760
    %3692 = vmatpush1.msra.mxu0 %v3691
    %3693 = vmatprep.subr.mxu0 0.0
    %v3694 = vand.u32 %v79, 4294901760
    %3695 = vmatpush1.msra.mxu0 %v3694
    %3696 = vmatprep.subr.mxu0 0.0
    %3697 = vmatpush1.msra.mxu0 0.0
    %3698 = vmatprep.subr.mxu0 0.0
    %3699 = vmatpush1.msra.mxu0 0.0
    %3700 = vmatprep.subr.mxu0 0.0
    %3701 = vmatpush1.msra.mxu0 0.0
    %3702 = vmatprep.subr.mxu0 0.0
    %3703 = vmatpush1.msra.mxu0 0.0
    %3704 = vmatprep.subr.mxu0 0.0
    %3705 = vmatpush1.msra.mxu0 0.0
    %3706 = vmatprep.subr.mxu0 0.0
    %3707 = vmatpush1.msra.mxu0 0.0
    %3708 = vmatprep.subr.mxu0 0.0
    %3709 = vmatpush1.msra.mxu0 0.0
    %3710 = vmatprep.subr.mxu0 0.0
    %3711 = vmatpush1.msra.mxu0 0.0
    %3712 = vmatprep.subr.mxu0 0.0
    %3713 = vmatpush1.msra.mxu0 0.0
    %3714 = vmatprep.subr.mxu0 0.0
    %3715 = vmatpush1.msra.mxu0 0.0
    %3716 = vmatprep.subr.mxu0 0.0
    %3717 = vmatpush1.msra.mxu0 0.0
    %3718 = vmatprep.subr.mxu0 0.0
    %3719 = vmatpush1.msra.mxu0 0.0
    %3720 = vmatprep.subr.mxu0 0.0
    %3721 = vmatpush1.msra.mxu0 0.0
    %3722 = vmatprep.subr.mxu0 0.0
    %3723 = vmatpush1.msra.mxu0 0.0
    %3724 = vmatprep.subr.mxu0 0.0
    %3725 = vmatpush1.msra.mxu0 0.0
    %3726 = vmatprep.subr.mxu0 0.0
    %3727 = vmatpush1.msra.mxu0 0.0
    %3728 = vmatprep.mubr.f32.mxu0 0.0
    %v3729 = vand.u32 %v3299, 4294901760
    %v3730 = vsub.f32 %v3299, %v3729
    %v3731 = vand.u32 %v3730, 4294901760
    %3732 = vmatmul.mubr.f32.gmra.mrb[0].mxu0 %v3731
    %v3733 = vpop.f32.mrb[0].mxu0
    %v3734 = vadd.f32 %v3645, %v3733
    %v3735 = vpop.f32.mrb[0].mxu0
    %3736 = vdwg.mxu0
    %3737 = vmatprep.subr.mxu0 0.0
    %v3738 = vand.u32 %v64, 4294901760
    %v3739 = vsub.f32 %v64, %v3738
    %v3740 = vand.u32 %v3739, 4294901760
    %3741 = vmatpush1.msra.mxu0 %v3740
    %3742 = vmatprep.subr.mxu0 0.0
    %v3743 = vand.u32 %v65, 4294901760
    %v3744 = vsub.f32 %v65, %v3743
    %v3745 = vand.u32 %v3744, 4294901760
    %3746 = vmatpush1.msra.mxu0 %v3745
    %3747 = vmatprep.subr.mxu0 0.0
    %v3748 = vand.u32 %v66, 4294901760
    %v3749 = vsub.f32 %v66, %v3748
    %v3750 = vand.u32 %v3749, 4294901760
    %3751 = vmatpush1.msra.mxu0 %v3750
    %3752 = vmatprep.subr.mxu0 0.0
    %v3753 = vand.u32 %v67, 4294901760
    %v3754 = vsub.f32 %v67, %v3753
    %v3755 = vand.u32 %v3754, 4294901760
    %3756 = vmatpush1.msra.mxu0 %v3755
    %3757 = vmatprep.subr.mxu0 0.0
    %v3758 = vand.u32 %v68, 4294901760
    %v3759 = vsub.f32 %v68, %v3758
    %v3760 = vand.u32 %v3759, 4294901760
    %3761 = vmatpush1.msra.mxu0 %v3760
    %3762 = vmatprep.subr.mxu0 0.0
    %v3763 = vand.u32 %v69, 4294901760
    %v3764 = vsub.f32 %v69, %v3763
    %v3765 = vand.u32 %v3764, 4294901760
    %3766 = vmatpush1.msra.mxu0 %v3765
    %3767 = vmatprep.subr.mxu0 0.0
    %v3768 = vand.u32 %v70, 4294901760
    %v3769 = vsub.f32 %v70, %v3768
    %v3770 = vand.u32 %v3769, 4294901760
    %3771 = vmatpush1.msra.mxu0 %v3770
    %3772 = vmatprep.subr.mxu0 0.0
    %v3773 = vand.u32 %v71, 4294901760
    %v3774 = vsub.f32 %v71, %v3773
    %v3775 = vand.u32 %v3774, 4294901760
    %3776 = vmatpush1.msra.mxu0 %v3775
    %3777 = vmatprep.subr.mxu0 0.0
    %v3778 = vand.u32 %v72, 4294901760
    %v3779 = vsub.f32 %v72, %v3778
    %v3780 = vand.u32 %v3779, 4294901760
    %3781 = vmatpush1.msra.mxu0 %v3780
    %3782 = vmatprep.subr.mxu0 0.0
    %v3783 = vand.u32 %v73, 4294901760
    %v3784 = vsub.f32 %v73, %v3783
    %v3785 = vand.u32 %v3784, 4294901760
    %3786 = vmatpush1.msra.mxu0 %v3785
    %3787 = vmatprep.subr.mxu0 0.0
    %v3788 = vand.u32 %v74, 4294901760
    %v3789 = vsub.f32 %v74, %v3788
    %v3790 = vand.u32 %v3789, 4294901760
    %3791 = vmatpush1.msra.mxu0 %v3790
    %3792 = vmatprep.subr.mxu0 0.0
    %v3793 = vand.u32 %v75, 4294901760
    %v3794 = vsub.f32 %v75, %v3793
    %v3795 = vand.u32 %v3794, 4294901760
    %3796 = vmatpush1.msra.mxu0 %v3795
    %3797 = vmatprep.subr.mxu0 0.0
    %v3798 = vand.u32 %v76, 4294901760
    %v3799 = vsub.f32 %v76, %v3798
    %v3800 = vand.u32 %v3799, 4294901760
    %3801 = vmatpush1.msra.mxu0 %v3800
    %3802 = vmatprep.subr.mxu0 0.0
    %v3803 = vand.u32 %v77, 4294901760
    %v3804 = vsub.f32 %v77, %v3803
    %v3805 = vand.u32 %v3804, 4294901760
    %3806 = vmatpush1.msra.mxu0 %v3805
    %3807 = vmatprep.subr.mxu0 0.0
    %v3808 = vand.u32 %v78, 4294901760
    %v3809 = vsub.f32 %v78, %v3808
    %v3810 = vand.u32 %v3809, 4294901760
    %3811 = vmatpush1.msra.mxu0 %v3810
    %3812 = vmatprep.subr.mxu0 0.0
    %v3813 = vand.u32 %v79, 4294901760
    %v3814 = vsub.f32 %v79, %v3813
    %v3815 = vand.u32 %v3814, 4294901760
    %3816 = vmatpush1.msra.mxu0 %v3815
    %3817 = vmatprep.subr.mxu0 0.0
    %3818 = vmatpush1.msra.mxu0 0.0
    %3819 = vmatprep.subr.mxu0 0.0
    %3820 = vmatpush1.msra.mxu0 0.0
    %3821 = vmatprep.subr.mxu0 0.0
    %3822 = vmatpush1.msra.mxu0 0.0
    %3823 = vmatprep.subr.mxu0 0.0
    %3824 = vmatpush1.msra.mxu0 0.0
    %3825 = vmatprep.subr.mxu0 0.0
    %3826 = vmatpush1.msra.mxu0 0.0
    %3827 = vmatprep.subr.mxu0 0.0
    %3828 = vmatpush1.msra.mxu0 0.0
    %3829 = vmatprep.subr.mxu0 0.0
    %3830 = vmatpush1.msra.mxu0 0.0
    %3831 = vmatprep.subr.mxu0 0.0
    %3832 = vmatpush1.msra.mxu0 0.0
    %3833 = vmatprep.subr.mxu0 0.0
    %3834 = vmatpush1.msra.mxu0 0.0
    %3835 = vmatprep.subr.mxu0 0.0
    %3836 = vmatpush1.msra.mxu0 0.0
    %3837 = vmatprep.subr.mxu0 0.0
    %3838 = vmatpush1.msra.mxu0 0.0
    %3839 = vmatprep.subr.mxu0 0.0
    %3840 = vmatpush1.msra.mxu0 0.0
    %3841 = vmatprep.subr.mxu0 0.0
    %3842 = vmatpush1.msra.mxu0 0.0
    %3843 = vmatprep.subr.mxu0 0.0
    %3844 = vmatpush1.msra.mxu0 0.0
    %3845 = vmatprep.subr.mxu0 0.0
    %3846 = vmatpush1.msra.mxu0 0.0
    %3847 = vmatprep.subr.mxu0 0.0
    %3848 = vmatpush1.msra.mxu0 0.0
    %3849 = vmatprep.mubr.f32.mxu0 0.0
    %v3850 = vand.u32 %v3299, 4294901760
    %3851 = vmatmul.mubr.f32.gmra.mrb[0].mxu0 %v3850
    %v3852 = vpop.f32.mrb[0].mxu0
    %v3853 = vadd.f32 %v3734, %v3852
    %v3854 = vpop.f32.mrb[0].mxu0
    %3855 = vdwg.mxu0
    %3856 = vmatprep.subr.mxu0 0.0
    %v3857 = vand.u32 %v64, 4294901760
    %3858 = vmatpush1.msra.mxu0 %v3857
    %3859 = vmatprep.subr.mxu0 0.0
    %v3860 = vand.u32 %v65, 4294901760
    %3861 = vmatpush1.msra.mxu0 %v3860
    %3862 = vmatprep.subr.mxu0 0.0
    %v3863 = vand.u32 %v66, 4294901760
    %3864 = vmatpush1.msra.mxu0 %v3863
    %3865 = vmatprep.subr.mxu0 0.0
    %v3866 = vand.u32 %v67, 4294901760
    %3867 = vmatpush1.msra.mxu0 %v3866
    %3868 = vmatprep.subr.mxu0 0.0
    %v3869 = vand.u32 %v68, 4294901760
    %3870 = vmatpush1.msra.mxu0 %v3869
    %3871 = vmatprep.subr.mxu0 0.0
    %v3872 = vand.u32 %v69, 4294901760
    %3873 = vmatpush1.msra.mxu0 %v3872
    %3874 = vmatprep.subr.mxu0 0.0
    %v3875 = vand.u32 %v70, 4294901760
    %3876 = vmatpush1.msra.mxu0 %v3875
    %3877 = vmatprep.subr.mxu0 0.0
    %v3878 = vand.u32 %v71, 4294901760
    %3879 = vmatpush1.msra.mxu0 %v3878
    %3880 = vmatprep.subr.mxu0 0.0
    %v3881 = vand.u32 %v72, 4294901760
    %3882 = vmatpush1.msra.mxu0 %v3881
    %3883 = vmatprep.subr.mxu0 0.0
    %v3884 = vand.u32 %v73, 4294901760
    %3885 = vmatpush1.msra.mxu0 %v3884
    %3886 = vmatprep.subr.mxu0 0.0
    %v3887 = vand.u32 %v74, 4294901760
    %3888 = vmatpush1.msra.mxu0 %v3887
    %3889 = vmatprep.subr.mxu0 0.0
    %v3890 = vand.u32 %v75, 4294901760
    %3891 = vmatpush1.msra.mxu0 %v3890
    %3892 = vmatprep.subr.mxu0 0.0
    %v3893 = vand.u32 %v76, 4294901760
    %3894 = vmatpush1.msra.mxu0 %v3893
    %3895 = vmatprep.subr.mxu0 0.0
    %v3896 = vand.u32 %v77, 4294901760
    %3897 = vmatpush1.msra.mxu0 %v3896
    %3898 = vmatprep.subr.mxu0 0.0
    %v3899 = vand.u32 %v78, 4294901760
    %3900 = vmatpush1.msra.mxu0 %v3899
    %3901 = vmatprep.subr.mxu0 0.0
    %v3902 = vand.u32 %v79, 4294901760
    %3903 = vmatpush1.msra.mxu0 %v3902
    %3904 = vmatprep.subr.mxu0 0.0
    %3905 = vmatpush1.msra.mxu0 0.0
    %3906 = vmatprep.subr.mxu0 0.0
    %3907 = vmatpush1.msra.mxu0 0.0
    %3908 = vmatprep.subr.mxu0 0.0
    %3909 = vmatpush1.msra.mxu0 0.0
    %3910 = vmatprep.subr.mxu0 0.0
    %3911 = vmatpush1.msra.mxu0 0.0
    %3912 = vmatprep.subr.mxu0 0.0
    %3913 = vmatpush1.msra.mxu0 0.0
    %3914 = vmatprep.subr.mxu0 0.0
    %3915 = vmatpush1.msra.mxu0 0.0
    %3916 = vmatprep.subr.mxu0 0.0
    %3917 = vmatpush1.msra.mxu0 0.0
    %3918 = vmatprep.subr.mxu0 0.0
    %3919 = vmatpush1.msra.mxu0 0.0
    %3920 = vmatprep.subr.mxu0 0.0
    %3921 = vmatpush1.msra.mxu0 0.0
    %3922 = vmatprep.subr.mxu0 0.0
    %3923 = vmatpush1.msra.mxu0 0.0
    %3924 = vmatprep.subr.mxu0 0.0
    %3925 = vmatpush1.msra.mxu0 0.0
    %3926 = vmatprep.subr.mxu0 0.0
    %3927 = vmatpush1.msra.mxu0 0.0
    %3928 = vmatprep.subr.mxu0 0.0
    %3929 = vmatpush1.msra.mxu0 0.0
    %3930 = vmatprep.subr.mxu0 0.0
    %3931 = vmatpush1.msra.mxu0 0.0
    %3932 = vmatprep.subr.mxu0 0.0
    %3933 = vmatpush1.msra.mxu0 0.0
    %3934 = vmatprep.subr.mxu0 0.0
    %3935 = vmatpush1.msra.mxu0 0.0
    %3936 = vmatprep.mubr.f32.mxu0 0.0
    %v3937 = vand.u32 %v3299, 4294901760
    %3938 = vmatmul.mubr.f32.gmra.mrb[0].mxu0 %v3937
    %v3939 = vpop.f32.mrb[0].mxu0
    %v3940 = vadd.f32 %v3853, %v3939
    %v3941 = vpop.f32.mrb[0].mxu0
    %3942 = vdwg.mxu0
    %v3943 = vtanh.pop %v3940
    %s3944 = scalar_lea.vmem [#allocation3], 48
    %v3945 = vld [vmem:[%s3944] sm:$0xff]
    %3946 = vmatprep.subr.mxu0 0.0
    %v3947 = vand.u32 %v64, 4294901760
    %3948 = vmatpush1.msra.mxu0 %v3947
    %3949 = vmatprep.subr.mxu0 0.0
    %v3950 = vand.u32 %v65, 4294901760
    %3951 = vmatpush1.msra.mxu0 %v3950
    %3952 = vmatprep.subr.mxu0 0.0
    %v3953 = vand.u32 %v66, 4294901760
    %3954 = vmatpush1.msra.mxu0 %v3953
    %3955 = vmatprep.subr.mxu0 0.0
    %v3956 = vand.u32 %v67, 4294901760
    %3957 = vmatpush1.msra.mxu0 %v3956
    %3958 = vmatprep.subr.mxu0 0.0
    %v3959 = vand.u32 %v68, 4294901760
    %3960 = vmatpush1.msra.mxu0 %v3959
    %3961 = vmatprep.subr.mxu0 0.0
    %v3962 = vand.u32 %v69, 4294901760
    %3963 = vmatpush1.msra.mxu0 %v3962
    %3964 = vmatprep.subr.mxu0 0.0
    %v3965 = vand.u32 %v70, 4294901760
    %3966 = vmatpush1.msra.mxu0 %v3965
    %3967 = vmatprep.subr.mxu0 0.0
    %v3968 = vand.u32 %v71, 4294901760
    %3969 = vmatpush1.msra.mxu0 %v3968
    %3970 = vmatprep.subr.mxu0 0.0
    %v3971 = vand.u32 %v72, 4294901760
    %3972 = vmatpush1.msra.mxu0 %v3971
    %3973 = vmatprep.subr.mxu0 0.0
    %v3974 = vand.u32 %v73, 4294901760
    %3975 = vmatpush1.msra.mxu0 %v3974
    %3976 = vmatprep.subr.mxu0 0.0
    %v3977 = vand.u32 %v74, 4294901760
    %3978 = vmatpush1.msra.mxu0 %v3977
    %3979 = vmatprep.subr.mxu0 0.0
    %v3980 = vand.u32 %v75, 4294901760
    %3981 = vmatpush1.msra.mxu0 %v3980
    %3982 = vmatprep.subr.mxu0 0.0
    %v3983 = vand.u32 %v76, 4294901760
    %3984 = vmatpush1.msra.mxu0 %v3983
    %3985 = vmatprep.subr.mxu0 0.0
    %v3986 = vand.u32 %v77, 4294901760
    %3987 = vmatpush1.msra.mxu0 %v3986
    %3988 = vmatprep.subr.mxu0 0.0
    %v3989 = vand.u32 %v78, 4294901760
    %3990 = vmatpush1.msra.mxu0 %v3989
    %3991 = vmatprep.subr.mxu0 0.0
    %v3992 = vand.u32 %v79, 4294901760
    %3993 = vmatpush1.msra.mxu0 %v3992
    %3994 = vmatprep.subr.mxu0 0.0
    %3995 = vmatpush1.msra.mxu0 0.0
    %3996 = vmatprep.subr.mxu0 0.0
    %3997 = vmatpush1.msra.mxu0 0.0
    %3998 = vmatprep.subr.mxu0 0.0
    %3999 = vmatpush1.msra.mxu0 0.0
    %4000 = vmatprep.subr.mxu0 0.0
    %4001 = vmatpush1.msra.mxu0 0.0
    %4002 = vmatprep.subr.mxu0 0.0
    %4003 = vmatpush1.msra.mxu0 0.0
    %4004 = vmatprep.subr.mxu0 0.0
    %4005 = vmatpush1.msra.mxu0 0.0
    %4006 = vmatprep.subr.mxu0 0.0
    %4007 = vmatpush1.msra.mxu0 0.0
    %4008 = vmatprep.subr.mxu0 0.0
    %4009 = vmatpush1.msra.mxu0 0.0
    %4010 = vmatprep.subr.mxu0 0.0
    %4011 = vmatpush1.msra.mxu0 0.0
    %4012 = vmatprep.subr.mxu0 0.0
    %4013 = vmatpush1.msra.mxu0 0.0
    %4014 = vmatprep.subr.mxu0 0.0
    %4015 = vmatpush1.msra.mxu0 0.0
    %4016 = vmatprep.subr.mxu0 0.0
    %4017 = vmatpush1.msra.mxu0 0.0
    %4018 = vmatprep.subr.mxu0 0.0
    %4019 = vmatpush1.msra.mxu0 0.0
    %4020 = vmatprep.subr.mxu0 0.0
    %4021 = vmatpush1.msra.mxu0 0.0
    %4022 = vmatprep.subr.mxu0 0.0
    %4023 = vmatpush1.msra.mxu0 0.0
    %4024 = vmatprep.subr.mxu0 0.0
    %4025 = vmatpush1.msra.mxu0 0.0
    %4026 = vmatprep.mubr.f32.mxu0 0.0
    %v4027 = vand.u32 %v3943, 4294901760
    %v4028 = vsub.f32 %v3943, %v4027
    %v4029 = vand.u32 %v4028, 4294901760
    %v4030 = vsub.f32 %v4028, %v4029
    %v4031 = vand.u32 %v4030, 4294901760
    %4032 = vmatmul.mubr.f32.gmra.mrb[0].mxu0 %v4031
    %v4033 = vpop.f32.mrb[0].mxu0
    %v4034 = vadd.f32 %v3945, %v4033
    %v4035 = vpop.f32.mrb[0].mxu0
    %4036 = vdwg.mxu0
    %4037 = vmatprep.subr.mxu0 0.0
    %v4038 = vand.u32 %v64, 4294901760
    %v4039 = vsub.f32 %v64, %v4038
    %v4040 = vand.u32 %v4039, 4294901760
    %v4041 = vsub.f32 %v4039, %v4040
    %v4042 = vand.u32 %v4041, 4294901760
    %4043 = vmatpush1.msra.mxu0 %v4042
    %4044 = vmatprep.subr.mxu0 0.0
    %v4045 = vand.u32 %v65, 4294901760
    %v4046 = vsub.f32 %v65, %v4045
    %v4047 = vand.u32 %v4046, 4294901760
    %v4048 = vsub.f32 %v4046, %v4047
    %v4049 = vand.u32 %v4048, 4294901760
    %4050 = vmatpush1.msra.mxu0 %v4049
    %4051 = vmatprep.subr.mxu0 0.0
    %v4052 = vand.u32 %v66, 4294901760
    %v4053 = vsub.f32 %v66, %v4052
    %v4054 = vand.u32 %v4053, 4294901760
    %v4055 = vsub.f32 %v4053, %v4054
    %v4056 = vand.u32 %v4055, 4294901760
    %4057 = vmatpush1.msra.mxu0 %v4056
    %4058 = vmatprep.subr.mxu0 0.0
    %v4059 = vand.u32 %v67, 4294901760
    %v4060 = vsub.f32 %v67, %v4059
    %v4061 = vand.u32 %v4060, 4294901760
    %v4062 = vsub.f32 %v4060, %v4061
    %v4063 = vand.u32 %v4062, 4294901760
    %4064 = vmatpush1.msra.mxu0 %v4063
    %4065 = vmatprep.subr.mxu0 0.0
    %v4066 = vand.u32 %v68, 4294901760
    %v4067 = vsub.f32 %v68, %v4066
    %v4068 = vand.u32 %v4067, 4294901760
    %v4069 = vsub.f32 %v4067, %v4068
    %v4070 = vand.u32 %v4069, 4294901760
    %4071 = vmatpush1.msra.mxu0 %v4070
    %4072 = vmatprep.subr.mxu0 0.0
    %v4073 = vand.u32 %v69, 4294901760
    %v4074 = vsub.f32 %v69, %v4073
    %v4075 = vand.u32 %v4074, 4294901760
    %v4076 = vsub.f32 %v4074, %v4075
    %v4077 = vand.u32 %v4076, 4294901760
    %4078 = vmatpush1.msra.mxu0 %v4077
    %4079 = vmatprep.subr.mxu0 0.0
    %v4080 = vand.u32 %v70, 4294901760
    %v4081 = vsub.f32 %v70, %v4080
    %v4082 = vand.u32 %v4081, 4294901760
    %v4083 = vsub.f32 %v4081, %v4082
    %v4084 = vand.u32 %v4083, 4294901760
    %4085 = vmatpush1.msra.mxu0 %v4084
    %4086 = vmatprep.subr.mxu0 0.0
    %v4087 = vand.u32 %v71, 4294901760
    %v4088 = vsub.f32 %v71, %v4087
    %v4089 = vand.u32 %v4088, 4294901760
    %v4090 = vsub.f32 %v4088, %v4089
    %v4091 = vand.u32 %v4090, 4294901760
    %4092 = vmatpush1.msra.mxu0 %v4091
    %4093 = vmatprep.subr.mxu0 0.0
    %v4094 = vand.u32 %v72, 4294901760
    %v4095 = vsub.f32 %v72, %v4094
    %v4096 = vand.u32 %v4095, 4294901760
    %v4097 = vsub.f32 %v4095, %v4096
    %v4098 = vand.u32 %v4097, 4294901760
    %4099 = vmatpush1.msra.mxu0 %v4098
    %4100 = vmatprep.subr.mxu0 0.0
    %v4101 = vand.u32 %v73, 4294901760
    %v4102 = vsub.f32 %v73, %v4101
    %v4103 = vand.u32 %v4102, 4294901760
    %v4104 = vsub.f32 %v4102, %v4103
    %v4105 = vand.u32 %v4104, 4294901760
    %4106 = vmatpush1.msra.mxu0 %v4105
    %4107 = vmatprep.subr.mxu0 0.0
    %v4108 = vand.u32 %v74, 4294901760
    %v4109 = vsub.f32 %v74, %v4108
    %v4110 = vand.u32 %v4109, 4294901760
    %v4111 = vsub.f32 %v4109, %v4110
    %v4112 = vand.u32 %v4111, 4294901760
    %4113 = vmatpush1.msra.mxu0 %v4112
    %4114 = vmatprep.subr.mxu0 0.0
    %v4115 = vand.u32 %v75, 4294901760
    %v4116 = vsub.f32 %v75, %v4115
    %v4117 = vand.u32 %v4116, 4294901760
    %v4118 = vsub.f32 %v4116, %v4117
    %v4119 = vand.u32 %v4118, 4294901760
    %4120 = vmatpush1.msra.mxu0 %v4119
    %4121 = vmatprep.subr.mxu0 0.0
    %v4122 = vand.u32 %v76, 4294901760
    %v4123 = vsub.f32 %v76, %v4122
    %v4124 = vand.u32 %v4123, 4294901760
    %v4125 = vsub.f32 %v4123, %v4124
    %v4126 = vand.u32 %v4125, 4294901760
    %4127 = vmatpush1.msra.mxu0 %v4126
    %4128 = vmatprep.subr.mxu0 0.0
    %v4129 = vand.u32 %v77, 4294901760
    %v4130 = vsub.f32 %v77, %v4129
    %v4131 = vand.u32 %v4130, 4294901760
    %v4132 = vsub.f32 %v4130, %v4131
    %v4133 = vand.u32 %v4132, 4294901760
    %4134 = vmatpush1.msra.mxu0 %v4133
    %4135 = vmatprep.subr.mxu0 0.0
    %v4136 = vand.u32 %v78, 4294901760
    %v4137 = vsub.f32 %v78, %v4136
    %v4138 = vand.u32 %v4137, 4294901760
    %v4139 = vsub.f32 %v4137, %v4138
    %v4140 = vand.u32 %v4139, 4294901760
    %4141 = vmatpush1.msra.mxu0 %v4140
    %4142 = vmatprep.subr.mxu0 0.0
    %v4143 = vand.u32 %v79, 4294901760
    %v4144 = vsub.f32 %v79, %v4143
    %v4145 = vand.u32 %v4144, 4294901760
    %v4146 = vsub.f32 %v4144, %v4145
    %v4147 = vand.u32 %v4146, 4294901760
    %4148 = vmatpush1.msra.mxu0 %v4147
    %4149 = vmatprep.subr.mxu0 0.0
    %4150 = vmatpush1.msra.mxu0 0.0
    %4151 = vmatprep.subr.mxu0 0.0
    %4152 = vmatpush1.msra.mxu0 0.0
    %4153 = vmatprep.subr.mxu0 0.0
    %4154 = vmatpush1.msra.mxu0 0.0
    %4155 = vmatprep.subr.mxu0 0.0
    %4156 = vmatpush1.msra.mxu0 0.0
    %4157 = vmatprep.subr.mxu0 0.0
    %4158 = vmatpush1.msra.mxu0 0.0
    %4159 = vmatprep.subr.mxu0 0.0
    %4160 = vmatpush1.msra.mxu0 0.0
    %4161 = vmatprep.subr.mxu0 0.0
    %4162 = vmatpush1.msra.mxu0 0.0
    %4163 = vmatprep.subr.mxu0 0.0
    %4164 = vmatpush1.msra.mxu0 0.0
    %4165 = vmatprep.subr.mxu0 0.0
    %4166 = vmatpush1.msra.mxu0 0.0
    %4167 = vmatprep.subr.mxu0 0.0
    %4168 = vmatpush1.msra.mxu0 0.0
    %4169 = vmatprep.subr.mxu0 0.0
    %4170 = vmatpush1.msra.mxu0 0.0
    %4171 = vmatprep.subr.mxu0 0.0
    %4172 = vmatpush1.msra.mxu0 0.0
    %4173 = vmatprep.subr.mxu0 0.0
    %4174 = vmatpush1.msra.mxu0 0.0
    %4175 = vmatprep.subr.mxu0 0.0
    %4176 = vmatpush1.msra.mxu0 0.0
    %4177 = vmatprep.subr.mxu0 0.0
    %4178 = vmatpush1.msra.mxu0 0.0
    %4179 = vmatprep.subr.mxu0 0.0
    %4180 = vmatpush1.msra.mxu0 0.0
    %4181 = vmatprep.mubr.f32.mxu0 0.0
    %v4182 = vand.u32 %v3943, 4294901760
    %4183 = vmatmul.mubr.f32.gmra.mrb[0].mxu0 %v4182
    %v4184 = vpop.f32.mrb[0].mxu0
    %v4185 = vadd.f32 %v4034, %v4184
    %v4186 = vpop.f32.mrb[0].mxu0
    %4187 = vdwg.mxu0
    %4188 = vmatprep.subr.mxu0 0.0
    %v4189 = vand.u32 %v64, 4294901760
    %v4190 = vsub.f32 %v64, %v4189
    %4191 = vmatpush1.msra.mxu0 %v4190
    %4192 = vmatprep.subr.mxu0 0.0
    %v4193 = vand.u32 %v65, 4294901760
    %v4194 = vsub.f32 %v65, %v4193
    %4195 = vmatpush1.msra.mxu0 %v4194
    %4196 = vmatprep.subr.mxu0 0.0
    %v4197 = vand.u32 %v66, 4294901760
    %v4198 = vsub.f32 %v66, %v4197
    %4199 = vmatpush1.msra.mxu0 %v4198
    %4200 = vmatprep.subr.mxu0 0.0
    %v4201 = vand.u32 %v67, 4294901760
    %v4202 = vsub.f32 %v67, %v4201
    %4203 = vmatpush1.msra.mxu0 %v4202
    %4204 = vmatprep.subr.mxu0 0.0
    %v4205 = vand.u32 %v68, 4294901760
    %v4206 = vsub.f32 %v68, %v4205
    %4207 = vmatpush1.msra.mxu0 %v4206
    %4208 = vmatprep.subr.mxu0 0.0
    %v4209 = vand.u32 %v69, 4294901760
    %v4210 = vsub.f32 %v69, %v4209
    %4211 = vmatpush1.msra.mxu0 %v4210
    %4212 = vmatprep.subr.mxu0 0.0
    %v4213 = vand.u32 %v70, 4294901760
    %v4214 = vsub.f32 %v70, %v4213
    %4215 = vmatpush1.msra.mxu0 %v4214
    %4216 = vmatprep.subr.mxu0 0.0
    %v4217 = vand.u32 %v71, 4294901760
    %v4218 = vsub.f32 %v71, %v4217
    %4219 = vmatpush1.msra.mxu0 %v4218
    %4220 = vmatprep.subr.mxu0 0.0
    %v4221 = vand.u32 %v72, 4294901760
    %v4222 = vsub.f32 %v72, %v4221
    %4223 = vmatpush1.msra.mxu0 %v4222
    %4224 = vmatprep.subr.mxu0 0.0
    %v4225 = vand.u32 %v73, 4294901760
    %v4226 = vsub.f32 %v73, %v4225
    %4227 = vmatpush1.msra.mxu0 %v4226
    %4228 = vmatprep.subr.mxu0 0.0
    %v4229 = vand.u32 %v74, 4294901760
    %v4230 = vsub.f32 %v74, %v4229
    %4231 = vmatpush1.msra.mxu0 %v4230
    %4232 = vmatprep.subr.mxu0 0.0
    %v4233 = vand.u32 %v75, 4294901760
    %v4234 = vsub.f32 %v75, %v4233
    %4235 = vmatpush1.msra.mxu0 %v4234
    %4236 = vmatprep.subr.mxu0 0.0
    %v4237 = vand.u32 %v76, 4294901760
    %v4238 = vsub.f32 %v76, %v4237
    %4239 = vmatpush1.msra.mxu0 %v4238
    %4240 = vmatprep.subr.mxu0 0.0
    %v4241 = vand.u32 %v77, 4294901760
    %v4242 = vsub.f32 %v77, %v4241
    %4243 = vmatpush1.msra.mxu0 %v4242
    %4244 = vmatprep.subr.mxu0 0.0
    %v4245 = vand.u32 %v78, 4294901760
    %v4246 = vsub.f32 %v78, %v4245
    %4247 = vmatpush1.msra.mxu0 %v4246
    %4248 = vmatprep.subr.mxu0 0.0
    %v4249 = vand.u32 %v79, 4294901760
    %v4250 = vsub.f32 %v79, %v4249
    %4251 = vmatpush1.msra.mxu0 %v4250
    %4252 = vmatprep.subr.mxu0 0.0
    %4253 = vmatpush1.msra.mxu0 0.0
    %4254 = vmatprep.subr.mxu0 0.0
    %4255 = vmatpush1.msra.mxu0 0.0
    %4256 = vmatprep.subr.mxu0 0.0
    %4257 = vmatpush1.msra.mxu0 0.0
    %4258 = vmatprep.subr.mxu0 0.0
    %4259 = vmatpush1.msra.mxu0 0.0
    %4260 = vmatprep.subr.mxu0 0.0
    %4261 = vmatpush1.msra.mxu0 0.0
    %4262 = vmatprep.subr.mxu0 0.0
    %4263 = vmatpush1.msra.mxu0 0.0
    %4264 = vmatprep.subr.mxu0 0.0
    %4265 = vmatpush1.msra.mxu0 0.0
    %4266 = vmatprep.subr.mxu0 0.0
    %4267 = vmatpush1.msra.mxu0 0.0
    %4268 = vmatprep.subr.mxu0 0.0
    %4269 = vmatpush1.msra.mxu0 0.0
    %4270 = vmatprep.subr.mxu0 0.0
    %4271 = vmatpush1.msra.mxu0 0.0
    %4272 = vmatprep.subr.mxu0 0.0
    %4273 = vmatpush1.msra.mxu0 0.0
    %4274 = vmatprep.subr.mxu0 0.0
    %4275 = vmatpush1.msra.mxu0 0.0
    %4276 = vmatprep.subr.mxu0 0.0
    %4277 = vmatpush1.msra.mxu0 0.0
    %4278 = vmatprep.subr.mxu0 0.0
    %4279 = vmatpush1.msra.mxu0 0.0
    %4280 = vmatprep.subr.mxu0 0.0
    %4281 = vmatpush1.msra.mxu0 0.0
    %4282 = vmatprep.subr.mxu0 0.0
    %4283 = vmatpush1.msra.mxu0 0.0
    %4284 = vmatprep.mubr.f32.mxu0 0.0
    %v4285 = vand.u32 %v3943, 4294901760
    %v4286 = vsub.f32 %v3943, %v4285
    %4287 = vmatmul.mubr.f32.gmra.mrb[0].mxu0 %v4286
    %v4288 = vpop.f32.mrb[0].mxu0
    %v4289 = vadd.f32 %v4185, %v4288
    %v4290 = vpop.f32.mrb[0].mxu0
    %4291 = vdwg.mxu0
    %4292 = vmatprep.subr.mxu0 0.0
    %v4293 = vand.u32 %v64, 4294901760
    %4294 = vmatpush1.msra.mxu0 %v4293
    %4295 = vmatprep.subr.mxu0 0.0
    %v4296 = vand.u32 %v65, 4294901760
    %4297 = vmatpush1.msra.mxu0 %v4296
    %4298 = vmatprep.subr.mxu0 0.0
    %v4299 = vand.u32 %v66, 4294901760
    %4300 = vmatpush1.msra.mxu0 %v4299
    %4301 = vmatprep.subr.mxu0 0.0
    %v4302 = vand.u32 %v67, 4294901760
    %4303 = vmatpush1.msra.mxu0 %v4302
    %4304 = vmatprep.subr.mxu0 0.0
    %v4305 = vand.u32 %v68, 4294901760
    %4306 = vmatpush1.msra.mxu0 %v4305
    %4307 = vmatprep.subr.mxu0 0.0
    %v4308 = vand.u32 %v69, 4294901760
    %4309 = vmatpush1.msra.mxu0 %v4308
    %4310 = vmatprep.subr.mxu0 0.0
    %v4311 = vand.u32 %v70, 4294901760
    %4312 = vmatpush1.msra.mxu0 %v4311
    %4313 = vmatprep.subr.mxu0 0.0
    %v4314 = vand.u32 %v71, 4294901760
    %4315 = vmatpush1.msra.mxu0 %v4314
    %4316 = vmatprep.subr.mxu0 0.0
    %v4317 = vand.u32 %v72, 4294901760
    %4318 = vmatpush1.msra.mxu0 %v4317
    %4319 = vmatprep.subr.mxu0 0.0
    %v4320 = vand.u32 %v73, 4294901760
    %4321 = vmatpush1.msra.mxu0 %v4320
    %4322 = vmatprep.subr.mxu0 0.0
    %v4323 = vand.u32 %v74, 4294901760
    %4324 = vmatpush1.msra.mxu0 %v4323
    %4325 = vmatprep.subr.mxu0 0.0
    %v4326 = vand.u32 %v75, 4294901760
    %4327 = vmatpush1.msra.mxu0 %v4326
    %4328 = vmatprep.subr.mxu0 0.0
    %v4329 = vand.u32 %v76, 4294901760
    %4330 = vmatpush1.msra.mxu0 %v4329
    %4331 = vmatprep.subr.mxu0 0.0
    %v4332 = vand.u32 %v77, 4294901760
    %4333 = vmatpush1.msra.mxu0 %v4332
    %4334 = vmatprep.subr.mxu0 0.0
    %v4335 = vand.u32 %v78, 4294901760
    %4336 = vmatpush1.msra.mxu0 %v4335
    %4337 = vmatprep.subr.mxu0 0.0
    %v4338 = vand.u32 %v79, 4294901760
    %4339 = vmatpush1.msra.mxu0 %v4338
    %4340 = vmatprep.subr.mxu0 0.0
    %4341 = vmatpush1.msra.mxu0 0.0
    %4342 = vmatprep.subr.mxu0 0.0
    %4343 = vmatpush1.msra.mxu0 0.0
    %4344 = vmatprep.subr.mxu0 0.0
    %4345 = vmatpush1.msra.mxu0 0.0
    %4346 = vmatprep.subr.mxu0 0.0
    %4347 = vmatpush1.msra.mxu0 0.0
    %4348 = vmatprep.subr.mxu0 0.0
    %4349 = vmatpush1.msra.mxu0 0.0
    %4350 = vmatprep.subr.mxu0 0.0
    %4351 = vmatpush1.msra.mxu0 0.0
    %4352 = vmatprep.subr.mxu0 0.0
    %4353 = vmatpush1.msra.mxu0 0.0
    %4354 = vmatprep.subr.mxu0 0.0
    %4355 = vmatpush1.msra.mxu0 0.0
    %4356 = vmatprep.subr.mxu0 0.0
    %4357 = vmatpush1.msra.mxu0 0.0
    %4358 = vmatprep.subr.mxu0 0.0
    %4359 = vmatpush1.msra.mxu0 0.0
    %4360 = vmatprep.subr.mxu0 0.0
    %4361 = vmatpush1.msra.mxu0 0.0
    %4362 = vmatprep.subr.mxu0 0.0
    %4363 = vmatpush1.msra.mxu0 0.0
    %4364 = vmatprep.subr.mxu0 0.0
    %4365 = vmatpush1.msra.mxu0 0.0
    %4366 = vmatprep.subr.mxu0 0.0
    %4367 = vmatpush1.msra.mxu0 0.0
    %4368 = vmatprep.subr.mxu0 0.0
    %4369 = vmatpush1.msra.mxu0 0.0
    %4370 = vmatprep.subr.mxu0 0.0
    %4371 = vmatpush1.msra.mxu0 0.0
    %4372 = vmatprep.mubr.f32.mxu0 0.0
    %v4373 = vand.u32 %v3943, 4294901760
    %v4374 = vsub.f32 %v3943, %v4373
    %v4375 = vand.u32 %v4374, 4294901760
    %4376 = vmatmul.mubr.f32.gmra.mrb[0].mxu0 %v4375
    %v4377 = vpop.f32.mrb[0].mxu0
    %v4378 = vadd.f32 %v4289, %v4377
    %v4379 = vpop.f32.mrb[0].mxu0
    %4380 = vdwg.mxu0
    %4381 = vmatprep.subr.mxu0 0.0
    %v4382 = vand.u32 %v64, 4294901760
    %v4383 = vsub.f32 %v64, %v4382
    %v4384 = vand.u32 %v4383, 4294901760
    %4385 = vmatpush1.msra.mxu0 %v4384
    %4386 = vmatprep.subr.mxu0 0.0
    %v4387 = vand.u32 %v65, 4294901760
    %v4388 = vsub.f32 %v65, %v4387
    %v4389 = vand.u32 %v4388, 4294901760
    %4390 = vmatpush1.msra.mxu0 %v4389
    %4391 = vmatprep.subr.mxu0 0.0
    %v4392 = vand.u32 %v66, 4294901760
    %v4393 = vsub.f32 %v66, %v4392
    %v4394 = vand.u32 %v4393, 4294901760
    %4395 = vmatpush1.msra.mxu0 %v4394
    %4396 = vmatprep.subr.mxu0 0.0
    %v4397 = vand.u32 %v67, 4294901760
    %v4398 = vsub.f32 %v67, %v4397
    %v4399 = vand.u32 %v4398, 4294901760
    %4400 = vmatpush1.msra.mxu0 %v4399
    %4401 = vmatprep.subr.mxu0 0.0
    %v4402 = vand.u32 %v68, 4294901760
    %v4403 = vsub.f32 %v68, %v4402
    %v4404 = vand.u32 %v4403, 4294901760
    %4405 = vmatpush1.msra.mxu0 %v4404
    %4406 = vmatprep.subr.mxu0 0.0
    %v4407 = vand.u32 %v69, 4294901760
    %v4408 = vsub.f32 %v69, %v4407
    %v4409 = vand.u32 %v4408, 4294901760
    %4410 = vmatpush1.msra.mxu0 %v4409
    %4411 = vmatprep.subr.mxu0 0.0
    %v4412 = vand.u32 %v70, 4294901760
    %v4413 = vsub.f32 %v70, %v4412
    %v4414 = vand.u32 %v4413, 4294901760
    %4415 = vmatpush1.msra.mxu0 %v4414
    %4416 = vmatprep.subr.mxu0 0.0
    %v4417 = vand.u32 %v71, 4294901760
    %v4418 = vsub.f32 %v71, %v4417
    %v4419 = vand.u32 %v4418, 4294901760
    %4420 = vmatpush1.msra.mxu0 %v4419
    %4421 = vmatprep.subr.mxu0 0.0
    %v4422 = vand.u32 %v72, 4294901760
    %v4423 = vsub.f32 %v72, %v4422
    %v4424 = vand.u32 %v4423, 4294901760
    %4425 = vmatpush1.msra.mxu0 %v4424
    %4426 = vmatprep.subr.mxu0 0.0
    %v4427 = vand.u32 %v73, 4294901760
    %v4428 = vsub.f32 %v73, %v4427
    %v4429 = vand.u32 %v4428, 4294901760
    %4430 = vmatpush1.msra.mxu0 %v4429
    %4431 = vmatprep.subr.mxu0 0.0
    %v4432 = vand.u32 %v74, 4294901760
    %v4433 = vsub.f32 %v74, %v4432
    %v4434 = vand.u32 %v4433, 4294901760
    %4435 = vmatpush1.msra.mxu0 %v4434
    %4436 = vmatprep.subr.mxu0 0.0
    %v4437 = vand.u32 %v75, 4294901760
    %v4438 = vsub.f32 %v75, %v4437
    %v4439 = vand.u32 %v4438, 4294901760
    %4440 = vmatpush1.msra.mxu0 %v4439
    %4441 = vmatprep.subr.mxu0 0.0
    %v4442 = vand.u32 %v76, 4294901760
    %v4443 = vsub.f32 %v76, %v4442
    %v4444 = vand.u32 %v4443, 4294901760
    %4445 = vmatpush1.msra.mxu0 %v4444
    %4446 = vmatprep.subr.mxu0 0.0
    %v4447 = vand.u32 %v77, 4294901760
    %v4448 = vsub.f32 %v77, %v4447
    %v4449 = vand.u32 %v4448, 4294901760
    %4450 = vmatpush1.msra.mxu0 %v4449
    %4451 = vmatprep.subr.mxu0 0.0
    %v4452 = vand.u32 %v78, 4294901760
    %v4453 = vsub.f32 %v78, %v4452
    %v4454 = vand.u32 %v4453, 4294901760
    %4455 = vmatpush1.msra.mxu0 %v4454
    %4456 = vmatprep.subr.mxu0 0.0
    %v4457 = vand.u32 %v79, 4294901760
    %v4458 = vsub.f32 %v79, %v4457
    %v4459 = vand.u32 %v4458, 4294901760
    %4460 = vmatpush1.msra.mxu0 %v4459
    %4461 = vmatprep.subr.mxu0 0.0
    %4462 = vmatpush1.msra.mxu0 0.0
    %4463 = vmatprep.subr.mxu0 0.0
    %4464 = vmatpush1.msra.mxu0 0.0
    %4465 = vmatprep.subr.mxu0 0.0
    %4466 = vmatpush1.msra.mxu0 0.0
    %4467 = vmatprep.subr.mxu0 0.0
    %4468 = vmatpush1.msra.mxu0 0.0
    %4469 = vmatprep.subr.mxu0 0.0
    %4470 = vmatpush1.msra.mxu0 0.0
    %4471 = vmatprep.subr.mxu0 0.0
    %4472 = vmatpush1.msra.mxu0 0.0
    %4473 = vmatprep.subr.mxu0 0.0
    %4474 = vmatpush1.msra.mxu0 0.0
    %4475 = vmatprep.subr.mxu0 0.0
    %4476 = vmatpush1.msra.mxu0 0.0
    %4477 = vmatprep.subr.mxu0 0.0
    %4478 = vmatpush1.msra.mxu0 0.0
    %4479 = vmatprep.subr.mxu0 0.0
    %4480 = vmatpush1.msra.mxu0 0.0
    %4481 = vmatprep.subr.mxu0 0.0
    %4482 = vmatpush1.msra.mxu0 0.0
    %4483 = vmatprep.subr.mxu0 0.0
    %4484 = vmatpush1.msra.mxu0 0.0
    %4485 = vmatprep.subr.mxu0 0.0
    %4486 = vmatpush1.msra.mxu0 0.0
    %4487 = vmatprep.subr.mxu0 0.0
    %4488 = vmatpush1.msra.mxu0 0.0
    %4489 = vmatprep.subr.mxu0 0.0
    %4490 = vmatpush1.msra.mxu0 0.0
    %4491 = vmatprep.subr.mxu0 0.0
    %4492 = vmatpush1.msra.mxu0 0.0
    %4493 = vmatprep.mubr.f32.mxu0 0.0
    %v4494 = vand.u32 %v3943, 4294901760
    %4495 = vmatmul.mubr.f32.gmra.mrb[0].mxu0 %v4494
    %v4496 = vpop.f32.mrb[0].mxu0
    %v4497 = vadd.f32 %v4378, %v4496
    %v4498 = vpop.f32.mrb[0].mxu0
    %4499 = vdwg.mxu0
    %4500 = vmatprep.subr.mxu0 0.0
    %v4501 = vand.u32 %v64, 4294901760
    %4502 = vmatpush1.msra.mxu0 %v4501
    %4503 = vmatprep.subr.mxu0 0.0
    %v4504 = vand.u32 %v65, 4294901760
    %4505 = vmatpush1.msra.mxu0 %v4504
    %4506 = vmatprep.subr.mxu0 0.0
    %v4507 = vand.u32 %v66, 4294901760
    %4508 = vmatpush1.msra.mxu0 %v4507
    %4509 = vmatprep.subr.mxu0 0.0
    %v4510 = vand.u32 %v67, 4294901760
    %4511 = vmatpush1.msra.mxu0 %v4510
    %4512 = vmatprep.subr.mxu0 0.0
    %v4513 = vand.u32 %v68, 4294901760
    %4514 = vmatpush1.msra.mxu0 %v4513
    %4515 = vmatprep.subr.mxu0 0.0
    %v4516 = vand.u32 %v69, 4294901760
    %4517 = vmatpush1.msra.mxu0 %v4516
    %4518 = vmatprep.subr.mxu0 0.0
    %v4519 = vand.u32 %v70, 4294901760
    %4520 = vmatpush1.msra.mxu0 %v4519
    %4521 = vmatprep.subr.mxu0 0.0
    %v4522 = vand.u32 %v71, 4294901760
    %4523 = vmatpush1.msra.mxu0 %v4522
    %4524 = vmatprep.subr.mxu0 0.0
    %v4525 = vand.u32 %v72, 4294901760
    %4526 = vmatpush1.msra.mxu0 %v4525
    %4527 = vmatprep.subr.mxu0 0.0
    %v4528 = vand.u32 %v73, 4294901760
    %4529 = vmatpush1.msra.mxu0 %v4528
    %4530 = vmatprep.subr.mxu0 0.0
    %v4531 = vand.u32 %v74, 4294901760
    %4532 = vmatpush1.msra.mxu0 %v4531
    %4533 = vmatprep.subr.mxu0 0.0
    %v4534 = vand.u32 %v75, 4294901760
    %4535 = vmatpush1.msra.mxu0 %v4534
    %4536 = vmatprep.subr.mxu0 0.0
    %v4537 = vand.u32 %v76, 4294901760
    %4538 = vmatpush1.msra.mxu0 %v4537
    %4539 = vmatprep.subr.mxu0 0.0
    %v4540 = vand.u32 %v77, 4294901760
    %4541 = vmatpush1.msra.mxu0 %v4540
    %4542 = vmatprep.subr.mxu0 0.0
    %v4543 = vand.u32 %v78, 4294901760
    %4544 = vmatpush1.msra.mxu0 %v4543
    %4545 = vmatprep.subr.mxu0 0.0
    %v4546 = vand.u32 %v79, 4294901760
    %4547 = vmatpush1.msra.mxu0 %v4546
    %4548 = vmatprep.subr.mxu0 0.0
    %4549 = vmatpush1.msra.mxu0 0.0
    %4550 = vmatprep.subr.mxu0 0.0
    %4551 = vmatpush1.msra.mxu0 0.0
    %4552 = vmatprep.subr.mxu0 0.0
    %4553 = vmatpush1.msra.mxu0 0.0
    %4554 = vmatprep.subr.mxu0 0.0
    %4555 = vmatpush1.msra.mxu0 0.0
    %4556 = vmatprep.subr.mxu0 0.0
    %4557 = vmatpush1.msra.mxu0 0.0
    %4558 = vmatprep.subr.mxu0 0.0
    %4559 = vmatpush1.msra.mxu0 0.0
    %4560 = vmatprep.subr.mxu0 0.0
    %4561 = vmatpush1.msra.mxu0 0.0
    %4562 = vmatprep.subr.mxu0 0.0
    %4563 = vmatpush1.msra.mxu0 0.0
    %4564 = vmatprep.subr.mxu0 0.0
    %4565 = vmatpush1.msra.mxu0 0.0
    %4566 = vmatprep.subr.mxu0 0.0
    %4567 = vmatpush1.msra.mxu0 0.0
    %4568 = vmatprep.subr.mxu0 0.0
    %4569 = vmatpush1.msra.mxu0 0.0
    %4570 = vmatprep.subr.mxu0 0.0
    %4571 = vmatpush1.msra.mxu0 0.0
    %4572 = vmatprep.subr.mxu0 0.0
    %4573 = vmatpush1.msra.mxu0 0.0
    %4574 = vmatprep.subr.mxu0 0.0
    %4575 = vmatpush1.msra.mxu0 0.0
    %4576 = vmatprep.subr.mxu0 0.0
    %4577 = vmatpush1.msra.mxu0 0.0
    %4578 = vmatprep.subr.mxu0 0.0
    %4579 = vmatpush1.msra.mxu0 0.0
    %4580 = vmatprep.mubr.f32.mxu0 0.0
    %v4581 = vand.u32 %v3943, 4294901760
    %4582 = vmatmul.mubr.f32.gmra.mrb[0].mxu0 %v4581
    %v4583 = vpop.f32.mrb[0].mxu0
    %v4584 = vadd.f32 %v4497, %v4583
    %v4585 = vpop.f32.mrb[0].mxu0
    %4586 = vdwg.mxu0
    %v4587 = vtanh.pop %v4584
    %s4588 = scalar_lea.vmem [#allocation3], 56
    %v4589 = vld [vmem:[%s4588] sm:$0xff]
    %4590 = vmatprep.subr.mxu0 0.0
    %v4591 = vand.u32 %v64, 4294901760
    %4592 = vmatpush1.msra.mxu0 %v4591
    %4593 = vmatprep.subr.mxu0 0.0
    %v4594 = vand.u32 %v65, 4294901760
    %4595 = vmatpush1.msra.mxu0 %v4594
    %4596 = vmatprep.subr.mxu0 0.0
    %v4597 = vand.u32 %v66, 4294901760
    %4598 = vmatpush1.msra.mxu0 %v4597
    %4599 = vmatprep.subr.mxu0 0.0
    %v4600 = vand.u32 %v67, 4294901760
    %4601 = vmatpush1.msra.mxu0 %v4600
    %4602 = vmatprep.subr.mxu0 0.0
    %v4603 = vand.u32 %v68, 4294901760
    %4604 = vmatpush1.msra.mxu0 %v4603
    %4605 = vmatprep.subr.mxu0 0.0
    %v4606 = vand.u32 %v69, 4294901760
    %4607 = vmatpush1.msra.mxu0 %v4606
    %4608 = vmatprep.subr.mxu0 0.0
    %v4609 = vand.u32 %v70, 4294901760
    %4610 = vmatpush1.msra.mxu0 %v4609
    %4611 = vmatprep.subr.mxu0 0.0
    %v4612 = vand.u32 %v71, 4294901760
    %4613 = vmatpush1.msra.mxu0 %v4612
    %4614 = vmatprep.subr.mxu0 0.0
    %v4615 = vand.u32 %v72, 4294901760
    %4616 = vmatpush1.msra.mxu0 %v4615
    %4617 = vmatprep.subr.mxu0 0.0
    %v4618 = vand.u32 %v73, 4294901760
    %4619 = vmatpush1.msra.mxu0 %v4618
    %4620 = vmatprep.subr.mxu0 0.0
    %v4621 = vand.u32 %v74, 4294901760
    %4622 = vmatpush1.msra.mxu0 %v4621
    %4623 = vmatprep.subr.mxu0 0.0
    %v4624 = vand.u32 %v75, 4294901760
    %4625 = vmatpush1.msra.mxu0 %v4624
    %4626 = vmatprep.subr.mxu0 0.0
    %v4627 = vand.u32 %v76, 4294901760
    %4628 = vmatpush1.msra.mxu0 %v4627
    %4629 = vmatprep.subr.mxu0 0.0
    %v4630 = vand.u32 %v77, 4294901760
    %4631 = vmatpush1.msra.mxu0 %v4630
    %4632 = vmatprep.subr.mxu0 0.0
    %v4633 = vand.u32 %v78, 4294901760
    %4634 = vmatpush1.msra.mxu0 %v4633
    %4635 = vmatprep.subr.mxu0 0.0
    %v4636 = vand.u32 %v79, 4294901760
    %4637 = vmatpush1.msra.mxu0 %v4636
    %4638 = vmatprep.subr.mxu0 0.0
    %4639 = vmatpush1.msra.mxu0 0.0
    %4640 = vmatprep.subr.mxu0 0.0
    %4641 = vmatpush1.msra.mxu0 0.0
    %4642 = vmatprep.subr.mxu0 0.0
    %4643 = vmatpush1.msra.mxu0 0.0
    %4644 = vmatprep.subr.mxu0 0.0
    %4645 = vmatpush1.msra.mxu0 0.0
    %4646 = vmatprep.subr.mxu0 0.0
    %4647 = vmatpush1.msra.mxu0 0.0
    %4648 = vmatprep.subr.mxu0 0.0
    %4649 = vmatpush1.msra.mxu0 0.0
    %4650 = vmatprep.subr.mxu0 0.0
    %4651 = vmatpush1.msra.mxu0 0.0
    %4652 = vmatprep.subr.mxu0 0.0
    %4653 = vmatpush1.msra.mxu0 0.0
    %4654 = vmatprep.subr.mxu0 0.0
    %4655 = vmatpush1.msra.mxu0 0.0
    %4656 = vmatprep.subr.mxu0 0.0
    %4657 = vmatpush1.msra.mxu0 0.0
    %4658 = vmatprep.subr.mxu0 0.0
    %4659 = vmatpush1.msra.mxu0 0.0
    %4660 = vmatprep.subr.mxu0 0.0
    %4661 = vmatpush1.msra.mxu0 0.0
    %4662 = vmatprep.subr.mxu0 0.0
    %4663 = vmatpush1.msra.mxu0 0.0
    %4664 = vmatprep.subr.mxu0 0.0
    %4665 = vmatpush1.msra.mxu0 0.0
    %4666 = vmatprep.subr.mxu0 0.0
    %4667 = vmatpush1.msra.mxu0 0.0
    %4668 = vmatprep.subr.mxu0 0.0
    %4669 = vmatpush1.msra.mxu0 0.0
    %4670 = vmatprep.mubr.f32.mxu0 0.0
    %v4671 = vand.u32 %v4587, 4294901760
    %v4672 = vsub.f32 %v4587, %v4671
    %v4673 = vand.u32 %v4672, 4294901760
    %v4674 = vsub.f32 %v4672, %v4673
    %v4675 = vand.u32 %v4674, 4294901760
    %4676 = vmatmul.mubr.f32.gmra.mrb[0].mxu0 %v4675
    %v4677 = vpop.f32.mrb[0].mxu0
    %v4678 = vadd.f32 %v4589, %v4677
    %v4679 = vpop.f32.mrb[0].mxu0
    %4680 = vdwg.mxu0
    %4681 = vmatprep.subr.mxu0 0.0
    %v4682 = vand.u32 %v64, 4294901760
    %v4683 = vsub.f32 %v64, %v4682
    %v4684 = vand.u32 %v4683, 4294901760
    %v4685 = vsub.f32 %v4683, %v4684
    %v4686 = vand.u32 %v4685, 4294901760
    %4687 = vmatpush1.msra.mxu0 %v4686
    %4688 = vmatprep.subr.mxu0 0.0
    %v4689 = vand.u32 %v65, 4294901760
    %v4690 = vsub.f32 %v65, %v4689
    %v4691 = vand.u32 %v4690, 4294901760
    %v4692 = vsub.f32 %v4690, %v4691
    %v4693 = vand.u32 %v4692, 4294901760
    %4694 = vmatpush1.msra.mxu0 %v4693
    %4695 = vmatprep.subr.mxu0 0.0
    %v4696 = vand.u32 %v66, 4294901760
    %v4697 = vsub.f32 %v66, %v4696
    %v4698 = vand.u32 %v4697, 4294901760
    %v4699 = vsub.f32 %v4697, %v4698
    %v4700 = vand.u32 %v4699, 4294901760
    %4701 = vmatpush1.msra.mxu0 %v4700
    %4702 = vmatprep.subr.mxu0 0.0
    %v4703 = vand.u32 %v67, 4294901760
    %v4704 = vsub.f32 %v67, %v4703
    %v4705 = vand.u32 %v4704, 4294901760
    %v4706 = vsub.f32 %v4704, %v4705
    %v4707 = vand.u32 %v4706, 4294901760
    %4708 = vmatpush1.msra.mxu0 %v4707
    %4709 = vmatprep.subr.mxu0 0.0
    %v4710 = vand.u32 %v68, 4294901760
    %v4711 = vsub.f32 %v68, %v4710
    %v4712 = vand.u32 %v4711, 4294901760
    %v4713 = vsub.f32 %v4711, %v4712
    %v4714 = vand.u32 %v4713, 4294901760
    %4715 = vmatpush1.msra.mxu0 %v4714
    %4716 = vmatprep.subr.mxu0 0.0
    %v4717 = vand.u32 %v69, 4294901760
    %v4718 = vsub.f32 %v69, %v4717
    %v4719 = vand.u32 %v4718, 4294901760
    %v4720 = vsub.f32 %v4718, %v4719
    %v4721 = vand.u32 %v4720, 4294901760
    %4722 = vmatpush1.msra.mxu0 %v4721
    %4723 = vmatprep.subr.mxu0 0.0
    %v4724 = vand.u32 %v70, 4294901760
    %v4725 = vsub.f32 %v70, %v4724
    %v4726 = vand.u32 %v4725, 4294901760
    %v4727 = vsub.f32 %v4725, %v4726
    %v4728 = vand.u32 %v4727, 4294901760
    %4729 = vmatpush1.msra.mxu0 %v4728
    %4730 = vmatprep.subr.mxu0 0.0
    %v4731 = vand.u32 %v71, 4294901760
    %v4732 = vsub.f32 %v71, %v4731
    %v4733 = vand.u32 %v4732, 4294901760
    %v4734 = vsub.f32 %v4732, %v4733
    %v4735 = vand.u32 %v4734, 4294901760
    %4736 = vmatpush1.msra.mxu0 %v4735
    %4737 = vmatprep.subr.mxu0 0.0
    %v4738 = vand.u32 %v72, 4294901760
    %v4739 = vsub.f32 %v72, %v4738
    %v4740 = vand.u32 %v4739, 4294901760
    %v4741 = vsub.f32 %v4739, %v4740
    %v4742 = vand.u32 %v4741, 4294901760
    %4743 = vmatpush1.msra.mxu0 %v4742
    %4744 = vmatprep.subr.mxu0 0.0
    %v4745 = vand.u32 %v73, 4294901760
    %v4746 = vsub.f32 %v73, %v4745
    %v4747 = vand.u32 %v4746, 4294901760
    %v4748 = vsub.f32 %v4746, %v4747
    %v4749 = vand.u32 %v4748, 4294901760
    %4750 = vmatpush1.msra.mxu0 %v4749
    %4751 = vmatprep.subr.mxu0 0.0
    %v4752 = vand.u32 %v74, 4294901760
    %v4753 = vsub.f32 %v74, %v4752
    %v4754 = vand.u32 %v4753, 4294901760
    %v4755 = vsub.f32 %v4753, %v4754
    %v4756 = vand.u32 %v4755, 4294901760
    %4757 = vmatpush1.msra.mxu0 %v4756
    %4758 = vmatprep.subr.mxu0 0.0
    %v4759 = vand.u32 %v75, 4294901760
    %v4760 = vsub.f32 %v75, %v4759
    %v4761 = vand.u32 %v4760, 4294901760
    %v4762 = vsub.f32 %v4760, %v4761
    %v4763 = vand.u32 %v4762, 4294901760
    %4764 = vmatpush1.msra.mxu0 %v4763
    %4765 = vmatprep.subr.mxu0 0.0
    %v4766 = vand.u32 %v76, 4294901760
    %v4767 = vsub.f32 %v76, %v4766
    %v4768 = vand.u32 %v4767, 4294901760
    %v4769 = vsub.f32 %v4767, %v4768
    %v4770 = vand.u32 %v4769, 4294901760
    %4771 = vmatpush1.msra.mxu0 %v4770
    %4772 = vmatprep.subr.mxu0 0.0
    %v4773 = vand.u32 %v77, 4294901760
    %v4774 = vsub.f32 %v77, %v4773
    %v4775 = vand.u32 %v4774, 4294901760
    %v4776 = vsub.f32 %v4774, %v4775
    %v4777 = vand.u32 %v4776, 4294901760
    %4778 = vmatpush1.msra.mxu0 %v4777
    %4779 = vmatprep.subr.mxu0 0.0
    %v4780 = vand.u32 %v78, 4294901760
    %v4781 = vsub.f32 %v78, %v4780
    %v4782 = vand.u32 %v4781, 4294901760
    %v4783 = vsub.f32 %v4781, %v4782
    %v4784 = vand.u32 %v4783, 4294901760
    %4785 = vmatpush1.msra.mxu0 %v4784
    %4786 = vmatprep.subr.mxu0 0.0
    %v4787 = vand.u32 %v79, 4294901760
    %v4788 = vsub.f32 %v79, %v4787
    %v4789 = vand.u32 %v4788, 4294901760
    %v4790 = vsub.f32 %v4788, %v4789
    %v4791 = vand.u32 %v4790, 4294901760
    %4792 = vmatpush1.msra.mxu0 %v4791
    %4793 = vmatprep.subr.mxu0 0.0
    %4794 = vmatpush1.msra.mxu0 0.0
    %4795 = vmatprep.subr.mxu0 0.0
    %4796 = vmatpush1.msra.mxu0 0.0
    %4797 = vmatprep.subr.mxu0 0.0
    %4798 = vmatpush1.msra.mxu0 0.0
    %4799 = vmatprep.subr.mxu0 0.0
    %4800 = vmatpush1.msra.mxu0 0.0
    %4801 = vmatprep.subr.mxu0 0.0
    %4802 = vmatpush1.msra.mxu0 0.0
    %4803 = vmatprep.subr.mxu0 0.0
    %4804 = vmatpush1.msra.mxu0 0.0
    %4805 = vmatprep.subr.mxu0 0.0
    %4806 = vmatpush1.msra.mxu0 0.0
    %4807 = vmatprep.subr.mxu0 0.0
    %4808 = vmatpush1.msra.mxu0 0.0
    %4809 = vmatprep.subr.mxu0 0.0
    %4810 = vmatpush1.msra.mxu0 0.0
    %4811 = vmatprep.subr.mxu0 0.0
    %4812 = vmatpush1.msra.mxu0 0.0
    %4813 = vmatprep.subr.mxu0 0.0
    %4814 = vmatpush1.msra.mxu0 0.0
    %4815 = vmatprep.subr.mxu0 0.0
    %4816 = vmatpush1.msra.mxu0 0.0
    %4817 = vmatprep.subr.mxu0 0.0
    %4818 = vmatpush1.msra.mxu0 0.0
    %4819 = vmatprep.subr.mxu0 0.0
    %4820 = vmatpush1.msra.mxu0 0.0
    %4821 = vmatprep.subr.mxu0 0.0
    %4822 = vmatpush1.msra.mxu0 0.0
    %4823 = vmatprep.subr.mxu0 0.0
    %4824 = vmatpush1.msra.mxu0 0.0
    %4825 = vmatprep.mubr.f32.mxu0 0.0
    %v4826 = vand.u32 %v4587, 4294901760
    %4827 = vmatmul.mubr.f32.gmra.mrb[0].mxu0 %v4826
    %v4828 = vpop.f32.mrb[0].mxu0
    %v4829 = vadd.f32 %v4678, %v4828
    %v4830 = vpop.f32.mrb[0].mxu0
    %4831 = vdwg.mxu0
    %4832 = vmatprep.subr.mxu0 0.0
    %v4833 = vand.u32 %v64, 4294901760
    %v4834 = vsub.f32 %v64, %v4833
    %4835 = vmatpush1.msra.mxu0 %v4834
    %4836 = vmatprep.subr.mxu0 0.0
    %v4837 = vand.u32 %v65, 4294901760
    %v4838 = vsub.f32 %v65, %v4837
    %4839 = vmatpush1.msra.mxu0 %v4838
    %4840 = vmatprep.subr.mxu0 0.0
    %v4841 = vand.u32 %v66, 4294901760
    %v4842 = vsub.f32 %v66, %v4841
    %4843 = vmatpush1.msra.mxu0 %v4842
    %4844 = vmatprep.subr.mxu0 0.0
    %v4845 = vand.u32 %v67, 4294901760
    %v4846 = vsub.f32 %v67, %v4845
    %4847 = vmatpush1.msra.mxu0 %v4846
    %4848 = vmatprep.subr.mxu0 0.0
    %v4849 = vand.u32 %v68, 4294901760
    %v4850 = vsub.f32 %v68, %v4849
    %4851 = vmatpush1.msra.mxu0 %v4850
    %4852 = vmatprep.subr.mxu0 0.0
    %v4853 = vand.u32 %v69, 4294901760
    %v4854 = vsub.f32 %v69, %v4853
    %4855 = vmatpush1.msra.mxu0 %v4854
    %4856 = vmatprep.subr.mxu0 0.0
    %v4857 = vand.u32 %v70, 4294901760
    %v4858 = vsub.f32 %v70, %v4857
    %4859 = vmatpush1.msra.mxu0 %v4858
    %4860 = vmatprep.subr.mxu0 0.0
    %v4861 = vand.u32 %v71, 4294901760
    %v4862 = vsub.f32 %v71, %v4861
    %4863 = vmatpush1.msra.mxu0 %v4862
    %4864 = vmatprep.subr.mxu0 0.0
    %v4865 = vand.u32 %v72, 4294901760
    %v4866 = vsub.f32 %v72, %v4865
    %4867 = vmatpush1.msra.mxu0 %v4866
    %4868 = vmatprep.subr.mxu0 0.0
    %v4869 = vand.u32 %v73, 4294901760
    %v4870 = vsub.f32 %v73, %v4869
    %4871 = vmatpush1.msra.mxu0 %v4870
    %4872 = vmatprep.subr.mxu0 0.0
    %v4873 = vand.u32 %v74, 4294901760
    %v4874 = vsub.f32 %v74, %v4873
    %4875 = vmatpush1.msra.mxu0 %v4874
    %4876 = vmatprep.subr.mxu0 0.0
    %v4877 = vand.u32 %v75, 4294901760
    %v4878 = vsub.f32 %v75, %v4877
    %4879 = vmatpush1.msra.mxu0 %v4878
    %4880 = vmatprep.subr.mxu0 0.0
    %v4881 = vand.u32 %v76, 4294901760
    %v4882 = vsub.f32 %v76, %v4881
    %4883 = vmatpush1.msra.mxu0 %v4882
    %4884 = vmatprep.subr.mxu0 0.0
    %v4885 = vand.u32 %v77, 4294901760
    %v4886 = vsub.f32 %v77, %v4885
    %4887 = vmatpush1.msra.mxu0 %v4886
    %4888 = vmatprep.subr.mxu0 0.0
    %v4889 = vand.u32 %v78, 4294901760
    %v4890 = vsub.f32 %v78, %v4889
    %4891 = vmatpush1.msra.mxu0 %v4890
    %4892 = vmatprep.subr.mxu0 0.0
    %v4893 = vand.u32 %v79, 4294901760
    %v4894 = vsub.f32 %v79, %v4893
    %4895 = vmatpush1.msra.mxu0 %v4894
    %4896 = vmatprep.subr.mxu0 0.0
    %4897 = vmatpush1.msra.mxu0 0.0
    %4898 = vmatprep.subr.mxu0 0.0
    %4899 = vmatpush1.msra.mxu0 0.0
    %4900 = vmatprep.subr.mxu0 0.0
    %4901 = vmatpush1.msra.mxu0 0.0
    %4902 = vmatprep.subr.mxu0 0.0
    %4903 = vmatpush1.msra.mxu0 0.0
    %4904 = vmatprep.subr.mxu0 0.0
    %4905 = vmatpush1.msra.mxu0 0.0
    %4906 = vmatprep.subr.mxu0 0.0
    %4907 = vmatpush1.msra.mxu0 0.0
    %4908 = vmatprep.subr.mxu0 0.0
    %4909 = vmatpush1.msra.mxu0 0.0
    %4910 = vmatprep.subr.mxu0 0.0
    %4911 = vmatpush1.msra.mxu0 0.0
    %4912 = vmatprep.subr.mxu0 0.0
    %4913 = vmatpush1.msra.mxu0 0.0
    %4914 = vmatprep.subr.mxu0 0.0
    %4915 = vmatpush1.msra.mxu0 0.0
    %4916 = vmatprep.subr.mxu0 0.0
    %4917 = vmatpush1.msra.mxu0 0.0
    %4918 = vmatprep.subr.mxu0 0.0
    %4919 = vmatpush1.msra.mxu0 0.0
    %4920 = vmatprep.subr.mxu0 0.0
    %4921 = vmatpush1.msra.mxu0 0.0
    %4922 = vmatprep.subr.mxu0 0.0
    %4923 = vmatpush1.msra.mxu0 0.0
    %4924 = vmatprep.subr.mxu0 0.0
    %4925 = vmatpush1.msra.mxu0 0.0
    %4926 = vmatprep.subr.mxu0 0.0
    %4927 = vmatpush1.msra.mxu0 0.0
    %4928 = vmatprep.mubr.f32.mxu0 0.0
    %v4929 = vand.u32 %v4587, 4294901760
    %v4930 = vsub.f32 %v4587, %v4929
    %4931 = vmatmul.mubr.f32.gmra.mrb[0].mxu0 %v4930
    %v4932 = vpop.f32.mrb[0].mxu0
    %v4933 = vadd.f32 %v4829, %v4932
    %v4934 = vpop.f32.mrb[0].mxu0
    %4935 = vdwg.mxu0
    %4936 = vmatprep.subr.mxu0 0.0
    %v4937 = vand.u32 %v64, 4294901760
    %4938 = vmatpush1.msra.mxu0 %v4937
    %4939 = vmatprep.subr.mxu0 0.0
    %v4940 = vand.u32 %v65, 4294901760
    %4941 = vmatpush1.msra.mxu0 %v4940
    %4942 = vmatprep.subr.mxu0 0.0
    %v4943 = vand.u32 %v66, 4294901760
    %4944 = vmatpush1.msra.mxu0 %v4943
    %4945 = vmatprep.subr.mxu0 0.0
    %v4946 = vand.u32 %v67, 4294901760
    %4947 = vmatpush1.msra.mxu0 %v4946
    %4948 = vmatprep.subr.mxu0 0.0
    %v4949 = vand.u32 %v68, 4294901760
    %4950 = vmatpush1.msra.mxu0 %v4949
    %4951 = vmatprep.subr.mxu0 0.0
    %v4952 = vand.u32 %v69, 4294901760
    %4953 = vmatpush1.msra.mxu0 %v4952
    %4954 = vmatprep.subr.mxu0 0.0
    %v4955 = vand.u32 %v70, 4294901760
    %4956 = vmatpush1.msra.mxu0 %v4955
    %4957 = vmatprep.subr.mxu0 0.0
    %v4958 = vand.u32 %v71, 4294901760
    %4959 = vmatpush1.msra.mxu0 %v4958
    %4960 = vmatprep.subr.mxu0 0.0
    %v4961 = vand.u32 %v72, 4294901760
    %4962 = vmatpush1.msra.mxu0 %v4961
    %4963 = vmatprep.subr.mxu0 0.0
    %v4964 = vand.u32 %v73, 4294901760
    %4965 = vmatpush1.msra.mxu0 %v4964
    %4966 = vmatprep.subr.mxu0 0.0
    %v4967 = vand.u32 %v74, 4294901760
    %4968 = vmatpush1.msra.mxu0 %v4967
    %4969 = vmatprep.subr.mxu0 0.0
    %v4970 = vand.u32 %v75, 4294901760
    %4971 = vmatpush1.msra.mxu0 %v4970
    %4972 = vmatprep.subr.mxu0 0.0
    %v4973 = vand.u32 %v76, 4294901760
    %4974 = vmatpush1.msra.mxu0 %v4973
    %4975 = vmatprep.subr.mxu0 0.0
    %v4976 = vand.u32 %v77, 4294901760
    %4977 = vmatpush1.msra.mxu0 %v4976
    %4978 = vmatprep.subr.mxu0 0.0
    %v4979 = vand.u32 %v78, 4294901760
    %4980 = vmatpush1.msra.mxu0 %v4979
    %4981 = vmatprep.subr.mxu0 0.0
    %v4982 = vand.u32 %v79, 4294901760
    %4983 = vmatpush1.msra.mxu0 %v4982
    %4984 = vmatprep.subr.mxu0 0.0
    %4985 = vmatpush1.msra.mxu0 0.0
    %4986 = vmatprep.subr.mxu0 0.0
    %4987 = vmatpush1.msra.mxu0 0.0
    %4988 = vmatprep.subr.mxu0 0.0
    %4989 = vmatpush1.msra.mxu0 0.0
    %4990 = vmatprep.subr.mxu0 0.0
    %4991 = vmatpush1.msra.mxu0 0.0
    %4992 = vmatprep.subr.mxu0 0.0
    %4993 = vmatpush1.msra.mxu0 0.0
    %4994 = vmatprep.subr.mxu0 0.0
    %4995 = vmatpush1.msra.mxu0 0.0
    %4996 = vmatprep.subr.mxu0 0.0
    %4997 = vmatpush1.msra.mxu0 0.0
    %4998 = vmatprep.subr.mxu0 0.0
    %4999 = vmatpush1.msra.mxu0 0.0
    %5000 = vmatprep.subr.mxu0 0.0
    %5001 = vmatpush1.msra.mxu0 0.0
    %5002 = vmatprep.subr.mxu0 0.0
    %5003 = vmatpush1.msra.mxu0 0.0
    %5004 = vmatprep.subr.mxu0 0.0
    %5005 = vmatpush1.msra.mxu0 0.0
    %5006 = vmatprep.subr.mxu0 0.0
    %5007 = vmatpush1.msra.mxu0 0.0
    %5008 = vmatprep.subr.mxu0 0.0
    %5009 = vmatpush1.msra.mxu0 0.0
    %5010 = vmatprep.subr.mxu0 0.0
    %5011 = vmatpush1.msra.mxu0 0.0
    %5012 = vmatprep.subr.mxu0 0.0
    %5013 = vmatpush1.msra.mxu0 0.0
    %5014 = vmatprep.subr.mxu0 0.0
    %5015 = vmatpush1.msra.mxu0 0.0
    %5016 = vmatprep.mubr.f32.mxu0 0.0
    %v5017 = vand.u32 %v4587, 4294901760
    %v5018 = vsub.f32 %v4587, %v5017
    %v5019 = vand.u32 %v5018, 4294901760
    %5020 = vmatmul.mubr.f32.gmra.mrb[0].mxu0 %v5019
    %v5021 = vpop.f32.mrb[0].mxu0
    %v5022 = vadd.f32 %v4933, %v5021
    %v5023 = vpop.f32.mrb[0].mxu0
    %5024 = vdwg.mxu0
    %5025 = vmatprep.subr.mxu0 0.0
    %v5026 = vand.u32 %v64, 4294901760
    %v5027 = vsub.f32 %v64, %v5026
    %v5028 = vand.u32 %v5027, 4294901760
    %5029 = vmatpush1.msra.mxu0 %v5028
    %5030 = vmatprep.subr.mxu0 0.0
    %v5031 = vand.u32 %v65, 4294901760
    %v5032 = vsub.f32 %v65, %v5031
    %v5033 = vand.u32 %v5032, 4294901760
    %5034 = vmatpush1.msra.mxu0 %v5033
    %5035 = vmatprep.subr.mxu0 0.0
    %v5036 = vand.u32 %v66, 4294901760
    %v5037 = vsub.f32 %v66, %v5036
    %v5038 = vand.u32 %v5037, 4294901760
    %5039 = vmatpush1.msra.mxu0 %v5038
    %5040 = vmatprep.subr.mxu0 0.0
    %v5041 = vand.u32 %v67, 4294901760
    %v5042 = vsub.f32 %v67, %v5041
    %v5043 = vand.u32 %v5042, 4294901760
    %5044 = vmatpush1.msra.mxu0 %v5043
    %5045 = vmatprep.subr.mxu0 0.0
    %v5046 = vand.u32 %v68, 4294901760
    %v5047 = vsub.f32 %v68, %v5046
    %v5048 = vand.u32 %v5047, 4294901760
    %5049 = vmatpush1.msra.mxu0 %v5048
    %5050 = vmatprep.subr.mxu0 0.0
    %v5051 = vand.u32 %v69, 4294901760
    %v5052 = vsub.f32 %v69, %v5051
    %v5053 = vand.u32 %v5052, 4294901760
    %5054 = vmatpush1.msra.mxu0 %v5053
    %5055 = vmatprep.subr.mxu0 0.0
    %v5056 = vand.u32 %v70, 4294901760
    %v5057 = vsub.f32 %v70, %v5056
    %v5058 = vand.u32 %v5057, 4294901760
    %5059 = vmatpush1.msra.mxu0 %v5058
    %5060 = vmatprep.subr.mxu0 0.0
    %v5061 = vand.u32 %v71, 4294901760
    %v5062 = vsub.f32 %v71, %v5061
    %v5063 = vand.u32 %v5062, 4294901760
    %5064 = vmatpush1.msra.mxu0 %v5063
    %5065 = vmatprep.subr.mxu0 0.0
    %v5066 = vand.u32 %v72, 4294901760
    %v5067 = vsub.f32 %v72, %v5066
    %v5068 = vand.u32 %v5067, 4294901760
    %5069 = vmatpush1.msra.mxu0 %v5068
    %5070 = vmatprep.subr.mxu0 0.0
    %v5071 = vand.u32 %v73, 4294901760
    %v5072 = vsub.f32 %v73, %v5071
    %v5073 = vand.u32 %v5072, 4294901760
    %5074 = vmatpush1.msra.mxu0 %v5073
    %5075 = vmatprep.subr.mxu0 0.0
    %v5076 = vand.u32 %v74, 4294901760
    %v5077 = vsub.f32 %v74, %v5076
    %v5078 = vand.u32 %v5077, 4294901760
    %5079 = vmatpush1.msra.mxu0 %v5078
    %5080 = vmatprep.subr.mxu0 0.0
    %v5081 = vand.u32 %v75, 4294901760
    %v5082 = vsub.f32 %v75, %v5081
    %v5083 = vand.u32 %v5082, 4294901760
    %5084 = vmatpush1.msra.mxu0 %v5083
    %5085 = vmatprep.subr.mxu0 0.0
    %v5086 = vand.u32 %v76, 4294901760
    %v5087 = vsub.f32 %v76, %v5086
    %v5088 = vand.u32 %v5087, 4294901760
    %5089 = vmatpush1.msra.mxu0 %v5088
    %5090 = vmatprep.subr.mxu0 0.0
    %v5091 = vand.u32 %v77, 4294901760
    %v5092 = vsub.f32 %v77, %v5091
    %v5093 = vand.u32 %v5092, 4294901760
    %5094 = vmatpush1.msra.mxu0 %v5093
    %5095 = vmatprep.subr.mxu0 0.0
    %v5096 = vand.u32 %v78, 4294901760
    %v5097 = vsub.f32 %v78, %v5096
    %v5098 = vand.u32 %v5097, 4294901760
    %5099 = vmatpush1.msra.mxu0 %v5098
    %5100 = vmatprep.subr.mxu0 0.0
    %v5101 = vand.u32 %v79, 4294901760
    %v5102 = vsub.f32 %v79, %v5101
    %v5103 = vand.u32 %v5102, 4294901760
    %5104 = vmatpush1.msra.mxu0 %v5103
    %5105 = vmatprep.subr.mxu0 0.0
    %5106 = vmatpush1.msra.mxu0 0.0
    %5107 = vmatprep.subr.mxu0 0.0
    %5108 = vmatpush1.msra.mxu0 0.0
    %5109 = vmatprep.subr.mxu0 0.0
    %5110 = vmatpush1.msra.mxu0 0.0
    %5111 = vmatprep.subr.mxu0 0.0
    %5112 = vmatpush1.msra.mxu0 0.0
    %5113 = vmatprep.subr.mxu0 0.0
    %5114 = vmatpush1.msra.mxu0 0.0
    %5115 = vmatprep.subr.mxu0 0.0
    %5116 = vmatpush1.msra.mxu0 0.0
    %5117 = vmatprep.subr.mxu0 0.0
    %5118 = vmatpush1.msra.mxu0 0.0
    %5119 = vmatprep.subr.mxu0 0.0
    %5120 = vmatpush1.msra.mxu0 0.0
    %5121 = vmatprep.subr.mxu0 0.0
    %5122 = vmatpush1.msra.mxu0 0.0
    %5123 = vmatprep.subr.mxu0 0.0
    %5124 = vmatpush1.msra.mxu0 0.0
    %5125 = vmatprep.subr.mxu0 0.0
    %5126 = vmatpush1.msra.mxu0 0.0
    %5127 = vmatprep.subr.mxu0 0.0
    %5128 = vmatpush1.msra.mxu0 0.0
    %5129 = vmatprep.subr.mxu0 0.0
    %5130 = vmatpush1.msra.mxu0 0.0
    %5131 = vmatprep.subr.mxu0 0.0
    %5132 = vmatpush1.msra.mxu0 0.0
    %5133 = vmatprep.subr.mxu0 0.0
    %5134 = vmatpush1.msra.mxu0 0.0
    %5135 = vmatprep.subr.mxu0 0.0
    %5136 = vmatpush1.msra.mxu0 0.0
    %5137 = vmatprep.mubr.f32.mxu0 0.0
    %v5138 = vand.u32 %v4587, 4294901760
    %5139 = vmatmul.mubr.f32.gmra.mrb[0].mxu0 %v5138
    %v5140 = vpop.f32.mrb[0].mxu0
    %v5141 = vadd.f32 %v5022, %v5140
    %v5142 = vpop.f32.mrb[0].mxu0
    %5143 = vdwg.mxu0
    %5144 = vmatprep.subr.mxu0 0.0
    %v5145 = vand.u32 %v64, 4294901760
    %5146 = vmatpush1.msra.mxu0 %v5145
    %5147 = vmatprep.subr.mxu0 0.0
    %v5148 = vand.u32 %v65, 4294901760
    %5149 = vmatpush1.msra.mxu0 %v5148
    %5150 = vmatprep.subr.mxu0 0.0
    %v5151 = vand.u32 %v66, 4294901760
    %5152 = vmatpush1.msra.mxu0 %v5151
    %5153 = vmatprep.subr.mxu0 0.0
    %v5154 = vand.u32 %v67, 4294901760
    %5155 = vmatpush1.msra.mxu0 %v5154
    %5156 = vmatprep.subr.mxu0 0.0
    %v5157 = vand.u32 %v68, 4294901760
    %5158 = vmatpush1.msra.mxu0 %v5157
    %5159 = vmatprep.subr.mxu0 0.0
    %v5160 = vand.u32 %v69, 4294901760
    %5161 = vmatpush1.msra.mxu0 %v5160
    %5162 = vmatprep.subr.mxu0 0.0
    %v5163 = vand.u32 %v70, 4294901760
    %5164 = vmatpush1.msra.mxu0 %v5163
    %5165 = vmatprep.subr.mxu0 0.0
    %v5166 = vand.u32 %v71, 4294901760
    %5167 = vmatpush1.msra.mxu0 %v5166
    %5168 = vmatprep.subr.mxu0 0.0
    %v5169 = vand.u32 %v72, 4294901760
    %5170 = vmatpush1.msra.mxu0 %v5169
    %5171 = vmatprep.subr.mxu0 0.0
    %v5172 = vand.u32 %v73, 4294901760
    %5173 = vmatpush1.msra.mxu0 %v5172
    %5174 = vmatprep.subr.mxu0 0.0
    %v5175 = vand.u32 %v74, 4294901760
    %5176 = vmatpush1.msra.mxu0 %v5175
    %5177 = vmatprep.subr.mxu0 0.0
    %v5178 = vand.u32 %v75, 4294901760
    %5179 = vmatpush1.msra.mxu0 %v5178
    %5180 = vmatprep.subr.mxu0 0.0
    %v5181 = vand.u32 %v76, 4294901760
    %5182 = vmatpush1.msra.mxu0 %v5181
    %5183 = vmatprep.subr.mxu0 0.0
    %v5184 = vand.u32 %v77, 4294901760
    %5185 = vmatpush1.msra.mxu0 %v5184
    %5186 = vmatprep.subr.mxu0 0.0
    %v5187 = vand.u32 %v78, 4294901760
    %5188 = vmatpush1.msra.mxu0 %v5187
    %5189 = vmatprep.subr.mxu0 0.0
    %v5190 = vand.u32 %v79, 4294901760
    %5191 = vmatpush1.msra.mxu0 %v5190
    %5192 = vmatprep.subr.mxu0 0.0
    %5193 = vmatpush1.msra.mxu0 0.0
    %5194 = vmatprep.subr.mxu0 0.0
    %5195 = vmatpush1.msra.mxu0 0.0
    %5196 = vmatprep.subr.mxu0 0.0
    %5197 = vmatpush1.msra.mxu0 0.0
    %5198 = vmatprep.subr.mxu0 0.0
    %5199 = vmatpush1.msra.mxu0 0.0
    %5200 = vmatprep.subr.mxu0 0.0
    %5201 = vmatpush1.msra.mxu0 0.0
    %5202 = vmatprep.subr.mxu0 0.0
    %5203 = vmatpush1.msra.mxu0 0.0
    %5204 = vmatprep.subr.mxu0 0.0
    %5205 = vmatpush1.msra.mxu0 0.0
    %5206 = vmatprep.subr.mxu0 0.0
    %5207 = vmatpush1.msra.mxu0 0.0
    %5208 = vmatprep.subr.mxu0 0.0
    %5209 = vmatpush1.msra.mxu0 0.0
    %5210 = vmatprep.subr.mxu0 0.0
    %5211 = vmatpush1.msra.mxu0 0.0
    %5212 = vmatprep.subr.mxu0 0.0
    %5213 = vmatpush1.msra.mxu0 0.0
    %5214 = vmatprep.subr.mxu0 0.0
    %5215 = vmatpush1.msra.mxu0 0.0
    %5216 = vmatprep.subr.mxu0 0.0
    %5217 = vmatpush1.msra.mxu0 0.0
    %5218 = vmatprep.subr.mxu0 0.0
    %5219 = vmatpush1.msra.mxu0 0.0
    %5220 = vmatprep.subr.mxu0 0.0
    %5221 = vmatpush1.msra.mxu0 0.0
    %5222 = vmatprep.subr.mxu0 0.0
    %5223 = vmatpush1.msra.mxu0 0.0
    %5224 = vmatprep.mubr.f32.mxu0 0.0
    %v5225 = vand.u32 %v4587, 4294901760
    %5226 = vmatmul.mubr.f32.gmra.mrb[0].mxu0 %v5225
    %v5227 = vpop.f32.mrb[0].mxu0
    %v5228 = vadd.f32 %v5141, %v5227
    %v5229 = vpop.f32.mrb[0].mxu0
    %5230 = vdwg.mxu0
    %v5231 = vtanh.pop %v5228
    %5232 = vst [vmem:[#allocation2] sm:$0xff] %v5231
    // Predicated region
    $region34: #{tpu_custom_call.1} parent=1 // pred_check
      %p5233 = pneg %p59
    $region35: #{tpu_custom_call.1} parent=1 // pred_check_branch
      %5235 = sbr.rel (%p5233) target = $region37
    $region36: #{tpu_custom_call.1} parent=1 // pred_region
      %v5236 = vld [vmem:[#allocation2] sm:$0xff]
      %v5237 = vld [vmem:[#allocation8] sm:$0xff]
      %v5238 = vld [vmem:[#allocation8 + $0x8] sm:$0xff]
      %v5239 = vld [vmem:[#allocation8 + $0x10] sm:$0xff]
      %v5240 = vld [vmem:[#allocation8 + $0x18] sm:$0xff]
      %v5241 = vld [vmem:[#allocation8 + $0x20] sm:$0xff]
      %v5242 = vld [vmem:[#allocation8 + $0x28] sm:$0xff]
      %v5243 = vld [vmem:[#allocation8 + $0x30] sm:$0xff]
      %v5244 = vld [vmem:[#allocation8 + $0x38] sm:$0xff]
      %v5245 = vld [vmem:[#allocation8 + $0x40] sm:$0xff]
      %v5246 = vld [vmem:[#allocation8 + $0x48] sm:$0xff]
      %v5247 = vld [vmem:[#allocation8 + $0x50] sm:$0xff]
      %v5248 = vld [vmem:[#allocation8 + $0x58] sm:$0xff]
      %v5249 = vld [vmem:[#allocation8 + $0x60] sm:$0xff]
      %v5250 = vld [vmem:[#allocation8 + $0x68] sm:$0xff]
      %v5251 = vld [vmem:[#allocation8 + $0x70] sm:$0xff]
      %v5252 = vld [vmem:[#allocation8 + $0x78] sm:$0xff]
      %v5253 = vld [vmem:[%s3] sm:$0x1]
      %v5255 = vlaneseq
      %v5256 = vshrl.u32 %v5255, 7
      %v5257 = vsub.s32 0, %v5256
      %v5258 = vrot.slane %v5253, %v5257
      %5260 = vmatprep.subr.mxu0 0.0
      %v5261 = vand.u32 %v5237, 4294901760
      %5262 = vmatpush1.msra.mxu0 %v5261
      %5263 = vmatprep.subr.mxu0 0.0
      %v5264 = vand.u32 %v5238, 4294901760
      %5265 = vmatpush1.msra.mxu0 %v5264
      %5266 = vmatprep.subr.mxu0 0.0
      %v5267 = vand.u32 %v5239, 4294901760
      %5268 = vmatpush1.msra.mxu0 %v5267
      %5269 = vmatprep.subr.mxu0 0.0
      %v5270 = vand.u32 %v5240, 4294901760
      %5271 = vmatpush1.msra.mxu0 %v5270
      %5272 = vmatprep.subr.mxu0 0.0
      %v5273 = vand.u32 %v5241, 4294901760
      %5274 = vmatpush1.msra.mxu0 %v5273
      %5275 = vmatprep.subr.mxu0 0.0
      %v5276 = vand.u32 %v5242, 4294901760
      %5277 = vmatpush1.msra.mxu0 %v5276
      %5278 = vmatprep.subr.mxu0 0.0
      %v5279 = vand.u32 %v5243, 4294901760
      %5280 = vmatpush1.msra.mxu0 %v5279
      %5281 = vmatprep.subr.mxu0 0.0
      %v5282 = vand.u32 %v5244, 4294901760
      %5283 = vmatpush1.msra.mxu0 %v5282
      %5284 = vmatprep.subr.mxu0 0.0
      %v5285 = vand.u32 %v5245, 4294901760
      %5286 = vmatpush1.msra.mxu0 %v5285
      %5287 = vmatprep.subr.mxu0 0.0
      %v5288 = vand.u32 %v5246, 4294901760
      %5289 = vmatpush1.msra.mxu0 %v5288
      %5290 = vmatprep.subr.mxu0 0.0
      %v5291 = vand.u32 %v5247, 4294901760
      %5292 = vmatpush1.msra.mxu0 %v5291
      %5293 = vmatprep.subr.mxu0 0.0
      %v5294 = vand.u32 %v5248, 4294901760
      %5295 = vmatpush1.msra.mxu0 %v5294
      %5296 = vmatprep.subr.mxu0 0.0
      %v5297 = vand.u32 %v5249, 4294901760
      %5298 = vmatpush1.msra.mxu0 %v5297
      %5299 = vmatprep.subr.mxu0 0.0
      %v5300 = vand.u32 %v5250, 4294901760
      %5301 = vmatpush1.msra.mxu0 %v5300
      %5302 = vmatprep.subr.mxu0 0.0
      %v5303 = vand.u32 %v5251, 4294901760
      %5304 = vmatpush1.msra.mxu0 %v5303
      %5305 = vmatprep.subr.mxu0 0.0
      %v5306 = vand.u32 %v5252, 4294901760
      %5307 = vmatpush1.msra.mxu0 %v5306
      %5308 = vmatprep.subr.mxu0 0.0
      %5309 = vmatpush1.msra.mxu0 0.0
      %5310 = vmatprep.subr.mxu0 0.0
      %5311 = vmatpush1.msra.mxu0 0.0
      %5312 = vmatprep.subr.mxu0 0.0
      %5313 = vmatpush1.msra.mxu0 0.0
      %5314 = vmatprep.subr.mxu0 0.0
      %5315 = vmatpush1.msra.mxu0 0.0
      %5316 = vmatprep.subr.mxu0 0.0
      %5317 = vmatpush1.msra.mxu0 0.0
      %5318 = vmatprep.subr.mxu0 0.0
      %5319 = vmatpush1.msra.mxu0 0.0
      %5320 = vmatprep.subr.mxu0 0.0
      %5321 = vmatpush1.msra.mxu0 0.0
      %5322 = vmatprep.subr.mxu0 0.0
      %5323 = vmatpush1.msra.mxu0 0.0
      %5324 = vmatprep.subr.mxu0 0.0
      %5325 = vmatpush1.msra.mxu0 0.0
      %5326 = vmatprep.subr.mxu0 0.0
      %5327 = vmatpush1.msra.mxu0 0.0
      %5328 = vmatprep.subr.mxu0 0.0
      %5329 = vmatpush1.msra.mxu0 0.0
      %5330 = vmatprep.subr.mxu0 0.0
      %5331 = vmatpush1.msra.mxu0 0.0
      %5332 = vmatprep.subr.mxu0 0.0
      %5333 = vmatpush1.msra.mxu0 0.0
      %5334 = vmatprep.subr.mxu0 0.0
      %5335 = vmatpush1.msra.mxu0 0.0
      %5336 = vmatprep.subr.mxu0 0.0
      %5337 = vmatpush1.msra.mxu0 0.0
      %5338 = vmatprep.subr.mxu0 0.0
      %5339 = vmatpush1.msra.mxu0 0.0
      %5340 = vmatprep.mubr.f32.mxu0 0.0
      %v5341 = vand.u32 %v5236, 4294901760
      %v5342 = vsub.f32 %v5236, %v5341
      %v5343 = vand.u32 %v5342, 4294901760
      %v5344 = vsub.f32 %v5342, %v5343
      %v5345 = vand.u32 %v5344, 4294901760
      %5346 = vmatmul.mubr.f32.gmra.mrb[0].mxu0 %v5345
      %v5347 = vpop.f32.mrb[0].mxu0
      %v5348 = vadd.f32 %v5258, %v5347
      %v5349 = vpop.f32.mrb[0].mxu0
      %5350 = vdwg.mxu0
      %5351 = vmatprep.subr.mxu0 0.0
      %v5352 = vand.u32 %v5237, 4294901760
      %v5353 = vsub.f32 %v5237, %v5352
      %v5354 = vand.u32 %v5353, 4294901760
      %v5355 = vsub.f32 %v5353, %v5354
      %v5356 = vand.u32 %v5355, 4294901760
      %5357 = vmatpush1.msra.mxu0 %v5356
      %5358 = vmatprep.subr.mxu0 0.0
      %v5359 = vand.u32 %v5238, 4294901760
      %v5360 = vsub.f32 %v5238, %v5359
      %v5361 = vand.u32 %v5360, 4294901760
      %v5362 = vsub.f32 %v5360, %v5361
      %v5363 = vand.u32 %v5362, 4294901760
      %5364 = vmatpush1.msra.mxu0 %v5363
      %5365 = vmatprep.subr.mxu0 0.0
      %v5366 = vand.u32 %v5239, 4294901760
      %v5367 = vsub.f32 %v5239, %v5366
      %v5368 = vand.u32 %v5367, 4294901760
      %v5369 = vsub.f32 %v5367, %v5368
      %v5370 = vand.u32 %v5369, 4294901760
      %5371 = vmatpush1.msra.mxu0 %v5370
      %5372 = vmatprep.subr.mxu0 0.0
      %v5373 = vand.u32 %v5240, 4294901760
      %v5374 = vsub.f32 %v5240, %v5373
      %v5375 = vand.u32 %v5374, 4294901760
      %v5376 = vsub.f32 %v5374, %v5375
      %v5377 = vand.u32 %v5376, 4294901760
      %5378 = vmatpush1.msra.mxu0 %v5377
      %5379 = vmatprep.subr.mxu0 0.0
      %v5380 = vand.u32 %v5241, 4294901760
      %v5381 = vsub.f32 %v5241, %v5380
      %v5382 = vand.u32 %v5381, 4294901760
      %v5383 = vsub.f32 %v5381, %v5382
      %v5384 = vand.u32 %v5383, 4294901760
      %5385 = vmatpush1.msra.mxu0 %v5384
      %5386 = vmatprep.subr.mxu0 0.0
      %v5387 = vand.u32 %v5242, 4294901760
      %v5388 = vsub.f32 %v5242, %v5387
      %v5389 = vand.u32 %v5388, 4294901760
      %v5390 = vsub.f32 %v5388, %v5389
      %v5391 = vand.u32 %v5390, 4294901760
      %5392 = vmatpush1.msra.mxu0 %v5391
      %5393 = vmatprep.subr.mxu0 0.0
      %v5394 = vand.u32 %v5243, 4294901760
      %v5395 = vsub.f32 %v5243, %v5394
      %v5396 = vand.u32 %v5395, 4294901760
      %v5397 = vsub.f32 %v5395, %v5396
      %v5398 = vand.u32 %v5397, 4294901760
      %5399 = vmatpush1.msra.mxu0 %v5398
      %5400 = vmatprep.subr.mxu0 0.0
      %v5401 = vand.u32 %v5244, 4294901760
      %v5402 = vsub.f32 %v5244, %v5401
      %v5403 = vand.u32 %v5402, 4294901760
      %v5404 = vsub.f32 %v5402, %v5403
      %v5405 = vand.u32 %v5404, 4294901760
      %5406 = vmatpush1.msra.mxu0 %v5405
      %5407 = vmatprep.subr.mxu0 0.0
      %v5408 = vand.u32 %v5245, 4294901760
      %v5409 = vsub.f32 %v5245, %v5408
      %v5410 = vand.u32 %v5409, 4294901760
      %v5411 = vsub.f32 %v5409, %v5410
      %v5412 = vand.u32 %v5411, 4294901760
      %5413 = vmatpush1.msra.mxu0 %v5412
      %5414 = vmatprep.subr.mxu0 0.0
      %v5415 = vand.u32 %v5246, 4294901760
      %v5416 = vsub.f32 %v5246, %v5415
      %v5417 = vand.u32 %v5416, 4294901760
      %v5418 = vsub.f32 %v5416, %v5417
      %v5419 = vand.u32 %v5418, 4294901760
      %5420 = vmatpush1.msra.mxu0 %v5419
      %5421 = vmatprep.subr.mxu0 0.0
      %v5422 = vand.u32 %v5247, 4294901760
      %v5423 = vsub.f32 %v5247, %v5422
      %v5424 = vand.u32 %v5423, 4294901760
      %v5425 = vsub.f32 %v5423, %v5424
      %v5426 = vand.u32 %v5425, 4294901760
      %5427 = vmatpush1.msra.mxu0 %v5426
      %5428 = vmatprep.subr.mxu0 0.0
      %v5429 = vand.u32 %v5248, 4294901760
      %v5430 = vsub.f32 %v5248, %v5429
      %v5431 = vand.u32 %v5430, 4294901760
      %v5432 = vsub.f32 %v5430, %v5431
      %v5433 = vand.u32 %v5432, 4294901760
      %5434 = vmatpush1.msra.mxu0 %v5433
      %5435 = vmatprep.subr.mxu0 0.0
      %v5436 = vand.u32 %v5249, 4294901760
      %v5437 = vsub.f32 %v5249, %v5436
      %v5438 = vand.u32 %v5437, 4294901760
      %v5439 = vsub.f32 %v5437, %v5438
      %v5440 = vand.u32 %v5439, 4294901760
      %5441 = vmatpush1.msra.mxu0 %v5440
      %5442 = vmatprep.subr.mxu0 0.0
      %v5443 = vand.u32 %v5250, 4294901760
      %v5444 = vsub.f32 %v5250, %v5443
      %v5445 = vand.u32 %v5444, 4294901760
      %v5446 = vsub.f32 %v5444, %v5445
      %v5447 = vand.u32 %v5446, 4294901760
      %5448 = vmatpush1.msra.mxu0 %v5447
      %5449 = vmatprep.subr.mxu0 0.0
      %v5450 = vand.u32 %v5251, 4294901760
      %v5451 = vsub.f32 %v5251, %v5450
      %v5452 = vand.u32 %v5451, 4294901760
      %v5453 = vsub.f32 %v5451, %v5452
      %v5454 = vand.u32 %v5453, 4294901760
      %5455 = vmatpush1.msra.mxu0 %v5454
      %5456 = vmatprep.subr.mxu0 0.0
      %v5457 = vand.u32 %v5252, 4294901760
      %v5458 = vsub.f32 %v5252, %v5457
      %v5459 = vand.u32 %v5458, 4294901760
      %v5460 = vsub.f32 %v5458, %v5459
      %v5461 = vand.u32 %v5460, 4294901760
      %5462 = vmatpush1.msra.mxu0 %v5461
      %5463 = vmatprep.subr.mxu0 0.0
      %5464 = vmatpush1.msra.mxu0 0.0
      %5465 = vmatprep.subr.mxu0 0.0
      %5466 = vmatpush1.msra.mxu0 0.0
      %5467 = vmatprep.subr.mxu0 0.0
      %5468 = vmatpush1.msra.mxu0 0.0
      %5469 = vmatprep.subr.mxu0 0.0
      %5470 = vmatpush1.msra.mxu0 0.0
      %5471 = vmatprep.subr.mxu0 0.0
      %5472 = vmatpush1.msra.mxu0 0.0
      %5473 = vmatprep.subr.mxu0 0.0
      %5474 = vmatpush1.msra.mxu0 0.0
      %5475 = vmatprep.subr.mxu0 0.0
      %5476 = vmatpush1.msra.mxu0 0.0
      %5477 = vmatprep.subr.mxu0 0.0
      %5478 = vmatpush1.msra.mxu0 0.0
      %5479 = vmatprep.subr.mxu0 0.0
      %5480 = vmatpush1.msra.mxu0 0.0
      %5481 = vmatprep.subr.mxu0 0.0
      %5482 = vmatpush1.msra.mxu0 0.0
      %5483 = vmatprep.subr.mxu0 0.0
      %5484 = vmatpush1.msra.mxu0 0.0
      %5485 = vmatprep.subr.mxu0 0.0
      %5486 = vmatpush1.msra.mxu0 0.0
      %5487 = vmatprep.subr.mxu0 0.0
      %5488 = vmatpush1.msra.mxu0 0.0
      %5489 = vmatprep.subr.mxu0 0.0
      %5490 = vmatpush1.msra.mxu0 0.0
      %5491 = vmatprep.subr.mxu0 0.0
      %5492 = vmatpush1.msra.mxu0 0.0
      %5493 = vmatprep.subr.mxu0 0.0
      %5494 = vmatpush1.msra.mxu0 0.0
      %5495 = vmatprep.mubr.f32.mxu0 0.0
      %v5496 = vand.u32 %v5236, 4294901760
      %5497 = vmatmul.mubr.f32.gmra.mrb[0].mxu0 %v5496
      %v5498 = vpop.f32.mrb[0].mxu0
      %v5499 = vadd.f32 %v5348, %v5498
      %v5500 = vpop.f32.mrb[0].mxu0
      %5501 = vdwg.mxu0
      %5502 = vmatprep.subr.mxu0 0.0
      %v5503 = vand.u32 %v5237, 4294901760
      %v5504 = vsub.f32 %v5237, %v5503
      %5505 = vmatpush1.msra.mxu0 %v5504
      %5506 = vmatprep.subr.mxu0 0.0
      %v5507 = vand.u32 %v5238, 4294901760
      %v5508 = vsub.f32 %v5238, %v5507
      %5509 = vmatpush1.msra.mxu0 %v5508
      %5510 = vmatprep.subr.mxu0 0.0
      %v5511 = vand.u32 %v5239, 4294901760
      %v5512 = vsub.f32 %v5239, %v5511
      %5513 = vmatpush1.msra.mxu0 %v5512
      %5514 = vmatprep.subr.mxu0 0.0
      %v5515 = vand.u32 %v5240, 4294901760
      %v5516 = vsub.f32 %v5240, %v5515
      %5517 = vmatpush1.msra.mxu0 %v5516
      %5518 = vmatprep.subr.mxu0 0.0
      %v5519 = vand.u32 %v5241, 4294901760
      %v5520 = vsub.f32 %v5241, %v5519
      %5521 = vmatpush1.msra.mxu0 %v5520
      %5522 = vmatprep.subr.mxu0 0.0
      %v5523 = vand.u32 %v5242, 4294901760
      %v5524 = vsub.f32 %v5242, %v5523
      %5525 = vmatpush1.msra.mxu0 %v5524
      %5526 = vmatprep.subr.mxu0 0.0
      %v5527 = vand.u32 %v5243, 4294901760
      %v5528 = vsub.f32 %v5243, %v5527
      %5529 = vmatpush1.msra.mxu0 %v5528
      %5530 = vmatprep.subr.mxu0 0.0
      %v5531 = vand.u32 %v5244, 4294901760
      %v5532 = vsub.f32 %v5244, %v5531
      %5533 = vmatpush1.msra.mxu0 %v5532
      %5534 = vmatprep.subr.mxu0 0.0
      %v5535 = vand.u32 %v5245, 4294901760
      %v5536 = vsub.f32 %v5245, %v5535
      %5537 = vmatpush1.msra.mxu0 %v5536
      %5538 = vmatprep.subr.mxu0 0.0
      %v5539 = vand.u32 %v5246, 4294901760
      %v5540 = vsub.f32 %v5246, %v5539
      %5541 = vmatpush1.msra.mxu0 %v5540
      %5542 = vmatprep.subr.mxu0 0.0
      %v5543 = vand.u32 %v5247, 4294901760
      %v5544 = vsub.f32 %v5247, %v5543
      %5545 = vmatpush1.msra.mxu0 %v5544
      %5546 = vmatprep.subr.mxu0 0.0
      %v5547 = vand.u32 %v5248, 4294901760
      %v5548 = vsub.f32 %v5248, %v5547
      %5549 = vmatpush1.msra.mxu0 %v5548
      %5550 = vmatprep.subr.mxu0 0.0
      %v5551 = vand.u32 %v5249, 4294901760
      %v5552 = vsub.f32 %v5249, %v5551
      %5553 = vmatpush1.msra.mxu0 %v5552
      %5554 = vmatprep.subr.mxu0 0.0
      %v5555 = vand.u32 %v5250, 4294901760
      %v5556 = vsub.f32 %v5250, %v5555
      %5557 = vmatpush1.msra.mxu0 %v5556
      %5558 = vmatprep.subr.mxu0 0.0
      %v5559 = vand.u32 %v5251, 4294901760
      %v5560 = vsub.f32 %v5251, %v5559
      %5561 = vmatpush1.msra.mxu0 %v5560
      %5562 = vmatprep.subr.mxu0 0.0
      %v5563 = vand.u32 %v5252, 4294901760
      %v5564 = vsub.f32 %v5252, %v5563
      %5565 = vmatpush1.msra.mxu0 %v5564
      %5566 = vmatprep.subr.mxu0 0.0
      %5567 = vmatpush1.msra.mxu0 0.0
      %5568 = vmatprep.subr.mxu0 0.0
      %5569 = vmatpush1.msra.mxu0 0.0
      %5570 = vmatprep.subr.mxu0 0.0
      %5571 = vmatpush1.msra.mxu0 0.0
      %5572 = vmatprep.subr.mxu0 0.0
      %5573 = vmatpush1.msra.mxu0 0.0
      %5574 = vmatprep.subr.mxu0 0.0
      %5575 = vmatpush1.msra.mxu0 0.0
      %5576 = vmatprep.subr.mxu0 0.0
      %5577 = vmatpush1.msra.mxu0 0.0
      %5578 = vmatprep.subr.mxu0 0.0
      %5579 = vmatpush1.msra.mxu0 0.0
      %5580 = vmatprep.subr.mxu0 0.0
      %5581 = vmatpush1.msra.mxu0 0.0
      %5582 = vmatprep.subr.mxu0 0.0
      %5583 = vmatpush1.msra.mxu0 0.0
      %5584 = vmatprep.subr.mxu0 0.0
      %5585 = vmatpush1.msra.mxu0 0.0
      %5586 = vmatprep.subr.mxu0 0.0
      %5587 = vmatpush1.msra.mxu0 0.0
      %5588 = vmatprep.subr.mxu0 0.0
      %5589 = vmatpush1.msra.mxu0 0.0
      %5590 = vmatprep.subr.mxu0 0.0
      %5591 = vmatpush1.msra.mxu0 0.0
      %5592 = vmatprep.subr.mxu0 0.0
      %5593 = vmatpush1.msra.mxu0 0.0
      %5594 = vmatprep.subr.mxu0 0.0
      %5595 = vmatpush1.msra.mxu0 0.0
      %5596 = vmatprep.subr.mxu0 0.0
      %5597 = vmatpush1.msra.mxu0 0.0
      %5598 = vmatprep.mubr.f32.mxu0 0.0
      %v5599 = vand.u32 %v5236, 4294901760
      %v5600 = vsub.f32 %v5236, %v5599
      %5601 = vmatmul.mubr.f32.gmra.mrb[0].mxu0 %v5600
      %v5602 = vpop.f32.mrb[0].mxu0
      %v5603 = vadd.f32 %v5499, %v5602
      %v5604 = vpop.f32.mrb[0].mxu0
      %5605 = vdwg.mxu0
      %5606 = vmatprep.subr.mxu0 0.0
      %v5607 = vand.u32 %v5237, 4294901760
      %5608 = vmatpush1.msra.mxu0 %v5607
      %5609 = vmatprep.subr.mxu0 0.0
      %v5610 = vand.u32 %v5238, 4294901760
      %5611 = vmatpush1.msra.mxu0 %v5610
      %5612 = vmatprep.subr.mxu0 0.0
      %v5613 = vand.u32 %v5239, 4294901760
      %5614 = vmatpush1.msra.mxu0 %v5613
      %5615 = vmatprep.subr.mxu0 0.0
      %v5616 = vand.u32 %v5240, 4294901760
      %5617 = vmatpush1.msra.mxu0 %v5616
      %5618 = vmatprep.subr.mxu0 0.0
      %v5619 = vand.u32 %v5241, 4294901760
      %5620 = vmatpush1.msra.mxu0 %v5619
      %5621 = vmatprep.subr.mxu0 0.0
      %v5622 = vand.u32 %v5242, 4294901760
      %5623 = vmatpush1.msra.mxu0 %v5622
      %5624 = vmatprep.subr.mxu0 0.0
      %v5625 = vand.u32 %v5243, 4294901760
      %5626 = vmatpush1.msra.mxu0 %v5625
      %5627 = vmatprep.subr.mxu0 0.0
      %v5628 = vand.u32 %v5244, 4294901760
      %5629 = vmatpush1.msra.mxu0 %v5628
      %5630 = vmatprep.subr.mxu0 0.0
      %v5631 = vand.u32 %v5245, 4294901760
      %5632 = vmatpush1.msra.mxu0 %v5631
      %5633 = vmatprep.subr.mxu0 0.0
      %v5634 = vand.u32 %v5246, 4294901760
      %5635 = vmatpush1.msra.mxu0 %v5634
      %5636 = vmatprep.subr.mxu0 0.0
      %v5637 = vand.u32 %v5247, 4294901760
      %5638 = vmatpush1.msra.mxu0 %v5637
      %5639 = vmatprep.subr.mxu0 0.0
      %v5640 = vand.u32 %v5248, 4294901760
      %5641 = vmatpush1.msra.mxu0 %v5640
      %5642 = vmatprep.subr.mxu0 0.0
      %v5643 = vand.u32 %v5249, 4294901760
      %5644 = vmatpush1.msra.mxu0 %v5643
      %5645 = vmatprep.subr.mxu0 0.0
      %v5646 = vand.u32 %v5250, 4294901760
      %5647 = vmatpush1.msra.mxu0 %v5646
      %5648 = vmatprep.subr.mxu0 0.0
      %v5649 = vand.u32 %v5251, 4294901760
      %5650 = vmatpush1.msra.mxu0 %v5649
      %5651 = vmatprep.subr.mxu0 0.0
      %v5652 = vand.u32 %v5252, 4294901760
      %5653 = vmatpush1.msra.mxu0 %v5652
      %5654 = vmatprep.subr.mxu0 0.0
      %5655 = vmatpush1.msra.mxu0 0.0
      %5656 = vmatprep.subr.mxu0 0.0
      %5657 = vmatpush1.msra.mxu0 0.0
      %5658 = vmatprep.subr.mxu0 0.0
      %5659 = vmatpush1.msra.mxu0 0.0
      %5660 = vmatprep.subr.mxu0 0.0
      %5661 = vmatpush1.msra.mxu0 0.0
      %5662 = vmatprep.subr.mxu0 0.0
      %5663 = vmatpush1.msra.mxu0 0.0
      %5664 = vmatprep.subr.mxu0 0.0
      %5665 = vmatpush1.msra.mxu0 0.0
      %5666 = vmatprep.subr.mxu0 0.0
      %5667 = vmatpush1.msra.mxu0 0.0
      %5668 = vmatprep.subr.mxu0 0.0
      %5669 = vmatpush1.msra.mxu0 0.0
      %5670 = vmatprep.subr.mxu0 0.0
      %5671 = vmatpush1.msra.mxu0 0.0
      %5672 = vmatprep.subr.mxu0 0.0
      %5673 = vmatpush1.msra.mxu0 0.0
      %5674 = vmatprep.subr.mxu0 0.0
      %5675 = vmatpush1.msra.mxu0 0.0
      %5676 = vmatprep.subr.mxu0 0.0
      %5677 = vmatpush1.msra.mxu0 0.0
      %5678 = vmatprep.subr.mxu0 0.0
      %5679 = vmatpush1.msra.mxu0 0.0
      %5680 = vmatprep.subr.mxu0 0.0
      %5681 = vmatpush1.msra.mxu0 0.0
      %5682 = vmatprep.subr.mxu0 0.0
      %5683 = vmatpush1.msra.mxu0 0.0
      %5684 = vmatprep.subr.mxu0 0.0
      %5685 = vmatpush1.msra.mxu0 0.0
      %5686 = vmatprep.mubr.f32.mxu0 0.0
      %v5687 = vand.u32 %v5236, 4294901760
      %v5688 = vsub.f32 %v5236, %v5687
      %v5689 = vand.u32 %v5688, 4294901760
      %5690 = vmatmul.mubr.f32.gmra.mrb[0].mxu0 %v5689
      %v5691 = vpop.f32.mrb[0].mxu0
      %v5692 = vadd.f32 %v5603, %v5691
      %v5693 = vpop.f32.mrb[0].mxu0
      %5694 = vdwg.mxu0
      %5695 = vmatprep.subr.mxu0 0.0
      %v5696 = vand.u32 %v5237, 4294901760
      %v5697 = vsub.f32 %v5237, %v5696
      %v5698 = vand.u32 %v5697, 4294901760
      %5699 = vmatpush1.msra.mxu0 %v5698
      %5700 = vmatprep.subr.mxu0 0.0
      %v5701 = vand.u32 %v5238, 4294901760
      %v5702 = vsub.f32 %v5238, %v5701
      %v5703 = vand.u32 %v5702, 4294901760
      %5704 = vmatpush1.msra.mxu0 %v5703
      %5705 = vmatprep.subr.mxu0 0.0
      %v5706 = vand.u32 %v5239, 4294901760
      %v5707 = vsub.f32 %v5239, %v5706
      %v5708 = vand.u32 %v5707, 4294901760
      %5709 = vmatpush1.msra.mxu0 %v5708
      %5710 = vmatprep.subr.mxu0 0.0
      %v5711 = vand.u32 %v5240, 4294901760
      %v5712 = vsub.f32 %v5240, %v5711
      %v5713 = vand.u32 %v5712, 4294901760
      %5714 = vmatpush1.msra.mxu0 %v5713
      %5715 = vmatprep.subr.mxu0 0.0
      %v5716 = vand.u32 %v5241, 4294901760
      %v5717 = vsub.f32 %v5241, %v5716
      %v5718 = vand.u32 %v5717, 4294901760
      %5719 = vmatpush1.msra.mxu0 %v5718
      %5720 = vmatprep.subr.mxu0 0.0
      %v5721 = vand.u32 %v5242, 4294901760
      %v5722 = vsub.f32 %v5242, %v5721
      %v5723 = vand.u32 %v5722, 4294901760
      %5724 = vmatpush1.msra.mxu0 %v5723
      %5725 = vmatprep.subr.mxu0 0.0
      %v5726 = vand.u32 %v5243, 4294901760
      %v5727 = vsub.f32 %v5243, %v5726
      %v5728 = vand.u32 %v5727, 4294901760
      %5729 = vmatpush1.msra.mxu0 %v5728
      %5730 = vmatprep.subr.mxu0 0.0
      %v5731 = vand.u32 %v5244, 4294901760
      %v5732 = vsub.f32 %v5244, %v5731
      %v5733 = vand.u32 %v5732, 4294901760
      %5734 = vmatpush1.msra.mxu0 %v5733
      %5735 = vmatprep.subr.mxu0 0.0
      %v5736 = vand.u32 %v5245, 4294901760
      %v5737 = vsub.f32 %v5245, %v5736
      %v5738 = vand.u32 %v5737, 4294901760
      %5739 = vmatpush1.msra.mxu0 %v5738
      %5740 = vmatprep.subr.mxu0 0.0
      %v5741 = vand.u32 %v5246, 4294901760
      %v5742 = vsub.f32 %v5246, %v5741
      %v5743 = vand.u32 %v5742, 4294901760
      %5744 = vmatpush1.msra.mxu0 %v5743
      %5745 = vmatprep.subr.mxu0 0.0
      %v5746 = vand.u32 %v5247, 4294901760
      %v5747 = vsub.f32 %v5247, %v5746
      %v5748 = vand.u32 %v5747, 4294901760
      %5749 = vmatpush1.msra.mxu0 %v5748
      %5750 = vmatprep.subr.mxu0 0.0
      %v5751 = vand.u32 %v5248, 4294901760
      %v5752 = vsub.f32 %v5248, %v5751
      %v5753 = vand.u32 %v5752, 4294901760
      %5754 = vmatpush1.msra.mxu0 %v5753
      %5755 = vmatprep.subr.mxu0 0.0
      %v5756 = vand.u32 %v5249, 4294901760
      %v5757 = vsub.f32 %v5249, %v5756
      %v5758 = vand.u32 %v5757, 4294901760
      %5759 = vmatpush1.msra.mxu0 %v5758
      %5760 = vmatprep.subr.mxu0 0.0
      %v5761 = vand.u32 %v5250, 4294901760
      %v5762 = vsub.f32 %v5250, %v5761
      %v5763 = vand.u32 %v5762, 4294901760
      %5764 = vmatpush1.msra.mxu0 %v5763
      %5765 = vmatprep.subr.mxu0 0.0
      %v5766 = vand.u32 %v5251, 4294901760
      %v5767 = vsub.f32 %v5251, %v5766
      %v5768 = vand.u32 %v5767, 4294901760
      %5769 = vmatpush1.msra.mxu0 %v5768
      %5770 = vmatprep.subr.mxu0 0.0
      %v5771 = vand.u32 %v5252, 4294901760
      %v5772 = vsub.f32 %v5252, %v5771
      %v5773 = vand.u32 %v5772, 4294901760
      %5774 = vmatpush1.msra.mxu0 %v5773
      %5775 = vmatprep.subr.mxu0 0.0
      %5776 = vmatpush1.msra.mxu0 0.0
      %5777 = vmatprep.subr.mxu0 0.0
      %5778 = vmatpush1.msra.mxu0 0.0
      %5779 = vmatprep.subr.mxu0 0.0
      %5780 = vmatpush1.msra.mxu0 0.0
      %5781 = vmatprep.subr.mxu0 0.0
      %5782 = vmatpush1.msra.mxu0 0.0
      %5783 = vmatprep.subr.mxu0 0.0
      %5784 = vmatpush1.msra.mxu0 0.0
      %5785 = vmatprep.subr.mxu0 0.0
      %5786 = vmatpush1.msra.mxu0 0.0
      %5787 = vmatprep.subr.mxu0 0.0
      %5788 = vmatpush1.msra.mxu0 0.0
      %5789 = vmatprep.subr.mxu0 0.0
      %5790 = vmatpush1.msra.mxu0 0.0
      %5791 = vmatprep.subr.mxu0 0.0
      %5792 = vmatpush1.msra.mxu0 0.0
      %5793 = vmatprep.subr.mxu0 0.0
      %5794 = vmatpush1.msra.mxu0 0.0
      %5795 = vmatprep.subr.mxu0 0.0
      %5796 = vmatpush1.msra.mxu0 0.0
      %5797 = vmatprep.subr.mxu0 0.0
      %5798 = vmatpush1.msra.mxu0 0.0
      %5799 = vmatprep.subr.mxu0 0.0
      %5800 = vmatpush1.msra.mxu0 0.0
      %5801 = vmatprep.subr.mxu0 0.0
      %5802 = vmatpush1.msra.mxu0 0.0
      %5803 = vmatprep.subr.mxu0 0.0
      %5804 = vmatpush1.msra.mxu0 0.0
      %5805 = vmatprep.subr.mxu0 0.0
      %5806 = vmatpush1.msra.mxu0 0.0
      %5807 = vmatprep.mubr.f32.mxu0 0.0
      %v5808 = vand.u32 %v5236, 4294901760
      %5809 = vmatmul.mubr.f32.gmra.mrb[0].mxu0 %v5808
      %v5810 = vpop.f32.mrb[0].mxu0
      %v5811 = vadd.f32 %v5692, %v5810
      %v5812 = vpop.f32.mrb[0].mxu0
      %5813 = vdwg.mxu0
      %5814 = vmatprep.subr.mxu0 0.0
      %v5815 = vand.u32 %v5237, 4294901760
      %5816 = vmatpush1.msra.mxu0 %v5815
      %5817 = vmatprep.subr.mxu0 0.0
      %v5818 = vand.u32 %v5238, 4294901760
      %5819 = vmatpush1.msra.mxu0 %v5818
      %5820 = vmatprep.subr.mxu0 0.0
      %v5821 = vand.u32 %v5239, 4294901760
      %5822 = vmatpush1.msra.mxu0 %v5821
      %5823 = vmatprep.subr.mxu0 0.0
      %v5824 = vand.u32 %v5240, 4294901760
      %5825 = vmatpush1.msra.mxu0 %v5824
      %5826 = vmatprep.subr.mxu0 0.0
      %v5827 = vand.u32 %v5241, 4294901760
      %5828 = vmatpush1.msra.mxu0 %v5827
      %5829 = vmatprep.subr.mxu0 0.0
      %v5830 = vand.u32 %v5242, 4294901760
      %5831 = vmatpush1.msra.mxu0 %v5830
      %5832 = vmatprep.subr.mxu0 0.0
      %v5833 = vand.u32 %v5243, 4294901760
      %5834 = vmatpush1.msra.mxu0 %v5833
      %5835 = vmatprep.subr.mxu0 0.0
      %v5836 = vand.u32 %v5244, 4294901760
      %5837 = vmatpush1.msra.mxu0 %v5836
      %5838 = vmatprep.subr.mxu0 0.0
      %v5839 = vand.u32 %v5245, 4294901760
      %5840 = vmatpush1.msra.mxu0 %v5839
      %5841 = vmatprep.subr.mxu0 0.0
      %v5842 = vand.u32 %v5246, 4294901760
      %5843 = vmatpush1.msra.mxu0 %v5842
      %5844 = vmatprep.subr.mxu0 0.0
      %v5845 = vand.u32 %v5247, 4294901760
      %5846 = vmatpush1.msra.mxu0 %v5845
      %5847 = vmatprep.subr.mxu0 0.0
      %v5848 = vand.u32 %v5248, 4294901760
      %5849 = vmatpush1.msra.mxu0 %v5848
      %5850 = vmatprep.subr.mxu0 0.0
      %v5851 = vand.u32 %v5249, 4294901760
      %5852 = vmatpush1.msra.mxu0 %v5851
      %5853 = vmatprep.subr.mxu0 0.0
      %v5854 = vand.u32 %v5250, 4294901760
      %5855 = vmatpush1.msra.mxu0 %v5854
      %5856 = vmatprep.subr.mxu0 0.0
      %v5857 = vand.u32 %v5251, 4294901760
      %5858 = vmatpush1.msra.mxu0 %v5857
      %5859 = vmatprep.subr.mxu0 0.0
      %v5860 = vand.u32 %v5252, 4294901760
      %5861 = vmatpush1.msra.mxu0 %v5860
      %5862 = vmatprep.subr.mxu0 0.0
      %5863 = vmatpush1.msra.mxu0 0.0
      %5864 = vmatprep.subr.mxu0 0.0
      %5865 = vmatpush1.msra.mxu0 0.0
      %5866 = vmatprep.subr.mxu0 0.0
      %5867 = vmatpush1.msra.mxu0 0.0
      %5868 = vmatprep.subr.mxu0 0.0
      %5869 = vmatpush1.msra.mxu0 0.0
      %5870 = vmatprep.subr.mxu0 0.0
      %5871 = vmatpush1.msra.mxu0 0.0
      %5872 = vmatprep.subr.mxu0 0.0
      %5873 = vmatpush1.msra.mxu0 0.0
      %5874 = vmatprep.subr.mxu0 0.0
      %5875 = vmatpush1.msra.mxu0 0.0
      %5876 = vmatprep.subr.mxu0 0.0
      %5877 = vmatpush1.msra.mxu0 0.0
      %5878 = vmatprep.subr.mxu0 0.0
      %5879 = vmatpush1.msra.mxu0 0.0
      %5880 = vmatprep.subr.mxu0 0.0
      %5881 = vmatpush1.msra.mxu0 0.0
      %5882 = vmatprep.subr.mxu0 0.0
      %5883 = vmatpush1.msra.mxu0 0.0
      %5884 = vmatprep.subr.mxu0 0.0
      %5885 = vmatpush1.msra.mxu0 0.0
      %5886 = vmatprep.subr.mxu0 0.0
      %5887 = vmatpush1.msra.mxu0 0.0
      %5888 = vmatprep.subr.mxu0 0.0
      %5889 = vmatpush1.msra.mxu0 0.0
      %5890 = vmatprep.subr.mxu0 0.0
      %5891 = vmatpush1.msra.mxu0 0.0
      %5892 = vmatprep.subr.mxu0 0.0
      %5893 = vmatpush1.msra.mxu0 0.0
      %5894 = vmatprep.mubr.f32.mxu0 0.0
      %v5895 = vand.u32 %v5236, 4294901760
      %5896 = vmatmul.mubr.f32.gmra.mrb[0].mxu0 %v5895
      %v5897 = vpop.f32.mrb[0].mxu0
      %v5898 = vadd.f32 %v5811, %v5897
      %v5899 = vpop.f32.mrb[0].mxu0
      %5900 = vdwg.mxu0
      %5901 = vst [vmem:[#allocation9] sm:$0xff] %v5898
    $region37: #{tpu_custom_call.1} parent=1 // pred_fallthru
      _
    // Predicated region
    $region38: #{tpu_custom_call.1} parent=1 // pred_check
      _
    $region39: #{tpu_custom_call.1} parent=1 // pred_check_branch
      %5903 = sbr.rel (0) target = $region41
    $region40: #{tpu_custom_call.1} parent=1 // pred_region
      %s5905 = ssub.s32 128, 128
      %5906 = vsyncadd [#allocation5], %s5905
      %s5908 = sshll.u32 [#allocation9], 4
      %s5909 = int_to_ptr.vmem [resolvable:$true] %s5908
      %5911 = dma.vmem_to_hbm [thread:$0]  %s5909, 128, %s4, [#allocation5]
    $region41: #{tpu_custom_call.1} parent=1 // pred_fallthru
      _
    // Predicated region
    $region42: #{tpu_custom_call.1} parent=1 // pred_check
      _
    $region43: #{tpu_custom_call.1} parent=1 // pred_check_branch
      %5913 = sbr.rel (0) target = $region45
    $region44: #{tpu_custom_call.1} parent=1 // pred_region
      %5914 = dma.done [#allocation5], 128
    $region45: #{tpu_custom_call.1} parent=1 // pred_fallthru
      _
    %5915 = vsyncpa [#allocation4], 1
    %5916 = vsyncpa [#allocation7], 1
    %5917 = vsyncpa [#allocation5], 1

</llo_original>
